<compile_context>
chip_gen: v6e
topology: v6e:2x2x1
jax: 0.10.0
libtpu: 0.0.40
codegen_flags: <defaults>
</compile_context>

<pallas_src>
import functools

import numpy as np
import jax
import jax.numpy as jnp
from jax import lax
from jax.experimental import pallas as pl
from jax.experimental.pallas import tpu as pltpu


# ----------------------------------------------------------------------------
# Glue: parameter / constant layout helpers (run outside the kernel).
# ----------------------------------------------------------------------------
def _tap_masks(B, H, W, Pp):
    """(9, 1, B*Pp) 0/1 masks: tap t valid at lane b*Pp+p iff p<H*W and neighbor in-bounds."""
    L = B * Pp
    P = H * W
    m = np.zeros((9, 1, L), np.float32)
    for ky in range(3):
        for kx in range(3):
            t = ky * 3 + kx
            dy, dx = ky - 1, kx - 1
            for b in range(B):
                for p in range(P):
                    y, x = divmod(p, W)
                    if 0 <= y + dy < H and 0 <= x + dx < W:
                        m[t, 0, b * Pp + p] = 1.0
    return jnp.asarray(m)


def _conv_wstack(w, co_pad, ci_pad):
    """torch Conv2d weight (Co, Ci, 3, 3) -> (9*co_pad, ci_pad), taps stacked on rows."""
    co, ci = int(w.shape[0]), int(w.shape[1])
    wp = jnp.zeros((co_pad, ci_pad, 3, 3), jnp.float32).at[:co, :ci, :, :].set(
        w.astype(jnp.float32))
    taps = [wp[:, :, ky, kx] for ky in range(3) for kx in range(3)]
    return jnp.concatenate(taps, axis=0)


def _bias_col(b, pad):
    """bias (Co,) -> column (pad, 1), zero-padded output channels."""
    return jnp.zeros((pad, 1), jnp.float32).at[:int(b.shape[0]), 0].set(
        b.astype(jnp.float32))


def _head_w1_tiled(w1, B, H, W, Pp):
    """torch Linear weight (64, 4*H*W) -> (4, 64, B*Pp): [c, j, b*Pp+p] = w1[j, c*HW+p]."""
    P = H * W
    g = jnp.transpose(w1.astype(jnp.float32).reshape(64, 4, P), (1, 0, 2))   # (4,64,P)
    g = jnp.pad(g, ((0, 0), (0, 0), (0, Pp - P)))                            # zero pad lanes
    return jnp.tile(g, (1, 1, B))


def _batch_select(B, Pp):
    """E (B, B*Pp): E[b, l] = 1 iff lane l belongs to batch block b."""
    return jnp.asarray(np.kron(np.eye(B, dtype=np.float32),
                               np.ones((1, Pp), np.float32)))


# ----------------------------------------------------------------------------
# The Pallas kernel: the entire forward pass.
# ----------------------------------------------------------------------------
def _forward_kernel(B, W, Pp,
                    x0_ref, bertT_ref, masks_ref, e_ref, et_ref,
                    wk_ref, bk_ref,
                    q1w_ref, q1b_ref, q2w_ref, q2b_ref, q3w_ref, q3b_ref,
                    s1w_ref, s1b_ref, s2w_ref, s2b_ref,
                    acvw_ref, acvb_ref, w1a_ref, a1b_ref, a2w_ref, a2b_ref,
                    ccvw_ref, ccvb_ref, w1c_ref, c1b_ref, c2w_ref, c2b_ref,
                    logits_ref, value_ref):
    f32 = jnp.float32
    L = B * Pp

    # roll(z, shift)[l] == z[l + dy*W + dx]  (source lane of tap (ky,kx))
    shifts = [(-((ky - 1) * W + (kx - 1))) % L for ky in range(3) for kx in range(3)]
    masks = [masks_ref[t] for t in range(9)]                 # 9 x (1, L)

    def conv3x3(x, w_ref, b_ref, co_pad):
        # single MXU push per layer; taps resolved with XLU rolls + VPU masks.
        z = jnp.dot(w_ref[...], x, preferred_element_type=f32)       # (9*co_pad, L)
        out = b_ref[...]                                             # (co_pad, 1)
        for t in range(9):
            blk = z[t * co_pad:(t + 1) * co_pad, :]
            out = out + pltpu.roll(blk, shifts[t], 1) * masks[t]
        return out

    # --- cnn_query: Conv(3->16) tanh Conv(16->32) tanh Conv(32->64) ---
    x = jnp.tanh(conv3x3(x0_ref[...], q1w_ref, q1b_ref, 16))
    x = jnp.tanh(conv3x3(x, q2w_ref, q2b_ref, 32))
    q = conv3x3(x, q3w_ref, q3b_ref, 64)                              # (64, L)

    # --- text_to_key + broadcast keys over each batch's lane block ---
    keys_t = jnp.dot(wk_ref[...], bertT_ref[...],
                     preferred_element_type=f32) + bk_ref[...]        # (64, B)
    keys_bc = jnp.dot(keys_t, e_ref[...], preferred_element_type=f32)  # (64, L)

    # --- einsum('bqd,bd->bq') + softmax(scores/8) per batch over valid lanes ---
    scores = jnp.sum(q * keys_bc, axis=0, keepdims=True) * 0.125      # (1, L)
    vmask = masks[4]                                                  # valid-lane mask
    scores = jnp.where(vmask > 0.5, scores, -1e30)
    m = jnp.max(scores, axis=1, keepdims=True)
    e = jnp.exp(scores - m)                                           # 0 at pad lanes
    denom = jnp.dot(jnp.dot(e, et_ref[...], preferred_element_type=f32),
                    e_ref[...], preferred_element_type=f32)           # per-block sum, (1, L)
    attended = e / denom                                              # (1, L)

    # --- shared_conv: Conv(1->4) tanh Conv(4->16) tanh  (4 padded to 8 channels) ---
    f = jnp.tanh(conv3x3(attended, s1w_ref, s1b_ref, 8))
    f = jnp.tanh(conv3x3(f, s2w_ref, s2b_ref, 16))                    # (16, L)

    # --- heads: 1x1 convs + fused flatten/Linear(400,64) via tiled weights ---
    a_act = jnp.dot(acvw_ref[...], f, preferred_element_type=f32) + acvb_ref[...]   # (4, L)
    c_act = jnp.tanh(jnp.dot(ccvw_ref[...], f, preferred_element_type=f32) + ccvb_ref[...])

    def head(act, w1_ref, b1_ref, w2_ref, b2_ref):
        tmp = w1_ref[0] * act[0:1, :]                                 # (64, L), VPU
        for c in range(1, 4):
            tmp = tmp + w1_ref[c] * act[c:c + 1, :]
        h = jnp.tanh(jnp.dot(tmp, et_ref[...], preferred_element_type=f32)
                     + b1_ref[...])                                   # (64, B)
        return jnp.dot(w2_ref[...], h, preferred_element_type=f32) + b2_ref[...]

    logits_ref[...] = head(a_act, w1a_ref, a1b_ref, a2w_ref, a2b_ref)   # (n_act, B)
    value_ref[...] = head(c_act, w1c_ref, c1b_ref, c2w_ref, c2b_ref)    # (1, B)


# ----------------------------------------------------------------------------
# Wrapper: constant/parameter re-layout + pallas_call.
# ----------------------------------------------------------------------------
def multi_input_attention_forward(params, obs, n_act):
    grid = obs['grid']
    bert = obs['bert_embeddings']
    B, Cin, H, W = grid.shape
    assert (Cin, H, W) == (3, 10, 10), "actor/critic Linear(4*10*10) fixes H=W=10"
    P = H * W
    Pp = 128                       # lane-aligned per-batch spatial block
    L = B * Pp
    f32 = jnp.float32

    g = jnp.transpose(grid.astype(f32).reshape(B, Cin, P), (1, 0, 2))   # (3, B, P)
    g = jnp.pad(g, ((0, 0), (0, 0), (0, Pp - P)))
    x0 = g.reshape(Cin, L)

    E = _batch_select(B, Pp)                                            # (B, L)

    args = [
        x0,                                                             # (3, L)
        jnp.transpose(bert.astype(f32), (1, 0)),                        # (Dbert, B)
        _tap_masks(B, H, W, Pp),                                        # (9, 1, L)
        E, jnp.transpose(E, (1, 0)),                                    # (B, L), (L, B)
        params['wk'].astype(f32), params['bk'].astype(f32)[:, None],
        _conv_wstack(params['q1_w'], 16, 3),  _bias_col(params['q1_b'], 16),
        _conv_wstack(params['q2_w'], 32, 16), _bias_col(params['q2_b'], 32),
        _conv_wstack(params['q3_w'], 64, 32), _bias_col(params['q3_b'], 64),
        _conv_wstack(params['s1_w'], 8, 1),   _bias_col(params['s1_b'], 8),
        _conv_wstack(params['s2_w'], 16, 8),  _bias_col(params['s2_b'], 16),
        params['acv_w'][:, :, 0, 0].astype(f32), _bias_col(params['acv_b'], 4),
        _head_w1_tiled(params['a1_w'], B, H, W, Pp), params['a1_b'].astype(f32)[:, None],
        params['a2_w'].astype(f32), params['a2_b'].astype(f32)[:, None],
        params['ccv_w'][:, :, 0, 0].astype(f32), _bias_col(params['ccv_b'], 4),
        _head_w1_tiled(params['c1_w'], B, H, W, Pp), params['c1_b'].astype(f32)[:, None],
        params['c2_w'].astype(f32), params['c2_b'].astype(f32)[:, None],
    ]

    dbert = int(bert.shape[1])
    flops = 2 * (144 * 3 * L + 288 * 16 * L + 576 * 32 * L + 72 * 1 * L + 144 * 8 * L
                 + 64 * dbert * B + 64 * B * L + L * B + B * L
                 + 2 * 4 * 16 * L + 2 * 64 * L * B + n_act * 64 * B + 64 * B)
    bytes_accessed = sum(int(np.prod(a.shape)) * 4 for a in args) + (n_act + 1) * B * 4
    cost = pl.CostEstimate(flops=int(flops),
                           transcendentals=int((16 + 32 + 8 + 16 + 4) * L + L + 2 * 64 * B),
                           bytes_accessed=int(bytes_accessed))

    vmem_spec = pl.BlockSpec(memory_space=pltpu.MemorySpace.VMEM)
    kernel = functools.partial(_forward_kernel, B, W, Pp)
    logits_t, value_t = pl.pallas_call(
        kernel,
        out_shape=(jax.ShapeDtypeStruct((n_act, B), f32),
                   jax.ShapeDtypeStruct((1, B), f32)),
        in_specs=[vmem_spec] * len(args),
        out_specs=(vmem_spec, vmem_spec),
        cost_estimate=cost,
    )(*args)
    return jnp.transpose(logits_t, (1, 0)), jnp.transpose(value_t, (1, 0))


# ----------------------------------------------------------------------------
# Deterministic parameter construction (shapes from the module __init__).
# ----------------------------------------------------------------------------
def build_params(key, bert_dim, n_act):
    ks = jax.random.split(key, 26)

    def w(i, shape, scale=0.1):
        return jax.random.normal(ks[i], shape, jnp.float32) * scale

    return {
        # text_to_key / text_to_value (the latter is unused by forward())
        'wk': w(0, (64, bert_dim)),  'bk': w(1, (64,), 0.01),
        'wv': w(2, (32, bert_dim)),  'bv': w(3, (32,), 0.01),
        # cnn_query
        'q1_w': w(4, (16, 3, 3, 3)),  'q1_b': w(5, (16,), 0.01),
        'q2_w': w(6, (32, 16, 3, 3)), 'q2_b': w(7, (32,), 0.01),
        'q3_w': w(8, (64, 32, 3, 3)), 'q3_b': w(9, (64,), 0.01),
        # shared_conv
        's1_w': w(10, (4, 1, 3, 3)),  's1_b': w(11, (4,), 0.01),
        's2_w': w(12, (16, 4, 3, 3)), 's2_b': w(13, (16,), 0.01),
        # actor
        'acv_w': w(14, (4, 16, 1, 1)), 'acv_b': w(15, (4,), 0.01),
        'a1_w': w(16, (64, 400)),      'a1_b': w(17, (64,), 0.01),
        'a2_w': w(18, (n_act, 64)),    'a2_b': w(19, (n_act,), 0.01),
        # critic
        'ccv_w': w(20, (4, 16, 1, 1)), 'ccv_b': w(21, (4,), 0.01),
        'c1_w': w(22, (64, 400)),      'c1_b': w(23, (64,), 0.01),
        'c2_w': w(24, (1, 64)),        'c2_b': w(25, (1,), 0.01),
    }


# ----------------------------------------------------------------------------
# Pure-JAX reference mirroring the PyTorch forward (NCHW), for validation.
# ----------------------------------------------------------------------------
def reference_forward(p, obs):
    grid, bert = obs['grid'], obs['bert_embeddings']
    B, _, H, W = grid.shape

    def conv(x, w, b, pad):
        y = lax.conv_general_dilated(x, w, (1, 1), [(pad, pad), (pad, pad)],
                                     dimension_numbers=('NCHW', 'OIHW', 'NCHW'))
        return y + b[None, :, None, None]

    q = jnp.tanh(conv(grid, p['q1_w'], p['q1_b'], 1))
    q = jnp.tanh(conv(q, p['q2_w'], p['q2_b'], 1))
    q = conv(q, p['q3_w'], p['q3_b'], 1)                          # (B, 64, H, W)
    queries = q.reshape(B, 64, H * W).transpose(0, 2, 1)          # (B, HW, 64)
    keys = bert @ p['wk'].T + p['bk']                             # (B, 64)
    scores = jnp.einsum('bqd,bd->bq', queries, keys)
    attn = jax.nn.softmax(scores / (64 ** 0.5), axis=-1)
    attended = attn.reshape(B, 1, H, W)
    f = jnp.tanh(conv(attended, p['s1_w'], p['s1_b'], 1))
    f = jnp.tanh(conv(f, p['s2_w'], p['s2_b'], 1))
    a = conv(f, p['acv_w'], p['acv_b'], 0).reshape(B, -1)
    a = jnp.tanh(a @ p['a1_w'].T + p['a1_b'])
    logits = a @ p['a2_w'].T + p['a2_b']
    c = jnp.tanh(conv(f, p['ccv_w'], p['ccv_b'], 0)).reshape(B, -1)
    c = jnp.tanh(c @ p['c1_w'].T + p['c1_b'])
    value = c @ p['c2_w'].T + p['c2_b']
    return logits, value


if __name__ == "__main__":
    key = jax.random.PRNGKey(0)
    pkey, gkey, bkey = jax.random.split(key, 3)

    B, bert_dim, n_act = 2, 32, 6
    params = build_params(pkey, bert_dim, n_act)
    obs = {
        'grid': jax.random.normal(gkey, (B, 3, 10, 10), jnp.float32),
        'bert_embeddings': jax.random.normal(bkey, (B, bert_dim), jnp.float32),
    }

    logits, value = multi_input_attention_forward(params, obs, n_act)
    logits = jax.block_until_ready(logits)
    value = jax.block_until_ready(value)

    ref_logits, ref_value = reference_forward(params, obs)
    np.testing.assert_allclose(np.asarray(logits), np.asarray(ref_logits),
                               rtol=3e-2, atol=3e-3)
    np.testing.assert_allclose(np.asarray(value), np.asarray(ref_value),
                               rtol=3e-2, atol=3e-3)
    print("KERNEL_OK")
</pallas_src>

<mosaic_0001>
module attributes {stable_mosaic.version = 11 : i64} {
  func.func @_forward_kernel(%arg0: memref<3x256xf32, #tpu.memory_space<vmem>>, %arg1: memref<32x2xf32, #tpu.memory_space<vmem>>, %arg2: memref<9x1x256xf32, #tpu.memory_space<vmem>>, %arg3: memref<2x256xf32, #tpu.memory_space<vmem>>, %arg4: memref<256x2xf32, #tpu.memory_space<vmem>>, %arg5: memref<64x32xf32, #tpu.memory_space<vmem>>, %arg6: memref<64x1xf32, #tpu.memory_space<vmem>>, %arg7: memref<144x3xf32, #tpu.memory_space<vmem>>, %arg8: memref<16x1xf32, #tpu.memory_space<vmem>>, %arg9: memref<288x16xf32, #tpu.memory_space<vmem>>, %arg10: memref<32x1xf32, #tpu.memory_space<vmem>>, %arg11: memref<576x32xf32, #tpu.memory_space<vmem>>, %arg12: memref<64x1xf32, #tpu.memory_space<vmem>>, %arg13: memref<72x1xf32, #tpu.memory_space<vmem>>, %arg14: memref<8x1xf32, #tpu.memory_space<vmem>>, %arg15: memref<144x8xf32, #tpu.memory_space<vmem>>, %arg16: memref<16x1xf32, #tpu.memory_space<vmem>>, %arg17: memref<4x16xf32, #tpu.memory_space<vmem>>, %arg18: memref<4x1xf32, #tpu.memory_space<vmem>>, %arg19: memref<4x64x256xf32, #tpu.memory_space<vmem>>, %arg20: memref<64x1xf32, #tpu.memory_space<vmem>>, %arg21: memref<6x64xf32, #tpu.memory_space<vmem>>, %arg22: memref<6x1xf32, #tpu.memory_space<vmem>>, %arg23: memref<4x16xf32, #tpu.memory_space<vmem>>, %arg24: memref<4x1xf32, #tpu.memory_space<vmem>>, %arg25: memref<4x64x256xf32, #tpu.memory_space<vmem>>, %arg26: memref<64x1xf32, #tpu.memory_space<vmem>>, %arg27: memref<1x64xf32, #tpu.memory_space<vmem>>, %arg28: memref<1x1xf32, #tpu.memory_space<vmem>>, %arg29: memref<6x2xf32, #tpu.memory_space<vmem>>, %arg30: memref<1x2xf32, #tpu.memory_space<vmem>>) attributes {dimension_semantics = [], scalar_prefetch = 0 : i64, scratch_operands = 0 : i64, tpu.core_type = #tpu.core_type<tc>} {
    %c0 = arith.constant 0 : index
    %c0_0 = arith.constant 0 : index
    %c0_1 = arith.constant 0 : index
    %0 = vector.load %arg2[%c0, %c0_0, %c0_1] : memref<9x1x256xf32, #tpu.memory_space<vmem>>, vector<1x1x256xf32>
    %1 = vector.shape_cast %0 : vector<1x1x256xf32> to vector<1x256xf32>
    %c1 = arith.constant 1 : index
    %c0_2 = arith.constant 0 : index
    %c0_3 = arith.constant 0 : index
    %2 = vector.load %arg2[%c1, %c0_2, %c0_3] : memref<9x1x256xf32, #tpu.memory_space<vmem>>, vector<1x1x256xf32>
    %3 = vector.shape_cast %2 : vector<1x1x256xf32> to vector<1x256xf32>
    %c2 = arith.constant 2 : index
    %c0_4 = arith.constant 0 : index
    %c0_5 = arith.constant 0 : index
    %4 = vector.load %arg2[%c2, %c0_4, %c0_5] : memref<9x1x256xf32, #tpu.memory_space<vmem>>, vector<1x1x256xf32>
    %5 = vector.shape_cast %4 : vector<1x1x256xf32> to vector<1x256xf32>
    %c3 = arith.constant 3 : index
    %c0_6 = arith.constant 0 : index
    %c0_7 = arith.constant 0 : index
    %6 = vector.load %arg2[%c3, %c0_6, %c0_7] : memref<9x1x256xf32, #tpu.memory_space<vmem>>, vector<1x1x256xf32>
    %7 = vector.shape_cast %6 : vector<1x1x256xf32> to vector<1x256xf32>
    %c4 = arith.constant 4 : index
    %c0_8 = arith.constant 0 : index
    %c0_9 = arith.constant 0 : index
    %8 = vector.load %arg2[%c4, %c0_8, %c0_9] : memref<9x1x256xf32, #tpu.memory_space<vmem>>, vector<1x1x256xf32>
    %9 = vector.shape_cast %8 : vector<1x1x256xf32> to vector<1x256xf32>
    %c5 = arith.constant 5 : index
    %c0_10 = arith.constant 0 : index
    %c0_11 = arith.constant 0 : index
    %10 = vector.load %arg2[%c5, %c0_10, %c0_11] : memref<9x1x256xf32, #tpu.memory_space<vmem>>, vector<1x1x256xf32>
    %11 = vector.shape_cast %10 : vector<1x1x256xf32> to vector<1x256xf32>
    %c6 = arith.constant 6 : index
    %c0_12 = arith.constant 0 : index
    %c0_13 = arith.constant 0 : index
    %12 = vector.load %arg2[%c6, %c0_12, %c0_13] : memref<9x1x256xf32, #tpu.memory_space<vmem>>, vector<1x1x256xf32>
    %13 = vector.shape_cast %12 : vector<1x1x256xf32> to vector<1x256xf32>
    %c7 = arith.constant 7 : index
    %c0_14 = arith.constant 0 : index
    %c0_15 = arith.constant 0 : index
    %14 = vector.load %arg2[%c7, %c0_14, %c0_15] : memref<9x1x256xf32, #tpu.memory_space<vmem>>, vector<1x1x256xf32>
    %15 = vector.shape_cast %14 : vector<1x1x256xf32> to vector<1x256xf32>
    %c8 = arith.constant 8 : index
    %c0_16 = arith.constant 0 : index
    %c0_17 = arith.constant 0 : index
    %16 = vector.load %arg2[%c8, %c0_16, %c0_17] : memref<9x1x256xf32, #tpu.memory_space<vmem>>, vector<1x1x256xf32>
    %17 = vector.shape_cast %16 : vector<1x1x256xf32> to vector<1x256xf32>
    %c0_18 = arith.constant 0 : index
    %c0_19 = arith.constant 0 : index
    %18 = vector.load %arg0[%c0_18, %c0_19] : memref<3x256xf32, #tpu.memory_space<vmem>>, vector<3x256xf32>
    %c0_20 = arith.constant 0 : index
    %c0_21 = arith.constant 0 : index
    %19 = vector.load %arg7[%c0_20, %c0_21] : memref<144x3xf32, #tpu.memory_space<vmem>>, vector<144x3xf32>
    %cst = arith.constant dense<0.000000e+00> : vector<144x256xf32>
    %20 = tpu.matmul %19, %18, %cst {dimension_numbers = #tpu.dot_dimension_numbers<[1], [0], [0], [1], [0, 0, 1, 1], [], []>} : vector<144x3xf32>, vector<3x256xf32>, vector<144x256xf32> -> vector<144x256xf32>
    %c0_22 = arith.constant 0 : index
    %c0_23 = arith.constant 0 : index
    %21 = vector.load %arg8[%c0_22, %c0_23] : memref<16x1xf32, #tpu.memory_space<vmem>>, vector<16x1xf32>
    %22 = vector.extract_strided_slice %20 {offsets = [0, 0], sizes = [16, 256], strides = [1, 1]} : vector<144x256xf32> to vector<16x256xf32>
    %c11_i32 = arith.constant 11 : i32
    %23 = tpu.dynamic_rotate %22 by %c11_i32 dim 1 : vector<16x256xf32>, i32 -> vector<16x256xf32>
    %24 = vector.broadcast %1 : vector<1x256xf32> to vector<16x256xf32>
    %25 = arith.mulf %23, %24 : vector<16x256xf32>
    %26 = vector.broadcast %21 : vector<16x1xf32> to vector<16x256xf32>
    %27 = arith.addf %26, %25 : vector<16x256xf32>
    %28 = vector.extract_strided_slice %20 {offsets = [16, 0], sizes = [16, 256], strides = [1, 1]} : vector<144x256xf32> to vector<16x256xf32>
    %c10_i32 = arith.constant 10 : i32
    %29 = tpu.dynamic_rotate %28 by %c10_i32 dim 1 : vector<16x256xf32>, i32 -> vector<16x256xf32>
    %30 = vector.broadcast %3 : vector<1x256xf32> to vector<16x256xf32>
    %31 = arith.mulf %29, %30 : vector<16x256xf32>
    %32 = arith.addf %27, %31 : vector<16x256xf32>
    %33 = vector.extract_strided_slice %20 {offsets = [32, 0], sizes = [16, 256], strides = [1, 1]} : vector<144x256xf32> to vector<16x256xf32>
    %c9_i32 = arith.constant 9 : i32
    %34 = tpu.dynamic_rotate %33 by %c9_i32 dim 1 : vector<16x256xf32>, i32 -> vector<16x256xf32>
    %35 = vector.broadcast %5 : vector<1x256xf32> to vector<16x256xf32>
    %36 = arith.mulf %34, %35 : vector<16x256xf32>
    %37 = arith.addf %32, %36 : vector<16x256xf32>
    %38 = vector.extract_strided_slice %20 {offsets = [48, 0], sizes = [16, 256], strides = [1, 1]} : vector<144x256xf32> to vector<16x256xf32>
    %c1_i32 = arith.constant 1 : i32
    %39 = tpu.dynamic_rotate %38 by %c1_i32 dim 1 : vector<16x256xf32>, i32 -> vector<16x256xf32>
    %40 = vector.broadcast %7 : vector<1x256xf32> to vector<16x256xf32>
    %41 = arith.mulf %39, %40 : vector<16x256xf32>
    %42 = arith.addf %37, %41 : vector<16x256xf32>
    %43 = vector.extract_strided_slice %20 {offsets = [64, 0], sizes = [16, 256], strides = [1, 1]} : vector<144x256xf32> to vector<16x256xf32>
    %c0_i32 = arith.constant 0 : i32
    %44 = tpu.dynamic_rotate %43 by %c0_i32 dim 1 : vector<16x256xf32>, i32 -> vector<16x256xf32>
    %45 = vector.broadcast %9 : vector<1x256xf32> to vector<16x256xf32>
    %46 = arith.mulf %44, %45 : vector<16x256xf32>
    %47 = arith.addf %42, %46 : vector<16x256xf32>
    %48 = vector.extract_strided_slice %20 {offsets = [80, 0], sizes = [16, 256], strides = [1, 1]} : vector<144x256xf32> to vector<16x256xf32>
    %c255_i32 = arith.constant 255 : i32
    %49 = tpu.dynamic_rotate %48 by %c255_i32 dim 1 : vector<16x256xf32>, i32 -> vector<16x256xf32>
    %50 = vector.broadcast %11 : vector<1x256xf32> to vector<16x256xf32>
    %51 = arith.mulf %49, %50 : vector<16x256xf32>
    %52 = arith.addf %47, %51 : vector<16x256xf32>
    %53 = vector.extract_strided_slice %20 {offsets = [96, 0], sizes = [16, 256], strides = [1, 1]} : vector<144x256xf32> to vector<16x256xf32>
    %c247_i32 = arith.constant 247 : i32
    %54 = tpu.dynamic_rotate %53 by %c247_i32 dim 1 : vector<16x256xf32>, i32 -> vector<16x256xf32>
    %55 = vector.broadcast %13 : vector<1x256xf32> to vector<16x256xf32>
    %56 = arith.mulf %54, %55 : vector<16x256xf32>
    %57 = arith.addf %52, %56 : vector<16x256xf32>
    %58 = vector.extract_strided_slice %20 {offsets = [112, 0], sizes = [16, 256], strides = [1, 1]} : vector<144x256xf32> to vector<16x256xf32>
    %c246_i32 = arith.constant 246 : i32
    %59 = tpu.dynamic_rotate %58 by %c246_i32 dim 1 : vector<16x256xf32>, i32 -> vector<16x256xf32>
    %60 = vector.broadcast %15 : vector<1x256xf32> to vector<16x256xf32>
    %61 = arith.mulf %59, %60 : vector<16x256xf32>
    %62 = arith.addf %57, %61 : vector<16x256xf32>
    %63 = vector.extract_strided_slice %20 {offsets = [128, 0], sizes = [16, 256], strides = [1, 1]} : vector<144x256xf32> to vector<16x256xf32>
    %c245_i32 = arith.constant 245 : i32
    %64 = tpu.dynamic_rotate %63 by %c245_i32 dim 1 : vector<16x256xf32>, i32 -> vector<16x256xf32>
    %65 = vector.broadcast %17 : vector<1x256xf32> to vector<16x256xf32>
    %66 = arith.mulf %64, %65 : vector<16x256xf32>
    %67 = arith.addf %62, %66 : vector<16x256xf32>
    %68 = math.tanh %67 : vector<16x256xf32>
    %c0_24 = arith.constant 0 : index
    %c0_25 = arith.constant 0 : index
    %69 = vector.load %arg9[%c0_24, %c0_25] : memref<288x16xf32, #tpu.memory_space<vmem>>, vector<288x16xf32>
    %cst_26 = arith.constant dense<0.000000e+00> : vector<288x256xf32>
    %70 = tpu.matmul %69, %68, %cst_26 {dimension_numbers = #tpu.dot_dimension_numbers<[1], [0], [0], [1], [0, 0, 1, 1], [], []>} : vector<288x16xf32>, vector<16x256xf32>, vector<288x256xf32> -> vector<288x256xf32>
    %c0_27 = arith.constant 0 : index
    %c0_28 = arith.constant 0 : index
    %71 = vector.load %arg10[%c0_27, %c0_28] : memref<32x1xf32, #tpu.memory_space<vmem>>, vector<32x1xf32>
    %72 = vector.extract_strided_slice %70 {offsets = [0, 0], sizes = [32, 256], strides = [1, 1]} : vector<288x256xf32> to vector<32x256xf32>
    %c11_i32_29 = arith.constant 11 : i32
    %73 = tpu.dynamic_rotate %72 by %c11_i32_29 dim 1 : vector<32x256xf32>, i32 -> vector<32x256xf32>
    %74 = vector.broadcast %1 : vector<1x256xf32> to vector<32x256xf32>
    %75 = arith.mulf %73, %74 : vector<32x256xf32>
    %76 = vector.broadcast %71 : vector<32x1xf32> to vector<32x256xf32>
    %77 = arith.addf %76, %75 : vector<32x256xf32>
    %78 = vector.extract_strided_slice %70 {offsets = [32, 0], sizes = [32, 256], strides = [1, 1]} : vector<288x256xf32> to vector<32x256xf32>
    %c10_i32_30 = arith.constant 10 : i32
    %79 = tpu.dynamic_rotate %78 by %c10_i32_30 dim 1 : vector<32x256xf32>, i32 -> vector<32x256xf32>
    %80 = vector.broadcast %3 : vector<1x256xf32> to vector<32x256xf32>
    %81 = arith.mulf %79, %80 : vector<32x256xf32>
    %82 = arith.addf %77, %81 : vector<32x256xf32>
    %83 = vector.extract_strided_slice %70 {offsets = [64, 0], sizes = [32, 256], strides = [1, 1]} : vector<288x256xf32> to vector<32x256xf32>
    %c9_i32_31 = arith.constant 9 : i32
    %84 = tpu.dynamic_rotate %83 by %c9_i32_31 dim 1 : vector<32x256xf32>, i32 -> vector<32x256xf32>
    %85 = vector.broadcast %5 : vector<1x256xf32> to vector<32x256xf32>
    %86 = arith.mulf %84, %85 : vector<32x256xf32>
    %87 = arith.addf %82, %86 : vector<32x256xf32>
    %88 = vector.extract_strided_slice %70 {offsets = [96, 0], sizes = [32, 256], strides = [1, 1]} : vector<288x256xf32> to vector<32x256xf32>
    %c1_i32_32 = arith.constant 1 : i32
    %89 = tpu.dynamic_rotate %88 by %c1_i32_32 dim 1 : vector<32x256xf32>, i32 -> vector<32x256xf32>
    %90 = vector.broadcast %7 : vector<1x256xf32> to vector<32x256xf32>
    %91 = arith.mulf %89, %90 : vector<32x256xf32>
    %92 = arith.addf %87, %91 : vector<32x256xf32>
    %93 = vector.extract_strided_slice %70 {offsets = [128, 0], sizes = [32, 256], strides = [1, 1]} : vector<288x256xf32> to vector<32x256xf32>
    %c0_i32_33 = arith.constant 0 : i32
    %94 = tpu.dynamic_rotate %93 by %c0_i32_33 dim 1 : vector<32x256xf32>, i32 -> vector<32x256xf32>
    %95 = vector.broadcast %9 : vector<1x256xf32> to vector<32x256xf32>
    %96 = arith.mulf %94, %95 : vector<32x256xf32>
    %97 = arith.addf %92, %96 : vector<32x256xf32>
    %98 = vector.extract_strided_slice %70 {offsets = [160, 0], sizes = [32, 256], strides = [1, 1]} : vector<288x256xf32> to vector<32x256xf32>
    %c255_i32_34 = arith.constant 255 : i32
    %99 = tpu.dynamic_rotate %98 by %c255_i32_34 dim 1 : vector<32x256xf32>, i32 -> vector<32x256xf32>
    %100 = vector.broadcast %11 : vector<1x256xf32> to vector<32x256xf32>
    %101 = arith.mulf %99, %100 : vector<32x256xf32>
    %102 = arith.addf %97, %101 : vector<32x256xf32>
    %103 = vector.extract_strided_slice %70 {offsets = [192, 0], sizes = [32, 256], strides = [1, 1]} : vector<288x256xf32> to vector<32x256xf32>
    %c247_i32_35 = arith.constant 247 : i32
    %104 = tpu.dynamic_rotate %103 by %c247_i32_35 dim 1 : vector<32x256xf32>, i32 -> vector<32x256xf32>
    %105 = vector.broadcast %13 : vector<1x256xf32> to vector<32x256xf32>
    %106 = arith.mulf %104, %105 : vector<32x256xf32>
    %107 = arith.addf %102, %106 : vector<32x256xf32>
    %108 = vector.extract_strided_slice %70 {offsets = [224, 0], sizes = [32, 256], strides = [1, 1]} : vector<288x256xf32> to vector<32x256xf32>
    %c246_i32_36 = arith.constant 246 : i32
    %109 = tpu.dynamic_rotate %108 by %c246_i32_36 dim 1 : vector<32x256xf32>, i32 -> vector<32x256xf32>
    %110 = vector.broadcast %15 : vector<1x256xf32> to vector<32x256xf32>
    %111 = arith.mulf %109, %110 : vector<32x256xf32>
    %112 = arith.addf %107, %111 : vector<32x256xf32>
    %113 = vector.extract_strided_slice %70 {offsets = [256, 0], sizes = [32, 256], strides = [1, 1]} : vector<288x256xf32> to vector<32x256xf32>
    %c245_i32_37 = arith.constant 245 : i32
    %114 = tpu.dynamic_rotate %113 by %c245_i32_37 dim 1 : vector<32x256xf32>, i32 -> vector<32x256xf32>
    %115 = vector.broadcast %17 : vector<1x256xf32> to vector<32x256xf32>
    %116 = arith.mulf %114, %115 : vector<32x256xf32>
    %117 = arith.addf %112, %116 : vector<32x256xf32>
    %118 = math.tanh %117 : vector<32x256xf32>
    %c0_38 = arith.constant 0 : index
    %c0_39 = arith.constant 0 : index
    %119 = vector.load %arg11[%c0_38, %c0_39] : memref<576x32xf32, #tpu.memory_space<vmem>>, vector<576x32xf32>
    %cst_40 = arith.constant dense<0.000000e+00> : vector<576x256xf32>
    %120 = tpu.matmul %119, %118, %cst_40 {dimension_numbers = #tpu.dot_dimension_numbers<[1], [0], [0], [1], [0, 0, 1, 1], [], []>} : vector<576x32xf32>, vector<32x256xf32>, vector<576x256xf32> -> vector<576x256xf32>
    %c0_41 = arith.constant 0 : index
    %c0_42 = arith.constant 0 : index
    %121 = vector.load %arg12[%c0_41, %c0_42] : memref<64x1xf32, #tpu.memory_space<vmem>>, vector<64x1xf32>
    %122 = vector.extract_strided_slice %120 {offsets = [0, 0], sizes = [64, 256], strides = [1, 1]} : vector<576x256xf32> to vector<64x256xf32>
    %c11_i32_43 = arith.constant 11 : i32
    %123 = tpu.dynamic_rotate %122 by %c11_i32_43 dim 1 : vector<64x256xf32>, i32 -> vector<64x256xf32>
    %124 = vector.broadcast %1 : vector<1x256xf32> to vector<64x256xf32>
    %125 = arith.mulf %123, %124 : vector<64x256xf32>
    %126 = vector.broadcast %121 : vector<64x1xf32> to vector<64x256xf32>
    %127 = arith.addf %126, %125 : vector<64x256xf32>
    %128 = vector.extract_strided_slice %120 {offsets = [64, 0], sizes = [64, 256], strides = [1, 1]} : vector<576x256xf32> to vector<64x256xf32>
    %c10_i32_44 = arith.constant 10 : i32
    %129 = tpu.dynamic_rotate %128 by %c10_i32_44 dim 1 : vector<64x256xf32>, i32 -> vector<64x256xf32>
    %130 = vector.broadcast %3 : vector<1x256xf32> to vector<64x256xf32>
    %131 = arith.mulf %129, %130 : vector<64x256xf32>
    %132 = arith.addf %127, %131 : vector<64x256xf32>
    %133 = vector.extract_strided_slice %120 {offsets = [128, 0], sizes = [64, 256], strides = [1, 1]} : vector<576x256xf32> to vector<64x256xf32>
    %c9_i32_45 = arith.constant 9 : i32
    %134 = tpu.dynamic_rotate %133 by %c9_i32_45 dim 1 : vector<64x256xf32>, i32 -> vector<64x256xf32>
    %135 = vector.broadcast %5 : vector<1x256xf32> to vector<64x256xf32>
    %136 = arith.mulf %134, %135 : vector<64x256xf32>
    %137 = arith.addf %132, %136 : vector<64x256xf32>
    %138 = vector.extract_strided_slice %120 {offsets = [192, 0], sizes = [64, 256], strides = [1, 1]} : vector<576x256xf32> to vector<64x256xf32>
    %c1_i32_46 = arith.constant 1 : i32
    %139 = tpu.dynamic_rotate %138 by %c1_i32_46 dim 1 : vector<64x256xf32>, i32 -> vector<64x256xf32>
    %140 = vector.broadcast %7 : vector<1x256xf32> to vector<64x256xf32>
    %141 = arith.mulf %139, %140 : vector<64x256xf32>
    %142 = arith.addf %137, %141 : vector<64x256xf32>
    %143 = vector.extract_strided_slice %120 {offsets = [256, 0], sizes = [64, 256], strides = [1, 1]} : vector<576x256xf32> to vector<64x256xf32>
    %c0_i32_47 = arith.constant 0 : i32
    %144 = tpu.dynamic_rotate %143 by %c0_i32_47 dim 1 : vector<64x256xf32>, i32 -> vector<64x256xf32>
    %145 = vector.broadcast %9 : vector<1x256xf32> to vector<64x256xf32>
    %146 = arith.mulf %144, %145 : vector<64x256xf32>
    %147 = arith.addf %142, %146 : vector<64x256xf32>
    %148 = vector.extract_strided_slice %120 {offsets = [320, 0], sizes = [64, 256], strides = [1, 1]} : vector<576x256xf32> to vector<64x256xf32>
    %c255_i32_48 = arith.constant 255 : i32
    %149 = tpu.dynamic_rotate %148 by %c255_i32_48 dim 1 : vector<64x256xf32>, i32 -> vector<64x256xf32>
    %150 = vector.broadcast %11 : vector<1x256xf32> to vector<64x256xf32>
    %151 = arith.mulf %149, %150 : vector<64x256xf32>
    %152 = arith.addf %147, %151 : vector<64x256xf32>
    %153 = vector.extract_strided_slice %120 {offsets = [384, 0], sizes = [64, 256], strides = [1, 1]} : vector<576x256xf32> to vector<64x256xf32>
    %c247_i32_49 = arith.constant 247 : i32
    %154 = tpu.dynamic_rotate %153 by %c247_i32_49 dim 1 : vector<64x256xf32>, i32 -> vector<64x256xf32>
    %155 = vector.broadcast %13 : vector<1x256xf32> to vector<64x256xf32>
    %156 = arith.mulf %154, %155 : vector<64x256xf32>
    %157 = arith.addf %152, %156 : vector<64x256xf32>
    %158 = vector.extract_strided_slice %120 {offsets = [448, 0], sizes = [64, 256], strides = [1, 1]} : vector<576x256xf32> to vector<64x256xf32>
    %c246_i32_50 = arith.constant 246 : i32
    %159 = tpu.dynamic_rotate %158 by %c246_i32_50 dim 1 : vector<64x256xf32>, i32 -> vector<64x256xf32>
    %160 = vector.broadcast %15 : vector<1x256xf32> to vector<64x256xf32>
    %161 = arith.mulf %159, %160 : vector<64x256xf32>
    %162 = arith.addf %157, %161 : vector<64x256xf32>
    %163 = vector.extract_strided_slice %120 {offsets = [512, 0], sizes = [64, 256], strides = [1, 1]} : vector<576x256xf32> to vector<64x256xf32>
    %c245_i32_51 = arith.constant 245 : i32
    %164 = tpu.dynamic_rotate %163 by %c245_i32_51 dim 1 : vector<64x256xf32>, i32 -> vector<64x256xf32>
    %165 = vector.broadcast %17 : vector<1x256xf32> to vector<64x256xf32>
    %166 = arith.mulf %164, %165 : vector<64x256xf32>
    %167 = arith.addf %162, %166 : vector<64x256xf32>
    %c0_52 = arith.constant 0 : index
    %c0_53 = arith.constant 0 : index
    %168 = vector.load %arg5[%c0_52, %c0_53] : memref<64x32xf32, #tpu.memory_space<vmem>>, vector<64x32xf32>
    %c0_54 = arith.constant 0 : index
    %c0_55 = arith.constant 0 : index
    %169 = vector.load %arg1[%c0_54, %c0_55] : memref<32x2xf32, #tpu.memory_space<vmem>>, vector<32x2xf32>
    %cst_56 = arith.constant dense<0.000000e+00> : vector<64x2xf32>
    %170 = tpu.matmul %168, %169, %cst_56 {dimension_numbers = #tpu.dot_dimension_numbers<[1], [0], [0], [1], [0, 0, 1, 1], [], []>} : vector<64x32xf32>, vector<32x2xf32>, vector<64x2xf32> -> vector<64x2xf32>
    %c0_57 = arith.constant 0 : index
    %c0_58 = arith.constant 0 : index
    %171 = vector.load %arg6[%c0_57, %c0_58] : memref<64x1xf32, #tpu.memory_space<vmem>>, vector<64x1xf32>
    %172 = vector.broadcast %171 : vector<64x1xf32> to vector<64x2xf32>
    %173 = arith.addf %170, %172 : vector<64x2xf32>
    %c0_59 = arith.constant 0 : index
    %c0_60 = arith.constant 0 : index
    %174 = vector.load %arg3[%c0_59, %c0_60] : memref<2x256xf32, #tpu.memory_space<vmem>>, vector<2x256xf32>
    %cst_61 = arith.constant dense<0.000000e+00> : vector<64x256xf32>
    %175 = tpu.matmul %173, %174, %cst_61 {dimension_numbers = #tpu.dot_dimension_numbers<[1], [0], [0], [1], [0, 0, 1, 1], [], []>} : vector<64x2xf32>, vector<2x256xf32>, vector<64x256xf32> -> vector<64x256xf32>
    %176 = arith.mulf %167, %175 : vector<64x256xf32>
    %cst_62 = arith.constant dense<0.000000e+00> : vector<256xf32>
    %177 = vector.multi_reduction <add>, %176, %cst_62 [0] : vector<64x256xf32> to vector<256xf32>
    %178 = vector.shape_cast %177 : vector<256xf32> to vector<1x256xf32>
    %cst_63 = arith.constant 1.250000e-01 : f32
    %179 = vector.broadcast %cst_63 : f32 to vector<1x256xf32>
    %180 = arith.mulf %178, %179 : vector<1x256xf32>
    %cst_64 = arith.constant 5.000000e-01 : f32
    %181 = vector.broadcast %cst_64 : f32 to vector<1x256xf32>
    %182 = arith.cmpf ogt, %9, %181 : vector<1x256xf32>
    %cst_65 = arith.constant -1.000000e+30 : f32
    %183 = vector.broadcast %cst_65 : f32 to vector<1x256xf32>
    %184 = arith.select %182, %180, %183 : vector<1x256xi1>, vector<1x256xf32>
    %cst_66 = arith.constant dense<0xFF800000> : vector<1xf32>
    %185 = vector.multi_reduction <maximumf>, %184, %cst_66 [1] : vector<1x256xf32> to vector<1xf32>
    %186 = vector.shape_cast %185 : vector<1xf32> to vector<1x1xf32>
    %187 = vector.broadcast %186 : vector<1x1xf32> to vector<1x256xf32>
    %188 = arith.subf %184, %187 : vector<1x256xf32>
    %189 = math.exp %188 : vector<1x256xf32>
    %c0_67 = arith.constant 0 : index
    %c0_68 = arith.constant 0 : index
    %190 = vector.load %arg4[%c0_67, %c0_68] : memref<256x2xf32, #tpu.memory_space<vmem>>, vector<256x2xf32>
    %cst_69 = arith.constant dense<0.000000e+00> : vector<1x2xf32>
    %191 = tpu.matmul %189, %190, %cst_69 {dimension_numbers = #tpu.dot_dimension_numbers<[1], [0], [0], [1], [0, 0, 1, 1], [], []>} : vector<1x256xf32>, vector<256x2xf32>, vector<1x2xf32> -> vector<1x2xf32>
    %c0_70 = arith.constant 0 : index
    %c0_71 = arith.constant 0 : index
    %192 = vector.load %arg3[%c0_70, %c0_71] : memref<2x256xf32, #tpu.memory_space<vmem>>, vector<2x256xf32>
    %cst_72 = arith.constant dense<0.000000e+00> : vector<1x256xf32>
    %193 = tpu.matmul %191, %192, %cst_72 {dimension_numbers = #tpu.dot_dimension_numbers<[1], [0], [0], [1], [0, 0, 1, 1], [], []>} : vector<1x2xf32>, vector<2x256xf32>, vector<1x256xf32> -> vector<1x256xf32>
    %194 = arith.divf %189, %193 : vector<1x256xf32>
    %c0_73 = arith.constant 0 : index
    %c0_74 = arith.constant 0 : index
    %195 = vector.load %arg13[%c0_73, %c0_74] : memref<72x1xf32, #tpu.memory_space<vmem>>, vector<72x1xf32>
    %cst_75 = arith.constant dense<0.000000e+00> : vector<72x256xf32>
    %196 = tpu.matmul %195, %194, %cst_75 {dimension_numbers = #tpu.dot_dimension_numbers<[1], [0], [0], [1], [0, 0, 1, 1], [], []>} : vector<72x1xf32>, vector<1x256xf32>, vector<72x256xf32> -> vector<72x256xf32>
    %c0_76 = arith.constant 0 : index
    %c0_77 = arith.constant 0 : index
    %197 = vector.load %arg14[%c0_76, %c0_77] : memref<8x1xf32, #tpu.memory_space<vmem>>, vector<8x1xf32>
    %198 = vector.extract_strided_slice %196 {offsets = [0, 0], sizes = [8, 256], strides = [1, 1]} : vector<72x256xf32> to vector<8x256xf32>
    %c11_i32_78 = arith.constant 11 : i32
    %199 = tpu.dynamic_rotate %198 by %c11_i32_78 dim 1 : vector<8x256xf32>, i32 -> vector<8x256xf32>
    %200 = vector.broadcast %1 : vector<1x256xf32> to vector<8x256xf32>
    %201 = arith.mulf %199, %200 : vector<8x256xf32>
    %202 = vector.broadcast %197 : vector<8x1xf32> to vector<8x256xf32>
    %203 = arith.addf %202, %201 : vector<8x256xf32>
    %204 = vector.extract_strided_slice %196 {offsets = [8, 0], sizes = [8, 256], strides = [1, 1]} : vector<72x256xf32> to vector<8x256xf32>
    %c10_i32_79 = arith.constant 10 : i32
    %205 = tpu.dynamic_rotate %204 by %c10_i32_79 dim 1 : vector<8x256xf32>, i32 -> vector<8x256xf32>
    %206 = vector.broadcast %3 : vector<1x256xf32> to vector<8x256xf32>
    %207 = arith.mulf %205, %206 : vector<8x256xf32>
    %208 = arith.addf %203, %207 : vector<8x256xf32>
    %209 = vector.extract_strided_slice %196 {offsets = [16, 0], sizes = [8, 256], strides = [1, 1]} : vector<72x256xf32> to vector<8x256xf32>
    %c9_i32_80 = arith.constant 9 : i32
    %210 = tpu.dynamic_rotate %209 by %c9_i32_80 dim 1 : vector<8x256xf32>, i32 -> vector<8x256xf32>
    %211 = vector.broadcast %5 : vector<1x256xf32> to vector<8x256xf32>
    %212 = arith.mulf %210, %211 : vector<8x256xf32>
    %213 = arith.addf %208, %212 : vector<8x256xf32>
    %214 = vector.extract_strided_slice %196 {offsets = [24, 0], sizes = [8, 256], strides = [1, 1]} : vector<72x256xf32> to vector<8x256xf32>
    %c1_i32_81 = arith.constant 1 : i32
    %215 = tpu.dynamic_rotate %214 by %c1_i32_81 dim 1 : vector<8x256xf32>, i32 -> vector<8x256xf32>
    %216 = vector.broadcast %7 : vector<1x256xf32> to vector<8x256xf32>
    %217 = arith.mulf %215, %216 : vector<8x256xf32>
    %218 = arith.addf %213, %217 : vector<8x256xf32>
    %219 = vector.extract_strided_slice %196 {offsets = [32, 0], sizes = [8, 256], strides = [1, 1]} : vector<72x256xf32> to vector<8x256xf32>
    %c0_i32_82 = arith.constant 0 : i32
    %220 = tpu.dynamic_rotate %219 by %c0_i32_82 dim 1 : vector<8x256xf32>, i32 -> vector<8x256xf32>
    %221 = vector.broadcast %9 : vector<1x256xf32> to vector<8x256xf32>
    %222 = arith.mulf %220, %221 : vector<8x256xf32>
    %223 = arith.addf %218, %222 : vector<8x256xf32>
    %224 = vector.extract_strided_slice %196 {offsets = [40, 0], sizes = [8, 256], strides = [1, 1]} : vector<72x256xf32> to vector<8x256xf32>
    %c255_i32_83 = arith.constant 255 : i32
    %225 = tpu.dynamic_rotate %224 by %c255_i32_83 dim 1 : vector<8x256xf32>, i32 -> vector<8x256xf32>
    %226 = vector.broadcast %11 : vector<1x256xf32> to vector<8x256xf32>
    %227 = arith.mulf %225, %226 : vector<8x256xf32>
    %228 = arith.addf %223, %227 : vector<8x256xf32>
    %229 = vector.extract_strided_slice %196 {offsets = [48, 0], sizes = [8, 256], strides = [1, 1]} : vector<72x256xf32> to vector<8x256xf32>
    %c247_i32_84 = arith.constant 247 : i32
    %230 = tpu.dynamic_rotate %229 by %c247_i32_84 dim 1 : vector<8x256xf32>, i32 -> vector<8x256xf32>
    %231 = vector.broadcast %13 : vector<1x256xf32> to vector<8x256xf32>
    %232 = arith.mulf %230, %231 : vector<8x256xf32>
    %233 = arith.addf %228, %232 : vector<8x256xf32>
    %234 = vector.extract_strided_slice %196 {offsets = [56, 0], sizes = [8, 256], strides = [1, 1]} : vector<72x256xf32> to vector<8x256xf32>
    %c246_i32_85 = arith.constant 246 : i32
    %235 = tpu.dynamic_rotate %234 by %c246_i32_85 dim 1 : vector<8x256xf32>, i32 -> vector<8x256xf32>
    %236 = vector.broadcast %15 : vector<1x256xf32> to vector<8x256xf32>
    %237 = arith.mulf %235, %236 : vector<8x256xf32>
    %238 = arith.addf %233, %237 : vector<8x256xf32>
    %239 = vector.extract_strided_slice %196 {offsets = [64, 0], sizes = [8, 256], strides = [1, 1]} : vector<72x256xf32> to vector<8x256xf32>
    %c245_i32_86 = arith.constant 245 : i32
    %240 = tpu.dynamic_rotate %239 by %c245_i32_86 dim 1 : vector<8x256xf32>, i32 -> vector<8x256xf32>
    %241 = vector.broadcast %17 : vector<1x256xf32> to vector<8x256xf32>
    %242 = arith.mulf %240, %241 : vector<8x256xf32>
    %243 = arith.addf %238, %242 : vector<8x256xf32>
    %244 = math.tanh %243 : vector<8x256xf32>
    %c0_87 = arith.constant 0 : index
    %c0_88 = arith.constant 0 : index
    %245 = vector.load %arg15[%c0_87, %c0_88] : memref<144x8xf32, #tpu.memory_space<vmem>>, vector<144x8xf32>
    %cst_89 = arith.constant dense<0.000000e+00> : vector<144x256xf32>
    %246 = tpu.matmul %245, %244, %cst_89 {dimension_numbers = #tpu.dot_dimension_numbers<[1], [0], [0], [1], [0, 0, 1, 1], [], []>} : vector<144x8xf32>, vector<8x256xf32>, vector<144x256xf32> -> vector<144x256xf32>
    %c0_90 = arith.constant 0 : index
    %c0_91 = arith.constant 0 : index
    %247 = vector.load %arg16[%c0_90, %c0_91] : memref<16x1xf32, #tpu.memory_space<vmem>>, vector<16x1xf32>
    %248 = vector.extract_strided_slice %246 {offsets = [0, 0], sizes = [16, 256], strides = [1, 1]} : vector<144x256xf32> to vector<16x256xf32>
    %c11_i32_92 = arith.constant 11 : i32
    %249 = tpu.dynamic_rotate %248 by %c11_i32_92 dim 1 : vector<16x256xf32>, i32 -> vector<16x256xf32>
    %250 = vector.broadcast %1 : vector<1x256xf32> to vector<16x256xf32>
    %251 = arith.mulf %249, %250 : vector<16x256xf32>
    %252 = vector.broadcast %247 : vector<16x1xf32> to vector<16x256xf32>
    %253 = arith.addf %252, %251 : vector<16x256xf32>
    %254 = vector.extract_strided_slice %246 {offsets = [16, 0], sizes = [16, 256], strides = [1, 1]} : vector<144x256xf32> to vector<16x256xf32>
    %c10_i32_93 = arith.constant 10 : i32
    %255 = tpu.dynamic_rotate %254 by %c10_i32_93 dim 1 : vector<16x256xf32>, i32 -> vector<16x256xf32>
    %256 = vector.broadcast %3 : vector<1x256xf32> to vector<16x256xf32>
    %257 = arith.mulf %255, %256 : vector<16x256xf32>
    %258 = arith.addf %253, %257 : vector<16x256xf32>
    %259 = vector.extract_strided_slice %246 {offsets = [32, 0], sizes = [16, 256], strides = [1, 1]} : vector<144x256xf32> to vector<16x256xf32>
    %c9_i32_94 = arith.constant 9 : i32
    %260 = tpu.dynamic_rotate %259 by %c9_i32_94 dim 1 : vector<16x256xf32>, i32 -> vector<16x256xf32>
    %261 = vector.broadcast %5 : vector<1x256xf32> to vector<16x256xf32>
    %262 = arith.mulf %260, %261 : vector<16x256xf32>
    %263 = arith.addf %258, %262 : vector<16x256xf32>
    %264 = vector.extract_strided_slice %246 {offsets = [48, 0], sizes = [16, 256], strides = [1, 1]} : vector<144x256xf32> to vector<16x256xf32>
    %c1_i32_95 = arith.constant 1 : i32
    %265 = tpu.dynamic_rotate %264 by %c1_i32_95 dim 1 : vector<16x256xf32>, i32 -> vector<16x256xf32>
    %266 = vector.broadcast %7 : vector<1x256xf32> to vector<16x256xf32>
    %267 = arith.mulf %265, %266 : vector<16x256xf32>
    %268 = arith.addf %263, %267 : vector<16x256xf32>
    %269 = vector.extract_strided_slice %246 {offsets = [64, 0], sizes = [16, 256], strides = [1, 1]} : vector<144x256xf32> to vector<16x256xf32>
    %c0_i32_96 = arith.constant 0 : i32
    %270 = tpu.dynamic_rotate %269 by %c0_i32_96 dim 1 : vector<16x256xf32>, i32 -> vector<16x256xf32>
    %271 = vector.broadcast %9 : vector<1x256xf32> to vector<16x256xf32>
    %272 = arith.mulf %270, %271 : vector<16x256xf32>
    %273 = arith.addf %268, %272 : vector<16x256xf32>
    %274 = vector.extract_strided_slice %246 {offsets = [80, 0], sizes = [16, 256], strides = [1, 1]} : vector<144x256xf32> to vector<16x256xf32>
    %c255_i32_97 = arith.constant 255 : i32
    %275 = tpu.dynamic_rotate %274 by %c255_i32_97 dim 1 : vector<16x256xf32>, i32 -> vector<16x256xf32>
    %276 = vector.broadcast %11 : vector<1x256xf32> to vector<16x256xf32>
    %277 = arith.mulf %275, %276 : vector<16x256xf32>
    %278 = arith.addf %273, %277 : vector<16x256xf32>
    %279 = vector.extract_strided_slice %246 {offsets = [96, 0], sizes = [16, 256], strides = [1, 1]} : vector<144x256xf32> to vector<16x256xf32>
    %c247_i32_98 = arith.constant 247 : i32
    %280 = tpu.dynamic_rotate %279 by %c247_i32_98 dim 1 : vector<16x256xf32>, i32 -> vector<16x256xf32>
    %281 = vector.broadcast %13 : vector<1x256xf32> to vector<16x256xf32>
    %282 = arith.mulf %280, %281 : vector<16x256xf32>
    %283 = arith.addf %278, %282 : vector<16x256xf32>
    %284 = vector.extract_strided_slice %246 {offsets = [112, 0], sizes = [16, 256], strides = [1, 1]} : vector<144x256xf32> to vector<16x256xf32>
    %c246_i32_99 = arith.constant 246 : i32
    %285 = tpu.dynamic_rotate %284 by %c246_i32_99 dim 1 : vector<16x256xf32>, i32 -> vector<16x256xf32>
    %286 = vector.broadcast %15 : vector<1x256xf32> to vector<16x256xf32>
    %287 = arith.mulf %285, %286 : vector<16x256xf32>
    %288 = arith.addf %283, %287 : vector<16x256xf32>
    %289 = vector.extract_strided_slice %246 {offsets = [128, 0], sizes = [16, 256], strides = [1, 1]} : vector<144x256xf32> to vector<16x256xf32>
    %c245_i32_100 = arith.constant 245 : i32
    %290 = tpu.dynamic_rotate %289 by %c245_i32_100 dim 1 : vector<16x256xf32>, i32 -> vector<16x256xf32>
    %291 = vector.broadcast %17 : vector<1x256xf32> to vector<16x256xf32>
    %292 = arith.mulf %290, %291 : vector<16x256xf32>
    %293 = arith.addf %288, %292 : vector<16x256xf32>
    %294 = math.tanh %293 : vector<16x256xf32>
    %c0_101 = arith.constant 0 : index
    %c0_102 = arith.constant 0 : index
    %295 = vector.load %arg17[%c0_101, %c0_102] : memref<4x16xf32, #tpu.memory_space<vmem>>, vector<4x16xf32>
    %cst_103 = arith.constant dense<0.000000e+00> : vector<4x256xf32>
    %296 = tpu.matmul %295, %294, %cst_103 {dimension_numbers = #tpu.dot_dimension_numbers<[1], [0], [0], [1], [0, 0, 1, 1], [], []>} : vector<4x16xf32>, vector<16x256xf32>, vector<4x256xf32> -> vector<4x256xf32>
    %c0_104 = arith.constant 0 : index
    %c0_105 = arith.constant 0 : index
    %297 = vector.load %arg18[%c0_104, %c0_105] : memref<4x1xf32, #tpu.memory_space<vmem>>, vector<4x1xf32>
    %298 = vector.broadcast %297 : vector<4x1xf32> to vector<4x256xf32>
    %299 = arith.addf %296, %298 : vector<4x256xf32>
    %c0_106 = arith.constant 0 : index
    %c0_107 = arith.constant 0 : index
    %300 = vector.load %arg23[%c0_106, %c0_107] : memref<4x16xf32, #tpu.memory_space<vmem>>, vector<4x16xf32>
    %cst_108 = arith.constant dense<0.000000e+00> : vector<4x256xf32>
    %301 = tpu.matmul %300, %294, %cst_108 {dimension_numbers = #tpu.dot_dimension_numbers<[1], [0], [0], [1], [0, 0, 1, 1], [], []>} : vector<4x16xf32>, vector<16x256xf32>, vector<4x256xf32> -> vector<4x256xf32>
    %c0_109 = arith.constant 0 : index
    %c0_110 = arith.constant 0 : index
    %302 = vector.load %arg24[%c0_109, %c0_110] : memref<4x1xf32, #tpu.memory_space<vmem>>, vector<4x1xf32>
    %303 = vector.broadcast %302 : vector<4x1xf32> to vector<4x256xf32>
    %304 = arith.addf %301, %303 : vector<4x256xf32>
    %305 = math.tanh %304 : vector<4x256xf32>
    %c0_111 = arith.constant 0 : index
    %c0_112 = arith.constant 0 : index
    %c0_113 = arith.constant 0 : index
    %306 = vector.load %arg19[%c0_111, %c0_112, %c0_113] : memref<4x64x256xf32, #tpu.memory_space<vmem>>, vector<1x64x256xf32>
    %307 = vector.shape_cast %306 : vector<1x64x256xf32> to vector<64x256xf32>
    %308 = vector.extract_strided_slice %299 {offsets = [0, 0], sizes = [1, 256], strides = [1, 1]} : vector<4x256xf32> to vector<1x256xf32>
    %309 = vector.broadcast %308 : vector<1x256xf32> to vector<64x256xf32>
    %310 = arith.mulf %307, %309 : vector<64x256xf32>
    %c1_114 = arith.constant 1 : index
    %c0_115 = arith.constant 0 : index
    %c0_116 = arith.constant 0 : index
    %311 = vector.load %arg19[%c1_114, %c0_115, %c0_116] : memref<4x64x256xf32, #tpu.memory_space<vmem>>, vector<1x64x256xf32>
    %312 = vector.shape_cast %311 : vector<1x64x256xf32> to vector<64x256xf32>
    %313 = vector.extract_strided_slice %299 {offsets = [1, 0], sizes = [1, 256], strides = [1, 1]} : vector<4x256xf32> to vector<1x256xf32>
    %314 = vector.broadcast %313 : vector<1x256xf32> to vector<64x256xf32>
    %315 = arith.mulf %312, %314 : vector<64x256xf32>
    %316 = arith.addf %310, %315 : vector<64x256xf32>
    %c2_117 = arith.constant 2 : index
    %c0_118 = arith.constant 0 : index
    %c0_119 = arith.constant 0 : index
    %317 = vector.load %arg19[%c2_117, %c0_118, %c0_119] : memref<4x64x256xf32, #tpu.memory_space<vmem>>, vector<1x64x256xf32>
    %318 = vector.shape_cast %317 : vector<1x64x256xf32> to vector<64x256xf32>
    %319 = vector.extract_strided_slice %299 {offsets = [2, 0], sizes = [1, 256], strides = [1, 1]} : vector<4x256xf32> to vector<1x256xf32>
    %320 = vector.broadcast %319 : vector<1x256xf32> to vector<64x256xf32>
    %321 = arith.mulf %318, %320 : vector<64x256xf32>
    %322 = arith.addf %316, %321 : vector<64x256xf32>
    %c3_120 = arith.constant 3 : index
    %c0_121 = arith.constant 0 : index
    %c0_122 = arith.constant 0 : index
    %323 = vector.load %arg19[%c3_120, %c0_121, %c0_122] : memref<4x64x256xf32, #tpu.memory_space<vmem>>, vector<1x64x256xf32>
    %324 = vector.shape_cast %323 : vector<1x64x256xf32> to vector<64x256xf32>
    %325 = vector.extract_strided_slice %299 {offsets = [3, 0], sizes = [1, 256], strides = [1, 1]} : vector<4x256xf32> to vector<1x256xf32>
    %326 = vector.broadcast %325 : vector<1x256xf32> to vector<64x256xf32>
    %327 = arith.mulf %324, %326 : vector<64x256xf32>
    %328 = arith.addf %322, %327 : vector<64x256xf32>
    %c0_123 = arith.constant 0 : index
    %c0_124 = arith.constant 0 : index
    %329 = vector.load %arg4[%c0_123, %c0_124] : memref<256x2xf32, #tpu.memory_space<vmem>>, vector<256x2xf32>
    %cst_125 = arith.constant dense<0.000000e+00> : vector<64x2xf32>
    %330 = tpu.matmul %328, %329, %cst_125 {dimension_numbers = #tpu.dot_dimension_numbers<[1], [0], [0], [1], [0, 0, 1, 1], [], []>} : vector<64x256xf32>, vector<256x2xf32>, vector<64x2xf32> -> vector<64x2xf32>
    %c0_126 = arith.constant 0 : index
    %c0_127 = arith.constant 0 : index
    %331 = vector.load %arg20[%c0_126, %c0_127] : memref<64x1xf32, #tpu.memory_space<vmem>>, vector<64x1xf32>
    %332 = vector.broadcast %331 : vector<64x1xf32> to vector<64x2xf32>
    %333 = arith.addf %330, %332 : vector<64x2xf32>
    %334 = math.tanh %333 : vector<64x2xf32>
    %c0_128 = arith.constant 0 : index
    %c0_129 = arith.constant 0 : index
    %335 = vector.load %arg21[%c0_128, %c0_129] : memref<6x64xf32, #tpu.memory_space<vmem>>, vector<6x64xf32>
    %cst_130 = arith.constant dense<0.000000e+00> : vector<6x2xf32>
    %336 = tpu.matmul %335, %334, %cst_130 {dimension_numbers = #tpu.dot_dimension_numbers<[1], [0], [0], [1], [0, 0, 1, 1], [], []>} : vector<6x64xf32>, vector<64x2xf32>, vector<6x2xf32> -> vector<6x2xf32>
    %c0_131 = arith.constant 0 : index
    %c0_132 = arith.constant 0 : index
    %337 = vector.load %arg22[%c0_131, %c0_132] : memref<6x1xf32, #tpu.memory_space<vmem>>, vector<6x1xf32>
    %338 = vector.broadcast %337 : vector<6x1xf32> to vector<6x2xf32>
    %339 = arith.addf %336, %338 : vector<6x2xf32>
    %c0_133 = arith.constant 0 : index
    %c0_134 = arith.constant 0 : index
    %340 = vector.load %arg29[%c0_133, %c0_134] : memref<6x2xf32, #tpu.memory_space<vmem>>, vector<6x2xf32>
    tpu.vector_store %arg29[%c0_133, %c0_134], %339 {strides = array<i32>} : memref<6x2xf32, #tpu.memory_space<vmem>>, vector<6x2xf32>,
    %c0_135 = arith.constant 0 : index
    %c0_136 = arith.constant 0 : index
    %c0_137 = arith.constant 0 : index
    %341 = vector.load %arg25[%c0_135, %c0_136, %c0_137] : memref<4x64x256xf32, #tpu.memory_space<vmem>>, vector<1x64x256xf32>
    %342 = vector.shape_cast %341 : vector<1x64x256xf32> to vector<64x256xf32>
    %343 = vector.extract_strided_slice %305 {offsets = [0, 0], sizes = [1, 256], strides = [1, 1]} : vector<4x256xf32> to vector<1x256xf32>
    %344 = vector.broadcast %343 : vector<1x256xf32> to vector<64x256xf32>
    %345 = arith.mulf %342, %344 : vector<64x256xf32>
    %c1_138 = arith.constant 1 : index
    %c0_139 = arith.constant 0 : index
    %c0_140 = arith.constant 0 : index
    %346 = vector.load %arg25[%c1_138, %c0_139, %c0_140] : memref<4x64x256xf32, #tpu.memory_space<vmem>>, vector<1x64x256xf32>
    %347 = vector.shape_cast %346 : vector<1x64x256xf32> to vector<64x256xf32>
    %348 = vector.extract_strided_slice %305 {offsets = [1, 0], sizes = [1, 256], strides = [1, 1]} : vector<4x256xf32> to vector<1x256xf32>
    %349 = vector.broadcast %348 : vector<1x256xf32> to vector<64x256xf32>
    %350 = arith.mulf %347, %349 : vector<64x256xf32>
    %351 = arith.addf %345, %350 : vector<64x256xf32>
    %c2_141 = arith.constant 2 : index
    %c0_142 = arith.constant 0 : index
    %c0_143 = arith.constant 0 : index
    %352 = vector.load %arg25[%c2_141, %c0_142, %c0_143] : memref<4x64x256xf32, #tpu.memory_space<vmem>>, vector<1x64x256xf32>
    %353 = vector.shape_cast %352 : vector<1x64x256xf32> to vector<64x256xf32>
    %354 = vector.extract_strided_slice %305 {offsets = [2, 0], sizes = [1, 256], strides = [1, 1]} : vector<4x256xf32> to vector<1x256xf32>
    %355 = vector.broadcast %354 : vector<1x256xf32> to vector<64x256xf32>
    %356 = arith.mulf %353, %355 : vector<64x256xf32>
    %357 = arith.addf %351, %356 : vector<64x256xf32>
    %c3_144 = arith.constant 3 : index
    %c0_145 = arith.constant 0 : index
    %c0_146 = arith.constant 0 : index
    %358 = vector.load %arg25[%c3_144, %c0_145, %c0_146] : memref<4x64x256xf32, #tpu.memory_space<vmem>>, vector<1x64x256xf32>
    %359 = vector.shape_cast %358 : vector<1x64x256xf32> to vector<64x256xf32>
    %360 = vector.extract_strided_slice %305 {offsets = [3, 0], sizes = [1, 256], strides = [1, 1]} : vector<4x256xf32> to vector<1x256xf32>
    %361 = vector.broadcast %360 : vector<1x256xf32> to vector<64x256xf32>
    %362 = arith.mulf %359, %361 : vector<64x256xf32>
    %363 = arith.addf %357, %362 : vector<64x256xf32>
    %c0_147 = arith.constant 0 : index
    %c0_148 = arith.constant 0 : index
    %364 = vector.load %arg4[%c0_147, %c0_148] : memref<256x2xf32, #tpu.memory_space<vmem>>, vector<256x2xf32>
    %cst_149 = arith.constant dense<0.000000e+00> : vector<64x2xf32>
    %365 = tpu.matmul %363, %364, %cst_149 {dimension_numbers = #tpu.dot_dimension_numbers<[1], [0], [0], [1], [0, 0, 1, 1], [], []>} : vector<64x256xf32>, vector<256x2xf32>, vector<64x2xf32> -> vector<64x2xf32>
    %c0_150 = arith.constant 0 : index
    %c0_151 = arith.constant 0 : index
    %366 = vector.load %arg26[%c0_150, %c0_151] : memref<64x1xf32, #tpu.memory_space<vmem>>, vector<64x1xf32>
    %367 = vector.broadcast %366 : vector<64x1xf32> to vector<64x2xf32>
    %368 = arith.addf %365, %367 : vector<64x2xf32>
    %369 = math.tanh %368 : vector<64x2xf32>
    %c0_152 = arith.constant 0 : index
    %c0_153 = arith.constant 0 : index
    %370 = vector.load %arg27[%c0_152, %c0_153] : memref<1x64xf32, #tpu.memory_space<vmem>>, vector<1x64xf32>
    %cst_154 = arith.constant dense<0.000000e+00> : vector<1x2xf32>
    %371 = tpu.matmul %370, %369, %cst_154 {dimension_numbers = #tpu.dot_dimension_numbers<[1], [0], [0], [1], [0, 0, 1, 1], [], []>} : vector<1x64xf32>, vector<64x2xf32>, vector<1x2xf32> -> vector<1x2xf32>
    %c0_155 = arith.constant 0 : index
    %c0_156 = arith.constant 0 : index
    %372 = vector.load %arg28[%c0_155, %c0_156] : memref<1x1xf32, #tpu.memory_space<vmem>>, vector<1x1xf32>
    %373 = vector.broadcast %372 : vector<1x1xf32> to vector<1x2xf32>
    %374 = arith.addf %371, %373 : vector<1x2xf32>
    %c0_157 = arith.constant 0 : index
    %c0_158 = arith.constant 0 : index
    %375 = vector.load %arg30[%c0_157, %c0_158] : memref<1x2xf32, #tpu.memory_space<vmem>>, vector<1x2xf32>
    tpu.vector_store %arg30[%c0_157, %c0_158], %374 {strides = array<i32>} : memref<1x2xf32, #tpu.memory_space<vmem>>, vector<1x2xf32>,
    return
  }
}

</mosaic_0001>

<llo_original>
// kernel: tpu_custom_call.1
$region0: #{tpu_custom_call.1}
  #allocation0 [shape = 'u32[]', space=smem, size = 0x4, offset = 0x4, fixed_abs, tag = 'smem constant byte address 0x4 - core index']
  #allocation1 [shape = 'u32[144,128]{1,0:T(1,128)}', space=vmem, size = 0x12000, scoped, tag = 'internal scratch']
  #allocation2 [shape = 'f32[1,1]{1,0:T(1,128)S(1)}', space=vmem, size = 0x200, scoped, tag = 'scoped memory for tpu_custom_call.1']
  %s0 = inlined_call_operand.smem [shape: u32[31], index: -1, kind: input, shape index: {}]
  %s1 = sld [smem:[%s0]]
  %s2 = scalar_lea.smem %s0, 1
  %s3 = sld [smem:[%s2]]
  %s4 = scalar_lea.smem %s0, 2
  %s5 = sld [smem:[%s4]]
  %s6 = scalar_lea.smem %s0, 3
  %s7 = sld [smem:[%s6]]
  %s8 = scalar_lea.smem %s0, 4
  %s9 = sld [smem:[%s8]]
  %s10 = scalar_lea.smem %s0, 5
  %s11 = sld [smem:[%s10]]
  %s12 = scalar_lea.smem %s0, 6
  %s13 = sld [smem:[%s12]]
  %s14 = scalar_lea.smem %s0, 7
  %s15 = sld [smem:[%s14]]
  %s16 = scalar_lea.smem %s0, 8
  %s17 = sld [smem:[%s16]]
  %s18 = scalar_lea.smem %s0, 9
  %s19 = sld [smem:[%s18]]
  %s20 = scalar_lea.smem %s0, 10
  %s21 = sld [smem:[%s20]]
  %s22 = scalar_lea.smem %s0, 11
  %s23 = sld [smem:[%s22]]
  %s24 = scalar_lea.smem %s0, 12
  %s25 = sld [smem:[%s24]]
  %s26 = scalar_lea.smem %s0, 13
  %s27 = sld [smem:[%s26]]
  %s28 = scalar_lea.smem %s0, 14
  %s29 = sld [smem:[%s28]]
  %s30 = scalar_lea.smem %s0, 15
  %s31 = sld [smem:[%s30]]
  %s32 = scalar_lea.smem %s0, 16
  %s33 = sld [smem:[%s32]]
  %s34 = scalar_lea.smem %s0, 17
  %s35 = sld [smem:[%s34]]
  %s36 = scalar_lea.smem %s0, 18
  %s37 = sld [smem:[%s36]]
  %s38 = scalar_lea.smem %s0, 19
  %s39 = sld [smem:[%s38]]
  %s40 = scalar_lea.smem %s0, 20
  %s41 = sld [smem:[%s40]]
  %s42 = scalar_lea.smem %s0, 21
  %s43 = sld [smem:[%s42]]
  %s44 = scalar_lea.smem %s0, 22
  %s45 = sld [smem:[%s44]]
  %s46 = scalar_lea.smem %s0, 23
  %s47 = sld [smem:[%s46]]
  %s48 = scalar_lea.smem %s0, 24
  %s49 = sld [smem:[%s48]]
  %s50 = scalar_lea.smem %s0, 25
  %s51 = sld [smem:[%s50]]
  %s52 = scalar_lea.smem %s0, 26
  %s53 = sld [smem:[%s52]]
  %s54 = scalar_lea.smem %s0, 27
  %s55 = sld [smem:[%s54]]
  %s56 = scalar_lea.smem %s0, 28
  %s57 = sld [smem:[%s56]]
  %s58 = scalar_lea.smem %s0, 29
  %s59 = sld [smem:[%s58]]
  %s60 = scalar_lea.smem %s0, 30
  %s61 = sld [smem:[%s60]]
  %62 = xla_tuple %s59, %s61
  %s63 = sld [smem:[#allocation0]]
  $region134: #{tpu_custom_call.1} parent=0
    _
  %s65 = ssub.s32 1, %s63
  %s66 = scalar_select 0, %s65, %s63
  %v67 = vstv %s57
  %68 = vst [vmem:[#allocation2] sm:$0x1] %v67
  $region1: #{tpu_custom_call.1} parent=0
    #allocation3 [shape = 'u8[512]{0}', space=vmem, size = 0x400, scoped, tag = 'output window, operand 1, single buffered']
    #allocation4 [shape = 's32[1]{0}', space=sflag, size = 0x4, scoped, tag = 'scoped memory for tpu_custom_call.1']
    %69 = vsyncpa [#allocation4], 0
    // Predicated region
    $region2: #{tpu_custom_call.1} parent=1 // pred_check
      _
    $region3: #{tpu_custom_call.1} parent=1 // pred_check_branch
      %71 = sbr.rel (0) target = $region5
    $region4: #{tpu_custom_call.1} parent=1 // pred_region
      _
    $region5: #{tpu_custom_call.1} parent=1 // pred_fallthru
      _
    // Predicated region
    $region6: #{tpu_custom_call.1} parent=1 // pred_check
      _
    $region7: #{tpu_custom_call.1} parent=1 // pred_check_branch
      %73 = sbr.rel (0) target = $region9
    $region8: #{tpu_custom_call.1} parent=1 // pred_region
      _
    $region9: #{tpu_custom_call.1} parent=1 // pred_fallthru
      _
    // Predicated region
    $region10: #{tpu_custom_call.1} parent=1 // pred_check
      _
    $region11: #{tpu_custom_call.1} parent=1 // pred_check_branch
      %75 = sbr.rel (0) target = $region13
    $region12: #{tpu_custom_call.1} parent=1 // pred_region
      _
    $region13: #{tpu_custom_call.1} parent=1 // pred_fallthru
      _
    // Predicated region
    $region14: #{tpu_custom_call.1} parent=1 // pred_check
      _
    $region15: #{tpu_custom_call.1} parent=1 // pred_check_branch
      %77 = sbr.rel (0) target = $region17
    $region16: #{tpu_custom_call.1} parent=1 // pred_region
      _
    $region17: #{tpu_custom_call.1} parent=1 // pred_fallthru
      _
    // Predicated region
    $region18: #{tpu_custom_call.1} parent=1 // pred_check
      _
    $region19: #{tpu_custom_call.1} parent=1 // pred_check_branch
      %79 = sbr.rel (0) target = $region21
    $region20: #{tpu_custom_call.1} parent=1 // pred_region
      _
    $region21: #{tpu_custom_call.1} parent=1 // pred_fallthru
      _
    // Predicated region
    $region22: #{tpu_custom_call.1} parent=1 // pred_check
      _
    $region23: #{tpu_custom_call.1} parent=1 // pred_check_branch
      %81 = sbr.rel (0) target = $region25
    $region24: #{tpu_custom_call.1} parent=1 // pred_region
      _
    $region25: #{tpu_custom_call.1} parent=1 // pred_fallthru
      _
    // Predicated region
    $region26: #{tpu_custom_call.1} parent=1 // pred_check
      _
    $region27: #{tpu_custom_call.1} parent=1 // pred_check_branch
      %83 = sbr.rel (0) target = $region29
    $region28: #{tpu_custom_call.1} parent=1 // pred_region
      _
    $region29: #{tpu_custom_call.1} parent=1 // pred_fallthru
      _
    // Predicated region
    $region30: #{tpu_custom_call.1} parent=1 // pred_check
      _
    $region31: #{tpu_custom_call.1} parent=1 // pred_check_branch
      %85 = sbr.rel (0) target = $region33
    $region32: #{tpu_custom_call.1} parent=1 // pred_region
      _
    $region33: #{tpu_custom_call.1} parent=1 // pred_fallthru
      _
    // Predicated region
    $region34: #{tpu_custom_call.1} parent=1 // pred_check
      _
    $region35: #{tpu_custom_call.1} parent=1 // pred_check_branch
      %87 = sbr.rel (0) target = $region37
    $region36: #{tpu_custom_call.1} parent=1 // pred_region
      _
    $region37: #{tpu_custom_call.1} parent=1 // pred_fallthru
      _
    // Predicated region
    $region38: #{tpu_custom_call.1} parent=1 // pred_check
      _
    $region39: #{tpu_custom_call.1} parent=1 // pred_check_branch
      %89 = sbr.rel (0) target = $region41
    $region40: #{tpu_custom_call.1} parent=1 // pred_region
      _
    $region41: #{tpu_custom_call.1} parent=1 // pred_fallthru
      _
    // Predicated region
    $region42: #{tpu_custom_call.1} parent=1 // pred_check
      _
    $region43: #{tpu_custom_call.1} parent=1 // pred_check_branch
      %91 = sbr.rel (0) target = $region45
    $region44: #{tpu_custom_call.1} parent=1 // pred_region
      _
    $region45: #{tpu_custom_call.1} parent=1 // pred_fallthru
      _
    // Predicated region
    $region46: #{tpu_custom_call.1} parent=1 // pred_check
      _
    $region47: #{tpu_custom_call.1} parent=1 // pred_check_branch
      %93 = sbr.rel (0) target = $region49
    $region48: #{tpu_custom_call.1} parent=1 // pred_region
      _
    $region49: #{tpu_custom_call.1} parent=1 // pred_fallthru
      _
    // Predicated region
    $region50: #{tpu_custom_call.1} parent=1 // pred_check
      _
    $region51: #{tpu_custom_call.1} parent=1 // pred_check_branch
      %95 = sbr.rel (0) target = $region53
    $region52: #{tpu_custom_call.1} parent=1 // pred_region
      _
    $region53: #{tpu_custom_call.1} parent=1 // pred_fallthru
      _
    // Predicated region
    $region54: #{tpu_custom_call.1} parent=1 // pred_check
      _
    $region55: #{tpu_custom_call.1} parent=1 // pred_check_branch
      %97 = sbr.rel (0) target = $region57
    $region56: #{tpu_custom_call.1} parent=1 // pred_region
      _
    $region57: #{tpu_custom_call.1} parent=1 // pred_fallthru
      _
    // Predicated region
    $region58: #{tpu_custom_call.1} parent=1 // pred_check
      _
    $region59: #{tpu_custom_call.1} parent=1 // pred_check_branch
      %99 = sbr.rel (0) target = $region61
    $region60: #{tpu_custom_call.1} parent=1 // pred_region
      _
    $region61: #{tpu_custom_call.1} parent=1 // pred_fallthru
      _
    // Predicated region
    $region62: #{tpu_custom_call.1} parent=1 // pred_check
      _
    $region63: #{tpu_custom_call.1} parent=1 // pred_check_branch
      %101 = sbr.rel (0) target = $region65
    $region64: #{tpu_custom_call.1} parent=1 // pred_region
      _
    $region65: #{tpu_custom_call.1} parent=1 // pred_fallthru
      _
    // Predicated region
    $region66: #{tpu_custom_call.1} parent=1 // pred_check
      _
    $region67: #{tpu_custom_call.1} parent=1 // pred_check_branch
      %103 = sbr.rel (0) target = $region69
    $region68: #{tpu_custom_call.1} parent=1 // pred_region
      _
    $region69: #{tpu_custom_call.1} parent=1 // pred_fallthru
      _
    // Predicated region
    $region70: #{tpu_custom_call.1} parent=1 // pred_check
      _
    $region71: #{tpu_custom_call.1} parent=1 // pred_check_branch
      %105 = sbr.rel (0) target = $region73
    $region72: #{tpu_custom_call.1} parent=1 // pred_region
      _
    $region73: #{tpu_custom_call.1} parent=1 // pred_fallthru
      _
    // Predicated region
    $region74: #{tpu_custom_call.1} parent=1 // pred_check
      _
    $region75: #{tpu_custom_call.1} parent=1 // pred_check_branch
      %107 = sbr.rel (0) target = $region77
    $region76: #{tpu_custom_call.1} parent=1 // pred_region
      _
    $region77: #{tpu_custom_call.1} parent=1 // pred_fallthru
      _
    // Predicated region
    $region78: #{tpu_custom_call.1} parent=1 // pred_check
      _
    $region79: #{tpu_custom_call.1} parent=1 // pred_check_branch
      %109 = sbr.rel (0) target = $region81
    $region80: #{tpu_custom_call.1} parent=1 // pred_region
      _
    $region81: #{tpu_custom_call.1} parent=1 // pred_fallthru
      _
    // Predicated region
    $region82: #{tpu_custom_call.1} parent=1 // pred_check
      _
    $region83: #{tpu_custom_call.1} parent=1 // pred_check_branch
      %111 = sbr.rel (0) target = $region85
    $region84: #{tpu_custom_call.1} parent=1 // pred_region
      _
    $region85: #{tpu_custom_call.1} parent=1 // pred_fallthru
      _
    // Predicated region
    $region86: #{tpu_custom_call.1} parent=1 // pred_check
      _
    $region87: #{tpu_custom_call.1} parent=1 // pred_check_branch
      %113 = sbr.rel (0) target = $region89
    $region88: #{tpu_custom_call.1} parent=1 // pred_region
      _
    $region89: #{tpu_custom_call.1} parent=1 // pred_fallthru
      _
    // Predicated region
    $region90: #{tpu_custom_call.1} parent=1 // pred_check
      _
    $region91: #{tpu_custom_call.1} parent=1 // pred_check_branch
      %115 = sbr.rel (0) target = $region93
    $region92: #{tpu_custom_call.1} parent=1 // pred_region
      _
    $region93: #{tpu_custom_call.1} parent=1 // pred_fallthru
      _
    // Predicated region
    $region94: #{tpu_custom_call.1} parent=1 // pred_check
      _
    $region95: #{tpu_custom_call.1} parent=1 // pred_check_branch
      %117 = sbr.rel (0) target = $region97
    $region96: #{tpu_custom_call.1} parent=1 // pred_region
      _
    $region97: #{tpu_custom_call.1} parent=1 // pred_fallthru
      _
    // Predicated region
    $region98: #{tpu_custom_call.1} parent=1 // pred_check
      _
    $region99: #{tpu_custom_call.1} parent=1 // pred_check_branch
      %119 = sbr.rel (0) target = $region101
    $region100: #{tpu_custom_call.1} parent=1 // pred_region
      _
    $region101: #{tpu_custom_call.1} parent=1 // pred_fallthru
      _
    // Predicated region
    $region102: #{tpu_custom_call.1} parent=1 // pred_check
      _
    $region103: #{tpu_custom_call.1} parent=1 // pred_check_branch
      %121 = sbr.rel (0) target = $region105
    $region104: #{tpu_custom_call.1} parent=1 // pred_region
      _
    $region105: #{tpu_custom_call.1} parent=1 // pred_fallthru
      _
    // Predicated region
    $region106: #{tpu_custom_call.1} parent=1 // pred_check
      _
    $region107: #{tpu_custom_call.1} parent=1 // pred_check_branch
      %123 = sbr.rel (0) target = $region109
    $region108: #{tpu_custom_call.1} parent=1 // pred_region
      _
    $region109: #{tpu_custom_call.1} parent=1 // pred_fallthru
      _
    // Predicated region
    $region110: #{tpu_custom_call.1} parent=1 // pred_check
      _
    $region111: #{tpu_custom_call.1} parent=1 // pred_check_branch
      %125 = sbr.rel (0) target = $region113
    $region112: #{tpu_custom_call.1} parent=1 // pred_region
      _
    $region113: #{tpu_custom_call.1} parent=1 // pred_fallthru
      _
    // Predicated region
    $region114: #{tpu_custom_call.1} parent=1 // pred_check
      _
    $region115: #{tpu_custom_call.1} parent=1 // pred_check_branch
      %127 = sbr.rel (0) target = $region117
    $region116: #{tpu_custom_call.1} parent=1 // pred_region
      _
    $region117: #{tpu_custom_call.1} parent=1 // pred_fallthru
      _
    %v128 = vld [vmem:[%s5] sm:$0x3]
    %s129 = scalar_lea.vmem %s5, 2
    %v130 = vld [vmem:[%s129] sm:$0x3]
    %s131 = scalar_lea.vmem %s5, 4
    %v132 = vld [vmem:[%s131] sm:$0x3]
    %s133 = scalar_lea.vmem %s5, 6
    %v134 = vld [vmem:[%s133] sm:$0x3]
    %s135 = scalar_lea.vmem %s5, 8
    %v136 = vld [vmem:[%s135] sm:$0x3]
    %s137 = scalar_lea.vmem %s5, 10
    %v138 = vld [vmem:[%s137] sm:$0x3]
    %s139 = scalar_lea.vmem %s5, 12
    %v140 = vld [vmem:[%s139] sm:$0x3]
    %s141 = scalar_lea.vmem %s5, 14
    %v142 = vld [vmem:[%s141] sm:$0x3]
    %s143 = scalar_lea.vmem %s5, 16
    %v144 = vld [vmem:[%s143] sm:$0x3]
    %v145 = vld [vmem:[%s1] sm:$0x77]
    %v146 = vld [vmem:[%s15] sm:$0xff]
    %v147 = vld [vmem:[%s15 + $0x8] sm:$0xff]
    %v148 = vld [vmem:[%s15 + $0x10] sm:$0xff]
    %v149 = vld [vmem:[%s15 + $0x18] sm:$0xff]
    %v150 = vld [vmem:[%s15 + $0x20] sm:$0xff]
    %v151 = vld [vmem:[%s15 + $0x28] sm:$0xff]
    %v152 = vld [vmem:[%s15 + $0x30] sm:$0xff]
    %v153 = vld [vmem:[%s15 + $0x38] sm:$0xff]
    %v154 = vld [vmem:[%s15 + $0x40] sm:$0xff]
    %v155 = vld [vmem:[%s15 + $0x48] sm:$0xff]
    %v156 = vld [vmem:[%s15 + $0x50] sm:$0xff]
    %v157 = vld [vmem:[%s15 + $0x58] sm:$0xff]
    %v158 = vld [vmem:[%s15 + $0x60] sm:$0xff]
    %v159 = vld [vmem:[%s15 + $0x68] sm:$0xff]
    %v160 = vld [vmem:[%s15 + $0x70] sm:$0xff]
    %v161 = vld [vmem:[%s15 + $0x78] sm:$0xff]
    %v162 = vld [vmem:[%s15 + $0x80] sm:$0xff]
    %v163 = vld [vmem:[%s15 + $0x88] sm:$0xff]
    %v165 = vcombine.high %v145, %v145
    %vm166 = vcmask 23552
    %v168 = vsel %vm166, %v146, 0
    %v171 = vsel %vm166, %v147, 0
    %v174 = vsel %vm166, %v148, 0
    %v177 = vsel %vm166, %v149, 0
    %v180 = vsel %vm166, %v150, 0
    %v183 = vsel %vm166, %v151, 0
    %v186 = vsel %vm166, %v152, 0
    %v189 = vsel %vm166, %v153, 0
    %v192 = vsel %vm166, %v154, 0
    %v195 = vsel %vm166, %v155, 0
    %v198 = vsel %vm166, %v156, 0
    %v201 = vsel %vm166, %v157, 0
    %v204 = vsel %vm166, %v158, 0
    %v207 = vsel %vm166, %v159, 0
    %v210 = vsel %vm166, %v160, 0
    %v213 = vsel %vm166, %v161, 0
    %v216 = vsel %vm166, %v162, 0
    %v219 = vsel %vm166, %v163, 0
    %vm221 = vcmask 1042432
    %v222 = vsel %vm221, %v145, 0
    %v224 = vsel %vm221, %v165, 0
    %226 = vmatprep.subr.mxu0 0.0
    %227 = vmatpush1.msra.mxu0 0.0
    %228 = vmatprep.subr.mxu0 0.0
    %229 = vmatpush1.msra.mxu0 0.0
    %230 = vmatprep.subr.mxu0 0.0
    %231 = vmatpush1.msra.mxu0 0.0
    %232 = vmatprep.subr.mxu0 0.0
    %233 = vmatpush1.msra.mxu0 0.0
    %234 = vmatprep.subr.mxu0 0.0
    %235 = vmatpush1.msra.mxu0 0.0
    %236 = vmatprep.subr.mxu0 0.0
    %237 = vmatpush1.msra.mxu0 0.0
    %238 = vmatprep.subr.mxu0 0.0
    %239 = vmatpush1.msra.mxu0 0.0
    %240 = vmatprep.subr.mxu0 0.0
    %241 = vmatpush1.msra.mxu0 0.0
    %242 = vmatprep.subr.mxu0 0.0
    %243 = vmatpush1.msra.mxu0 0.0
    %244 = vmatprep.subr.mxu0 0.0
    %245 = vmatpush1.msra.mxu0 0.0
    %246 = vmatprep.subr.mxu0 0.0
    %247 = vmatpush1.msra.mxu0 0.0
    %248 = vmatprep.subr.mxu0 0.0
    %249 = vmatpush1.msra.mxu0 0.0
    %250 = vmatprep.subr.mxu0 0.0
    %251 = vmatpush1.msra.mxu0 0.0
    %252 = vmatprep.subr.mxu0 0.0
    %253 = vmatpush1.msra.mxu0 0.0
    %254 = vmatprep.subr.mxu0 0.0
    %255 = vmatpush1.msra.mxu0 0.0
    %256 = vmatprep.subr.mxu0 %v224
    %257 = vmatpush1.msra.mxu0 %v222
    %258 = vmatprep.subr.mxu0 0.0
    %259 = vmatpush2.msra.mxu0 0.0
    %260 = vmatprep.subr.mxu0 0.0
    %261 = vmatpush2.msra.mxu0 0.0
    %262 = vmatprep.subr.mxu0 0.0
    %263 = vmatpush2.msra.mxu0 0.0
    %264 = vmatprep.subr.mxu0 0.0
    %265 = vmatpush2.msra.mxu0 0.0
    %266 = vmatprep.subr.mxu0 0.0
    %267 = vmatpush2.msra.mxu0 0.0
    %268 = vmatprep.subr.mxu0 0.0
    %269 = vmatpush2.msra.mxu0 0.0
    %270 = vmatprep.subr.mxu0 0.0
    %271 = vmatpush2.msra.mxu0 0.0
    %272 = vmatprep.subr.mxu0 0.0
    %273 = vmatpush2.msra.mxu0 0.0
    %274 = vmatprep.subr.mxu0 0.0
    %275 = vmatpush2.msra.mxu0 0.0
    %276 = vmatprep.subr.mxu0 0.0
    %277 = vmatpush2.msra.mxu0 0.0
    %278 = vmatprep.subr.mxu0 0.0
    %279 = vmatpush2.msra.mxu0 0.0
    %280 = vmatprep.subr.mxu0 0.0
    %281 = vmatpush2.msra.mxu0 0.0
    %282 = vmatprep.subr.mxu0 0.0
    %283 = vmatpush2.msra.mxu0 0.0
    %284 = vmatprep.subr.mxu0 0.0
    %285 = vmatpush2.msra.mxu0 0.0
    %286 = vmatprep.subr.mxu0 0.0
    %287 = vmatpush2.msra.mxu0 0.0
    %288 = vmatprep.subr.mxu0 0.0
    %289 = vmatpush2.msra.mxu0 0.0
    %290 = vmatprep.mubr.f32.mxu0 0.0
    %291 = vmatmul.mubr.f32.gmra.mxu0 %v168
    %v292 = vpop.f32.mrf.mxu0
    %v293 = vadd.f32 0.0, %v292
    %v294 = vpop.f32.mrf.mxu0
    %v295 = vadd.f32 0.0, %v294
    %296 = vmatprep.mubr.f32.mxu0 0.0
    %297 = vmatmul.mubr.f32.gmra.mxu0 %v171
    %v298 = vpop.f32.mrf.mxu0
    %v299 = vadd.f32 0.0, %v298
    %v300 = vpop.f32.mrf.mxu0
    %v301 = vadd.f32 0.0, %v300
    %302 = vmatprep.mubr.f32.mxu0 0.0
    %303 = vmatmul.mubr.f32.gmra.mxu0 %v174
    %v304 = vpop.f32.mrf.mxu0
    %v305 = vadd.f32 0.0, %v304
    %v306 = vpop.f32.mrf.mxu0
    %v307 = vadd.f32 0.0, %v306
    %308 = vmatprep.mubr.f32.mxu0 0.0
    %309 = vmatmul.mubr.f32.gmra.mxu0 %v177
    %v310 = vpop.f32.mrf.mxu0
    %v311 = vadd.f32 0.0, %v310
    %v312 = vpop.f32.mrf.mxu0
    %v313 = vadd.f32 0.0, %v312
    %314 = vmatprep.mubr.f32.mxu0 0.0
    %315 = vmatmul.mubr.f32.gmra.mxu0 %v180
    %v316 = vpop.f32.mrf.mxu0
    %v317 = vadd.f32 0.0, %v316
    %v318 = vpop.f32.mrf.mxu0
    %v319 = vadd.f32 0.0, %v318
    %320 = vmatprep.mubr.f32.mxu0 0.0
    %321 = vmatmul.mubr.f32.gmra.mxu0 %v183
    %v322 = vpop.f32.mrf.mxu0
    %v323 = vadd.f32 0.0, %v322
    %v324 = vpop.f32.mrf.mxu0
    %v325 = vadd.f32 0.0, %v324
    %326 = vmatprep.mubr.f32.mxu0 0.0
    %327 = vmatmul.mubr.f32.gmra.mxu0 %v186
    %v328 = vpop.f32.mrf.mxu0
    %v329 = vadd.f32 0.0, %v328
    %v330 = vpop.f32.mrf.mxu0
    %v331 = vadd.f32 0.0, %v330
    %332 = vmatprep.mubr.f32.mxu0 0.0
    %333 = vmatmul.mubr.f32.gmra.mxu0 %v189
    %v334 = vpop.f32.mrf.mxu0
    %v335 = vadd.f32 0.0, %v334
    %v336 = vpop.f32.mrf.mxu0
    %v337 = vadd.f32 0.0, %v336
    %338 = vmatprep.mubr.f32.mxu0 0.0
    %339 = vmatmul.mubr.f32.gmra.mxu0 %v192
    %v340 = vpop.f32.mrf.mxu0
    %v341 = vadd.f32 0.0, %v340
    %v342 = vpop.f32.mrf.mxu0
    %v343 = vadd.f32 0.0, %v342
    %344 = vmatprep.mubr.f32.mxu0 0.0
    %345 = vmatmul.mubr.f32.gmra.mxu0 %v195
    %v346 = vpop.f32.mrf.mxu0
    %v347 = vadd.f32 0.0, %v346
    %v348 = vpop.f32.mrf.mxu0
    %v349 = vadd.f32 0.0, %v348
    %350 = vmatprep.mubr.f32.mxu0 0.0
    %351 = vmatmul.mubr.f32.gmra.mxu0 %v198
    %v352 = vpop.f32.mrf.mxu0
    %v353 = vadd.f32 0.0, %v352
    %v354 = vpop.f32.mrf.mxu0
    %v355 = vadd.f32 0.0, %v354
    %356 = vmatprep.mubr.f32.mxu0 0.0
    %357 = vmatmul.mubr.f32.gmra.mxu0 %v201
    %v358 = vpop.f32.mrf.mxu0
    %v359 = vadd.f32 0.0, %v358
    %v360 = vpop.f32.mrf.mxu0
    %v361 = vadd.f32 0.0, %v360
    %362 = vmatprep.mubr.f32.mxu0 0.0
    %363 = vmatmul.mubr.f32.gmra.mxu0 %v204
    %v364 = vpop.f32.mrf.mxu0
    %v365 = vadd.f32 0.0, %v364
    %v366 = vpop.f32.mrf.mxu0
    %v367 = vadd.f32 0.0, %v366
    %368 = vmatprep.mubr.f32.mxu0 0.0
    %369 = vmatmul.mubr.f32.gmra.mxu0 %v207
    %v370 = vpop.f32.mrf.mxu0
    %v371 = vadd.f32 0.0, %v370
    %v372 = vpop.f32.mrf.mxu0
    %v373 = vadd.f32 0.0, %v372
    %374 = vmatprep.mubr.f32.mxu0 0.0
    %375 = vmatmul.mubr.f32.gmra.mxu0 %v210
    %v376 = vpop.f32.mrf.mxu0
    %v377 = vadd.f32 0.0, %v376
    %v378 = vpop.f32.mrf.mxu0
    %v379 = vadd.f32 0.0, %v378
    %380 = vmatprep.mubr.f32.mxu0 0.0
    %381 = vmatmul.mubr.f32.gmra.mxu0 %v213
    %v382 = vpop.f32.mrf.mxu0
    %v383 = vadd.f32 0.0, %v382
    %v384 = vpop.f32.mrf.mxu0
    %v385 = vadd.f32 0.0, %v384
    %386 = vmatprep.mubr.f32.mxu0 0.0
    %387 = vmatmul.mubr.f32.gmra.mxu0 %v216
    %v388 = vpop.f32.mrf.mxu0
    %v389 = vadd.f32 0.0, %v388
    %v390 = vpop.f32.mrf.mxu0
    %v391 = vadd.f32 0.0, %v390
    %392 = vmatprep.mubr.f32.mxu0 0.0
    %393 = vmatmul.mubr.f32.gmra.mxu0 %v219
    %v394 = vpop.f32.mrf.mxu0
    %v395 = vadd.f32 0.0, %v394
    %v396 = vpop.f32.mrf.mxu0
    %v397 = vadd.f32 0.0, %v396
    %398 = vdwg.mxu0
    %v399 = vld [vmem:[%s17] sm:$0xff]
    %v400 = vld [vmem:[%s17 + $0x8] sm:$0xff]
    %401 = vrot.lane.b32.xlu0 %v293, 11
    %v402 = vpop.permute.xlu0 %401
    %403 = vrot.lane.b32.xlu0 %v299, 11
    %v404 = vpop.permute.xlu0 %403
    %405 = vrot.lane.b32.xlu0 %v295, 11
    %v406 = vpop.permute.xlu0 %405
    %407 = vrot.lane.b32.xlu0 %v301, 11
    %v408 = vpop.permute.xlu0 %407
    %v409 = vlaneseq
    %v410 = vand.u32 %v409, 127
    %vm411 = vcmp.lt.s32.totalorder %v410, 11
    %v412 = vsel %vm411, %v402, %v406
    %v413 = vsel %vm411, %v404, %v408
    %v414 = vsel %vm411, %v406, %v402
    %v415 = vsel %vm411, %v408, %v404
    %v417 = vlaneseq
    %v418 = vshrl.u32 %v417, 7
    %v419 = vsub.s32 0, %v418
    %v420 = vrot.slane %v128, %v419
    %v421 = vlaneseq
    %v422 = vshrl.u32 %v421, 7
    %v423 = vsub.s32 1, %v422
    %v424 = vrot.slane %v128, %v423
    %v427 = vmul.f32 %v414, %v420
    %v428 = vmul.f32 %v412, %v424
    %v429 = vmul.f32 %v415, %v420
    %v430 = vmul.f32 %v413, %v424
    %432 = vset.pattern.permute.xlu0 0
    %433 = vperm.xlu0 %432, %v399
    %v434 = vpop.permute.xlu0 %433
    %437 = vset.pattern.permute.xlu0 0
    %438 = vperm.xlu0 %437, %v400
    %v439 = vpop.permute.xlu0 %438
    %v441 = vadd.f32 %v434, %v427
    %v442 = vadd.f32 %v434, %v428
    %v443 = vadd.f32 %v439, %v429
    %v444 = vadd.f32 %v439, %v430
    %445 = vrot.lane.b32.xlu0 %v305, 10
    %v446 = vpop.permute.xlu0 %445
    %447 = vrot.lane.b32.xlu0 %v311, 10
    %v448 = vpop.permute.xlu0 %447
    %449 = vrot.lane.b32.xlu0 %v307, 10
    %v450 = vpop.permute.xlu0 %449
    %451 = vrot.lane.b32.xlu0 %v313, 10
    %v452 = vpop.permute.xlu0 %451
    %vm453 = vcmp.lt.s32.totalorder %v410, 10
    %v454 = vsel %vm453, %v446, %v450
    %v455 = vsel %vm453, %v448, %v452
    %v456 = vsel %vm453, %v450, %v446
    %v457 = vsel %vm453, %v452, %v448
    %v459 = vlaneseq
    %v460 = vshrl.u32 %v459, 7
    %v461 = vsub.s32 0, %v460
    %v462 = vrot.slane %v130, %v461
    %v463 = vlaneseq
    %v464 = vshrl.u32 %v463, 7
    %v465 = vsub.s32 1, %v464
    %v466 = vrot.slane %v130, %v465
    %v469 = vmul.f32 %v456, %v462
    %v470 = vmul.f32 %v454, %v466
    %v471 = vmul.f32 %v457, %v462
    %v472 = vmul.f32 %v455, %v466
    %v473 = vadd.f32 %v441, %v469
    %v474 = vadd.f32 %v442, %v470
    %v475 = vadd.f32 %v443, %v471
    %v476 = vadd.f32 %v444, %v472
    %477 = vrot.lane.b32.xlu0 %v317, 9
    %v478 = vpop.permute.xlu0 %477
    %479 = vrot.lane.b32.xlu0 %v323, 9
    %v480 = vpop.permute.xlu0 %479
    %481 = vrot.lane.b32.xlu0 %v319, 9
    %v482 = vpop.permute.xlu0 %481
    %483 = vrot.lane.b32.xlu0 %v325, 9
    %v484 = vpop.permute.xlu0 %483
    %vm485 = vcmp.lt.s32.totalorder %v410, 9
    %v486 = vsel %vm485, %v478, %v482
    %v487 = vsel %vm485, %v480, %v484
    %v488 = vsel %vm485, %v482, %v478
    %v489 = vsel %vm485, %v484, %v480
    %v491 = vlaneseq
    %v492 = vshrl.u32 %v491, 7
    %v493 = vsub.s32 0, %v492
    %v494 = vrot.slane %v132, %v493
    %v495 = vlaneseq
    %v496 = vshrl.u32 %v495, 7
    %v497 = vsub.s32 1, %v496
    %v498 = vrot.slane %v132, %v497
    %v501 = vmul.f32 %v488, %v494
    %v502 = vmul.f32 %v486, %v498
    %v503 = vmul.f32 %v489, %v494
    %v504 = vmul.f32 %v487, %v498
    %v505 = vadd.f32 %v473, %v501
    %v506 = vadd.f32 %v474, %v502
    %v507 = vadd.f32 %v475, %v503
    %v508 = vadd.f32 %v476, %v504
    %509 = vrot.lane.b32.xlu0 %v329, 1
    %v510 = vpop.permute.xlu0 %509
    %511 = vrot.lane.b32.xlu0 %v335, 1
    %v512 = vpop.permute.xlu0 %511
    %513 = vrot.lane.b32.xlu0 %v331, 1
    %v514 = vpop.permute.xlu0 %513
    %515 = vrot.lane.b32.xlu0 %v337, 1
    %v516 = vpop.permute.xlu0 %515
    %vm517 = vcmp.lt.s32.totalorder %v410, 1
    %v518 = vsel %vm517, %v510, %v514
    %v519 = vsel %vm517, %v512, %v516
    %v520 = vsel %vm517, %v514, %v510
    %v521 = vsel %vm517, %v516, %v512
    %v523 = vlaneseq
    %v524 = vshrl.u32 %v523, 7
    %v525 = vsub.s32 0, %v524
    %v526 = vrot.slane %v134, %v525
    %v527 = vlaneseq
    %v528 = vshrl.u32 %v527, 7
    %v529 = vsub.s32 1, %v528
    %v530 = vrot.slane %v134, %v529
    %v533 = vmul.f32 %v520, %v526
    %v534 = vmul.f32 %v518, %v530
    %v535 = vmul.f32 %v521, %v526
    %v536 = vmul.f32 %v519, %v530
    %v537 = vadd.f32 %v505, %v533
    %v538 = vadd.f32 %v506, %v534
    %v539 = vadd.f32 %v507, %v535
    %v540 = vadd.f32 %v508, %v536
    %v542 = vlaneseq
    %v543 = vshrl.u32 %v542, 7
    %v544 = vsub.s32 0, %v543
    %v545 = vrot.slane %v136, %v544
    %v546 = vlaneseq
    %v547 = vshrl.u32 %v546, 7
    %v548 = vsub.s32 1, %v547
    %v549 = vrot.slane %v136, %v548
    %v552 = vmul.f32 %v341, %v545
    %v553 = vmul.f32 %v343, %v549
    %v554 = vmul.f32 %v347, %v545
    %v555 = vmul.f32 %v349, %v549
    %v556 = vadd.f32 %v537, %v552
    %v557 = vadd.f32 %v538, %v553
    %v558 = vadd.f32 %v539, %v554
    %v559 = vadd.f32 %v540, %v555
    %560 = vrot.lane.b32.xlu0 %v353, 127
    %v561 = vpop.permute.xlu0 %560
    %562 = vrot.lane.b32.xlu0 %v359, 127
    %v563 = vpop.permute.xlu0 %562
    %564 = vrot.lane.b32.xlu0 %v355, 127
    %v565 = vpop.permute.xlu0 %564
    %566 = vrot.lane.b32.xlu0 %v361, 127
    %v567 = vpop.permute.xlu0 %566
    %vm568 = vcmp.lt.s32.totalorder %v410, 127
    %v569 = vsel %vm568, %v561, %v565
    %v570 = vsel %vm568, %v563, %v567
    %v571 = vsel %vm568, %v565, %v561
    %v572 = vsel %vm568, %v567, %v563
    %v574 = vlaneseq
    %v575 = vshrl.u32 %v574, 7
    %v576 = vsub.s32 0, %v575
    %v577 = vrot.slane %v138, %v576
    %v578 = vlaneseq
    %v579 = vshrl.u32 %v578, 7
    %v580 = vsub.s32 1, %v579
    %v581 = vrot.slane %v138, %v580
    %v584 = vmul.f32 %v569, %v577
    %v585 = vmul.f32 %v571, %v581
    %v586 = vmul.f32 %v570, %v577
    %v587 = vmul.f32 %v572, %v581
    %v588 = vadd.f32 %v556, %v584
    %v589 = vadd.f32 %v557, %v585
    %v590 = vadd.f32 %v558, %v586
    %v591 = vadd.f32 %v559, %v587
    %592 = vrot.lane.b32.xlu0 %v365, 119
    %v593 = vpop.permute.xlu0 %592
    %594 = vrot.lane.b32.xlu0 %v371, 119
    %v595 = vpop.permute.xlu0 %594
    %596 = vrot.lane.b32.xlu0 %v367, 119
    %v597 = vpop.permute.xlu0 %596
    %598 = vrot.lane.b32.xlu0 %v373, 119
    %v599 = vpop.permute.xlu0 %598
    %vm600 = vcmp.lt.s32.totalorder %v410, 119
    %v601 = vsel %vm600, %v593, %v597
    %v602 = vsel %vm600, %v595, %v599
    %v603 = vsel %vm600, %v597, %v593
    %v604 = vsel %vm600, %v599, %v595
    %v606 = vlaneseq
    %v607 = vshrl.u32 %v606, 7
    %v608 = vsub.s32 0, %v607
    %v609 = vrot.slane %v140, %v608
    %v610 = vlaneseq
    %v611 = vshrl.u32 %v610, 7
    %v612 = vsub.s32 1, %v611
    %v613 = vrot.slane %v140, %v612
    %v616 = vmul.f32 %v601, %v609
    %v617 = vmul.f32 %v603, %v613
    %v618 = vmul.f32 %v602, %v609
    %v619 = vmul.f32 %v604, %v613
    %v620 = vadd.f32 %v588, %v616
    %v621 = vadd.f32 %v589, %v617
    %v622 = vadd.f32 %v590, %v618
    %v623 = vadd.f32 %v591, %v619
    %624 = vrot.lane.b32.xlu0 %v377, 118
    %v625 = vpop.permute.xlu0 %624
    %626 = vrot.lane.b32.xlu0 %v383, 118
    %v627 = vpop.permute.xlu0 %626
    %628 = vrot.lane.b32.xlu0 %v379, 118
    %v629 = vpop.permute.xlu0 %628
    %630 = vrot.lane.b32.xlu0 %v385, 118
    %v631 = vpop.permute.xlu0 %630
    %vm632 = vcmp.lt.s32.totalorder %v410, 118
    %v633 = vsel %vm632, %v625, %v629
    %v634 = vsel %vm632, %v627, %v631
    %v635 = vsel %vm632, %v629, %v625
    %v636 = vsel %vm632, %v631, %v627
    %v638 = vlaneseq
    %v639 = vshrl.u32 %v638, 7
    %v640 = vsub.s32 0, %v639
    %v641 = vrot.slane %v142, %v640
    %v642 = vlaneseq
    %v643 = vshrl.u32 %v642, 7
    %v644 = vsub.s32 1, %v643
    %v645 = vrot.slane %v142, %v644
    %v648 = vmul.f32 %v633, %v641
    %v649 = vmul.f32 %v635, %v645
    %v650 = vmul.f32 %v634, %v641
    %v651 = vmul.f32 %v636, %v645
    %v652 = vadd.f32 %v620, %v648
    %v653 = vadd.f32 %v621, %v649
    %v654 = vadd.f32 %v622, %v650
    %v655 = vadd.f32 %v623, %v651
    %656 = vrot.lane.b32.xlu0 %v389, 117
    %v657 = vpop.permute.xlu0 %656
    %658 = vrot.lane.b32.xlu0 %v395, 117
    %v659 = vpop.permute.xlu0 %658
    %660 = vrot.lane.b32.xlu0 %v391, 117
    %v661 = vpop.permute.xlu0 %660
    %662 = vrot.lane.b32.xlu0 %v397, 117
    %v663 = vpop.permute.xlu0 %662
    %vm664 = vcmp.lt.s32.totalorder %v410, 117
    %v665 = vsel %vm664, %v657, %v661
    %v666 = vsel %vm664, %v659, %v663
    %v667 = vsel %vm664, %v661, %v657
    %v668 = vsel %vm664, %v663, %v659
    %v670 = vlaneseq
    %v671 = vshrl.u32 %v670, 7
    %v672 = vsub.s32 0, %v671
    %v673 = vrot.slane %v144, %v672
    %v674 = vlaneseq
    %v675 = vshrl.u32 %v674, 7
    %v676 = vsub.s32 1, %v675
    %v677 = vrot.slane %v144, %v676
    %v680 = vmul.f32 %v665, %v673
    %v681 = vmul.f32 %v667, %v677
    %v682 = vmul.f32 %v666, %v673
    %v683 = vmul.f32 %v668, %v677
    %v684 = vadd.f32 %v652, %v680
    %v685 = vadd.f32 %v653, %v681
    %v686 = vadd.f32 %v654, %v682
    %v687 = vadd.f32 %v655, %v683
    %v688 = vtanh.pop %v684
    %v689 = vtanh.pop %v685
    %v690 = vtanh.pop %v686
    %v691 = vtanh.pop %v687
    %v692 = vld [vmem:[%s19] sm:$0xff]
    %v693 = vld [vmem:[%s19 + $0x8] sm:$0xff]
    %v694 = vld [vmem:[%s19 + $0x10] sm:$0xff]
    %v695 = vld [vmem:[%s19 + $0x18] sm:$0xff]
    %v696 = vld [vmem:[%s19 + $0x20] sm:$0xff]
    %v697 = vld [vmem:[%s19 + $0x28] sm:$0xff]
    %v698 = vld [vmem:[%s19 + $0x30] sm:$0xff]
    %v699 = vld [vmem:[%s19 + $0x38] sm:$0xff]
    %v700 = vld [vmem:[%s19 + $0x40] sm:$0xff]
    %v701 = vld [vmem:[%s19 + $0x48] sm:$0xff]
    %v702 = vld [vmem:[%s19 + $0x50] sm:$0xff]
    %v703 = vld [vmem:[%s19 + $0x58] sm:$0xff]
    %v704 = vld [vmem:[%s19 + $0x60] sm:$0xff]
    %v705 = vld [vmem:[%s19 + $0x68] sm:$0xff]
    %v706 = vld [vmem:[%s19 + $0x70] sm:$0xff]
    %v707 = vld [vmem:[%s19 + $0x78] sm:$0xff]
    %v708 = vld [vmem:[%s19 + $0x80] sm:$0xff]
    %v709 = vld [vmem:[%s19 + $0x88] sm:$0xff]
    %v710 = vld [vmem:[%s19 + $0x90] sm:$0xff]
    %v711 = vld [vmem:[%s19 + $0x98] sm:$0xff]
    %v712 = vld [vmem:[%s19 + $0xa0] sm:$0xff]
    %v713 = vld [vmem:[%s19 + $0xa8] sm:$0xff]
    %v714 = vld [vmem:[%s19 + $0xb0] sm:$0xff]
    %v715 = vld [vmem:[%s19 + $0xb8] sm:$0xff]
    %v716 = vld [vmem:[%s19 + $0xc0] sm:$0xff]
    %v717 = vld [vmem:[%s19 + $0xc8] sm:$0xff]
    %v718 = vld [vmem:[%s19 + $0xd0] sm:$0xff]
    %v719 = vld [vmem:[%s19 + $0xd8] sm:$0xff]
    %v720 = vld [vmem:[%s19 + $0xe0] sm:$0xff]
    %v721 = vld [vmem:[%s19 + $0xe8] sm:$0xff]
    %v722 = vld [vmem:[%s19 + $0xf0] sm:$0xff]
    %v723 = vld [vmem:[%s19 + $0xf8] sm:$0xff]
    %v724 = vld [vmem:[%s19 + $0x100] sm:$0xff]
    %v725 = vld [vmem:[%s19 + $0x108] sm:$0xff]
    %v726 = vld [vmem:[%s19 + $0x110] sm:$0xff]
    %v727 = vld [vmem:[%s19 + $0x118] sm:$0xff]
    %vm728 = vcmask 130048
    %v730 = vsel %vm728, %v692, 0
    %v733 = vsel %vm728, %v693, 0
    %v736 = vsel %vm728, %v694, 0
    %v739 = vsel %vm728, %v695, 0
    %v742 = vsel %vm728, %v696, 0
    %v745 = vsel %vm728, %v697, 0
    %v748 = vsel %vm728, %v698, 0
    %v751 = vsel %vm728, %v699, 0
    %v754 = vsel %vm728, %v700, 0
    %v757 = vsel %vm728, %v701, 0
    %v760 = vsel %vm728, %v702, 0
    %v763 = vsel %vm728, %v703, 0
    %v766 = vsel %vm728, %v704, 0
    %v769 = vsel %vm728, %v705, 0
    %v772 = vsel %vm728, %v706, 0
    %v775 = vsel %vm728, %v707, 0
    %v778 = vsel %vm728, %v708, 0
    %v781 = vsel %vm728, %v709, 0
    %v784 = vsel %vm728, %v710, 0
    %v787 = vsel %vm728, %v711, 0
    %v790 = vsel %vm728, %v712, 0
    %v793 = vsel %vm728, %v713, 0
    %v796 = vsel %vm728, %v714, 0
    %v799 = vsel %vm728, %v715, 0
    %v802 = vsel %vm728, %v716, 0
    %v805 = vsel %vm728, %v717, 0
    %v808 = vsel %vm728, %v718, 0
    %v811 = vsel %vm728, %v719, 0
    %v814 = vsel %vm728, %v720, 0
    %v817 = vsel %vm728, %v721, 0
    %v820 = vsel %vm728, %v722, 0
    %v823 = vsel %vm728, %v723, 0
    %v826 = vsel %vm728, %v724, 0
    %v829 = vsel %vm728, %v725, 0
    %v832 = vsel %vm728, %v726, 0
    %v835 = vsel %vm728, %v727, 0
    %837 = vmatprep.subr.mxu0 0.0
    %838 = vmatpush1.msra.mxu0 0.0
    %839 = vmatprep.subr.mxu0 0.0
    %840 = vmatpush1.msra.mxu0 0.0
    %841 = vmatprep.subr.mxu0 0.0
    %842 = vmatpush1.msra.mxu0 0.0
    %843 = vmatprep.subr.mxu0 0.0
    %844 = vmatpush1.msra.mxu0 0.0
    %845 = vmatprep.subr.mxu0 0.0
    %846 = vmatpush1.msra.mxu0 0.0
    %847 = vmatprep.subr.mxu0 0.0
    %848 = vmatpush1.msra.mxu0 0.0
    %849 = vmatprep.subr.mxu0 0.0
    %850 = vmatpush1.msra.mxu0 0.0
    %851 = vmatprep.subr.mxu0 0.0
    %852 = vmatpush1.msra.mxu0 0.0
    %853 = vmatprep.subr.mxu0 0.0
    %854 = vmatpush1.msra.mxu0 0.0
    %855 = vmatprep.subr.mxu0 0.0
    %856 = vmatpush1.msra.mxu0 0.0
    %857 = vmatprep.subr.mxu0 0.0
    %858 = vmatpush1.msra.mxu0 0.0
    %859 = vmatprep.subr.mxu0 0.0
    %860 = vmatpush1.msra.mxu0 0.0
    %861 = vmatprep.subr.mxu0 0.0
    %862 = vmatpush1.msra.mxu0 0.0
    %863 = vmatprep.subr.mxu0 0.0
    %864 = vmatpush1.msra.mxu0 0.0
    %865 = vmatprep.subr.mxu0 %v691
    %866 = vmatpush1.msra.mxu0 %v690
    %867 = vmatprep.subr.mxu0 %v689
    %868 = vmatpush1.msra.mxu0 %v688
    %869 = vmatprep.subr.mxu0 0.0
    %870 = vmatpush2.msra.mxu0 0.0
    %871 = vmatprep.subr.mxu0 0.0
    %872 = vmatpush2.msra.mxu0 0.0
    %873 = vmatprep.subr.mxu0 0.0
    %874 = vmatpush2.msra.mxu0 0.0
    %875 = vmatprep.subr.mxu0 0.0
    %876 = vmatpush2.msra.mxu0 0.0
    %877 = vmatprep.subr.mxu0 0.0
    %878 = vmatpush2.msra.mxu0 0.0
    %879 = vmatprep.subr.mxu0 0.0
    %880 = vmatpush2.msra.mxu0 0.0
    %881 = vmatprep.subr.mxu0 0.0
    %882 = vmatpush2.msra.mxu0 0.0
    %883 = vmatprep.subr.mxu0 0.0
    %884 = vmatpush2.msra.mxu0 0.0
    %885 = vmatprep.subr.mxu0 0.0
    %886 = vmatpush2.msra.mxu0 0.0
    %887 = vmatprep.subr.mxu0 0.0
    %888 = vmatpush2.msra.mxu0 0.0
    %889 = vmatprep.subr.mxu0 0.0
    %890 = vmatpush2.msra.mxu0 0.0
    %891 = vmatprep.subr.mxu0 0.0
    %892 = vmatpush2.msra.mxu0 0.0
    %893 = vmatprep.subr.mxu0 0.0
    %894 = vmatpush2.msra.mxu0 0.0
    %895 = vmatprep.subr.mxu0 0.0
    %896 = vmatpush2.msra.mxu0 0.0
    %897 = vmatprep.subr.mxu0 0.0
    %898 = vmatpush2.msra.mxu0 0.0
    %899 = vmatprep.subr.mxu0 0.0
    %900 = vmatpush2.msra.mxu0 0.0
    %901 = vmatprep.mubr.f32.mxu0 0.0
    %902 = vmatmul.mubr.f32.gmra.mxu0 %v730
    %v903 = vpop.f32.mrf.mxu0
    %v904 = vadd.f32 0.0, %v903
    %v905 = vpop.f32.mrf.mxu0
    %v906 = vadd.f32 0.0, %v905
    %907 = vmatprep.mubr.f32.mxu0 0.0
    %908 = vmatmul.mubr.f32.gmra.mxu0 %v733
    %v909 = vpop.f32.mrf.mxu0
    %v910 = vadd.f32 0.0, %v909
    %v911 = vpop.f32.mrf.mxu0
    %v912 = vadd.f32 0.0, %v911
    %913 = vmatprep.mubr.f32.mxu0 0.0
    %914 = vmatmul.mubr.f32.gmra.mxu0 %v736
    %v915 = vpop.f32.mrf.mxu0
    %v916 = vadd.f32 0.0, %v915
    %v917 = vpop.f32.mrf.mxu0
    %v918 = vadd.f32 0.0, %v917
    %919 = vmatprep.mubr.f32.mxu0 0.0
    %920 = vmatmul.mubr.f32.gmra.mxu0 %v739
    %v921 = vpop.f32.mrf.mxu0
    %v922 = vadd.f32 0.0, %v921
    %v923 = vpop.f32.mrf.mxu0
    %v924 = vadd.f32 0.0, %v923
    %925 = vmatprep.mubr.f32.mxu0 0.0
    %926 = vmatmul.mubr.f32.gmra.mxu0 %v742
    %v927 = vpop.f32.mrf.mxu0
    %v928 = vadd.f32 0.0, %v927
    %v929 = vpop.f32.mrf.mxu0
    %v930 = vadd.f32 0.0, %v929
    %931 = vmatprep.mubr.f32.mxu0 0.0
    %932 = vmatmul.mubr.f32.gmra.mxu0 %v745
    %v933 = vpop.f32.mrf.mxu0
    %v934 = vadd.f32 0.0, %v933
    %v935 = vpop.f32.mrf.mxu0
    %v936 = vadd.f32 0.0, %v935
    %937 = vmatprep.mubr.f32.mxu0 0.0
    %938 = vmatmul.mubr.f32.gmra.mxu0 %v748
    %v939 = vpop.f32.mrf.mxu0
    %v940 = vadd.f32 0.0, %v939
    %v941 = vpop.f32.mrf.mxu0
    %v942 = vadd.f32 0.0, %v941
    %943 = vmatprep.mubr.f32.mxu0 0.0
    %944 = vmatmul.mubr.f32.gmra.mxu0 %v751
    %v945 = vpop.f32.mrf.mxu0
    %v946 = vadd.f32 0.0, %v945
    %v947 = vpop.f32.mrf.mxu0
    %v948 = vadd.f32 0.0, %v947
    %949 = vmatprep.mubr.f32.mxu0 0.0
    %950 = vmatmul.mubr.f32.gmra.mxu0 %v754
    %v951 = vpop.f32.mrf.mxu0
    %v952 = vadd.f32 0.0, %v951
    %v953 = vpop.f32.mrf.mxu0
    %v954 = vadd.f32 0.0, %v953
    %955 = vmatprep.mubr.f32.mxu0 0.0
    %956 = vmatmul.mubr.f32.gmra.mxu0 %v757
    %v957 = vpop.f32.mrf.mxu0
    %v958 = vadd.f32 0.0, %v957
    %v959 = vpop.f32.mrf.mxu0
    %v960 = vadd.f32 0.0, %v959
    %961 = vmatprep.mubr.f32.mxu0 0.0
    %962 = vmatmul.mubr.f32.gmra.mxu0 %v760
    %v963 = vpop.f32.mrf.mxu0
    %v964 = vadd.f32 0.0, %v963
    %v965 = vpop.f32.mrf.mxu0
    %v966 = vadd.f32 0.0, %v965
    %967 = vmatprep.mubr.f32.mxu0 0.0
    %968 = vmatmul.mubr.f32.gmra.mxu0 %v763
    %v969 = vpop.f32.mrf.mxu0
    %v970 = vadd.f32 0.0, %v969
    %v971 = vpop.f32.mrf.mxu0
    %v972 = vadd.f32 0.0, %v971
    %973 = vmatprep.mubr.f32.mxu0 0.0
    %974 = vmatmul.mubr.f32.gmra.mxu0 %v766
    %v975 = vpop.f32.mrf.mxu0
    %v976 = vadd.f32 0.0, %v975
    %v977 = vpop.f32.mrf.mxu0
    %v978 = vadd.f32 0.0, %v977
    %979 = vmatprep.mubr.f32.mxu0 0.0
    %980 = vmatmul.mubr.f32.gmra.mxu0 %v769
    %v981 = vpop.f32.mrf.mxu0
    %v982 = vadd.f32 0.0, %v981
    %v983 = vpop.f32.mrf.mxu0
    %v984 = vadd.f32 0.0, %v983
    %985 = vmatprep.mubr.f32.mxu0 0.0
    %986 = vmatmul.mubr.f32.gmra.mxu0 %v772
    %v987 = vpop.f32.mrf.mxu0
    %v988 = vadd.f32 0.0, %v987
    %v989 = vpop.f32.mrf.mxu0
    %v990 = vadd.f32 0.0, %v989
    %991 = vmatprep.mubr.f32.mxu0 0.0
    %992 = vmatmul.mubr.f32.gmra.mxu0 %v775
    %v993 = vpop.f32.mrf.mxu0
    %v994 = vadd.f32 0.0, %v993
    %v995 = vpop.f32.mrf.mxu0
    %v996 = vadd.f32 0.0, %v995
    %997 = vmatprep.mubr.f32.mxu0 0.0
    %998 = vmatmul.mubr.f32.gmra.mxu0 %v778
    %v999 = vpop.f32.mrf.mxu0
    %v1000 = vadd.f32 0.0, %v999
    %v1001 = vpop.f32.mrf.mxu0
    %v1002 = vadd.f32 0.0, %v1001
    %1003 = vmatprep.mubr.f32.mxu0 0.0
    %1004 = vmatmul.mubr.f32.gmra.mxu0 %v781
    %v1005 = vpop.f32.mrf.mxu0
    %v1006 = vadd.f32 0.0, %v1005
    %v1007 = vpop.f32.mrf.mxu0
    %v1008 = vadd.f32 0.0, %v1007
    %1009 = vmatprep.mubr.f32.mxu0 0.0
    %1010 = vmatmul.mubr.f32.gmra.mxu0 %v784
    %v1011 = vpop.f32.mrf.mxu0
    %v1012 = vadd.f32 0.0, %v1011
    %v1013 = vpop.f32.mrf.mxu0
    %v1014 = vadd.f32 0.0, %v1013
    %1015 = vmatprep.mubr.f32.mxu0 0.0
    %1016 = vmatmul.mubr.f32.gmra.mxu0 %v787
    %v1017 = vpop.f32.mrf.mxu0
    %v1018 = vadd.f32 0.0, %v1017
    %v1019 = vpop.f32.mrf.mxu0
    %v1020 = vadd.f32 0.0, %v1019
    %1021 = vmatprep.mubr.f32.mxu0 0.0
    %1022 = vmatmul.mubr.f32.gmra.mxu0 %v790
    %v1023 = vpop.f32.mrf.mxu0
    %v1024 = vadd.f32 0.0, %v1023
    %v1025 = vpop.f32.mrf.mxu0
    %v1026 = vadd.f32 0.0, %v1025
    %1027 = vmatprep.mubr.f32.mxu0 0.0
    %1028 = vmatmul.mubr.f32.gmra.mxu0 %v793
    %v1029 = vpop.f32.mrf.mxu0
    %v1030 = vadd.f32 0.0, %v1029
    %v1031 = vpop.f32.mrf.mxu0
    %v1032 = vadd.f32 0.0, %v1031
    %1033 = vmatprep.mubr.f32.mxu0 0.0
    %1034 = vmatmul.mubr.f32.gmra.mxu0 %v796
    %v1035 = vpop.f32.mrf.mxu0
    %v1036 = vadd.f32 0.0, %v1035
    %v1037 = vpop.f32.mrf.mxu0
    %v1038 = vadd.f32 0.0, %v1037
    %1039 = vmatprep.mubr.f32.mxu0 0.0
    %1040 = vmatmul.mubr.f32.gmra.mxu0 %v799
    %v1041 = vpop.f32.mrf.mxu0
    %v1042 = vadd.f32 0.0, %v1041
    %v1043 = vpop.f32.mrf.mxu0
    %v1044 = vadd.f32 0.0, %v1043
    %1045 = vmatprep.mubr.f32.mxu0 0.0
    %1046 = vmatmul.mubr.f32.gmra.mxu0 %v802
    %v1047 = vpop.f32.mrf.mxu0
    %v1048 = vadd.f32 0.0, %v1047
    %v1049 = vpop.f32.mrf.mxu0
    %v1050 = vadd.f32 0.0, %v1049
    %1051 = vmatprep.mubr.f32.mxu0 0.0
    %1052 = vmatmul.mubr.f32.gmra.mxu0 %v805
    %v1053 = vpop.f32.mrf.mxu0
    %v1054 = vadd.f32 0.0, %v1053
    %v1055 = vpop.f32.mrf.mxu0
    %v1056 = vadd.f32 0.0, %v1055
    %1057 = vmatprep.mubr.f32.mxu0 0.0
    %1058 = vmatmul.mubr.f32.gmra.mxu0 %v808
    %v1059 = vpop.f32.mrf.mxu0
    %v1060 = vadd.f32 0.0, %v1059
    %v1061 = vpop.f32.mrf.mxu0
    %v1062 = vadd.f32 0.0, %v1061
    %1063 = vmatprep.mubr.f32.mxu0 0.0
    %1064 = vmatmul.mubr.f32.gmra.mxu0 %v811
    %v1065 = vpop.f32.mrf.mxu0
    %v1066 = vadd.f32 0.0, %v1065
    %v1067 = vpop.f32.mrf.mxu0
    %v1068 = vadd.f32 0.0, %v1067
    %1069 = vmatprep.mubr.f32.mxu0 0.0
    %1070 = vmatmul.mubr.f32.gmra.mxu0 %v814
    %v1071 = vpop.f32.mrf.mxu0
    %v1072 = vadd.f32 0.0, %v1071
    %v1073 = vpop.f32.mrf.mxu0
    %v1074 = vadd.f32 0.0, %v1073
    %1075 = vmatprep.mubr.f32.mxu0 0.0
    %1076 = vmatmul.mubr.f32.gmra.mxu0 %v817
    %v1077 = vpop.f32.mrf.mxu0
    %v1078 = vadd.f32 0.0, %v1077
    %v1079 = vpop.f32.mrf.mxu0
    %v1080 = vadd.f32 0.0, %v1079
    %1081 = vmatprep.mubr.f32.mxu0 0.0
    %1082 = vmatmul.mubr.f32.gmra.mxu0 %v820
    %v1083 = vpop.f32.mrf.mxu0
    %v1084 = vadd.f32 0.0, %v1083
    %v1085 = vpop.f32.mrf.mxu0
    %v1086 = vadd.f32 0.0, %v1085
    %1087 = vmatprep.mubr.f32.mxu0 0.0
    %1088 = vmatmul.mubr.f32.gmra.mxu0 %v823
    %v1089 = vpop.f32.mrf.mxu0
    %v1090 = vadd.f32 0.0, %v1089
    %v1091 = vpop.f32.mrf.mxu0
    %v1092 = vadd.f32 0.0, %v1091
    %1093 = vmatprep.mubr.f32.mxu0 0.0
    %1094 = vmatmul.mubr.f32.gmra.mxu0 %v826
    %v1095 = vpop.f32.mrf.mxu0
    %v1096 = vadd.f32 0.0, %v1095
    %v1097 = vpop.f32.mrf.mxu0
    %v1098 = vadd.f32 0.0, %v1097
    %1099 = vmatprep.mubr.f32.mxu0 0.0
    %1100 = vmatmul.mubr.f32.gmra.mxu0 %v829
    %v1101 = vpop.f32.mrf.mxu0
    %v1102 = vadd.f32 0.0, %v1101
    %v1103 = vpop.f32.mrf.mxu0
    %v1104 = vadd.f32 0.0, %v1103
    %1105 = vmatprep.mubr.f32.mxu0 0.0
    %1106 = vmatmul.mubr.f32.gmra.mxu0 %v832
    %v1107 = vpop.f32.mrf.mxu0
    %v1108 = vadd.f32 0.0, %v1107
    %v1109 = vpop.f32.mrf.mxu0
    %v1110 = vadd.f32 0.0, %v1109
    %1111 = vmatprep.mubr.f32.mxu0 0.0
    %1112 = vmatmul.mubr.f32.gmra.mxu0 %v835
    %v1113 = vpop.f32.mrf.mxu0
    %v1114 = vadd.f32 0.0, %v1113
    %v1115 = vpop.f32.mrf.mxu0
    %v1116 = vadd.f32 0.0, %v1115
    %1117 = vdwg.mxu0
    %v1118 = vld [vmem:[%s21] sm:$0xff]
    %v1119 = vld [vmem:[%s21 + $0x8] sm:$0xff]
    %v1120 = vld [vmem:[%s21 + $0x10] sm:$0xff]
    %v1121 = vld [vmem:[%s21 + $0x18] sm:$0xff]
    %1122 = vrot.lane.b32.xlu0 %v904, 11
    %v1123 = vpop.permute.xlu0 %1122
    %1124 = vrot.lane.b32.xlu0 %v910, 11
    %v1125 = vpop.permute.xlu0 %1124
    %1126 = vrot.lane.b32.xlu0 %v916, 11
    %v1127 = vpop.permute.xlu0 %1126
    %1128 = vrot.lane.b32.xlu0 %v922, 11
    %v1129 = vpop.permute.xlu0 %1128
    %1130 = vrot.lane.b32.xlu0 %v906, 11
    %v1131 = vpop.permute.xlu0 %1130
    %1132 = vrot.lane.b32.xlu0 %v912, 11
    %v1133 = vpop.permute.xlu0 %1132
    %1134 = vrot.lane.b32.xlu0 %v918, 11
    %v1135 = vpop.permute.xlu0 %1134
    %1136 = vrot.lane.b32.xlu0 %v924, 11
    %v1137 = vpop.permute.xlu0 %1136
    %v1138 = vsel %vm411, %v1123, %v1131
    %v1139 = vsel %vm411, %v1125, %v1133
    %v1140 = vsel %vm411, %v1127, %v1135
    %v1141 = vsel %vm411, %v1129, %v1137
    %v1142 = vsel %vm411, %v1131, %v1123
    %v1143 = vsel %vm411, %v1133, %v1125
    %v1144 = vsel %vm411, %v1135, %v1127
    %v1145 = vsel %vm411, %v1137, %v1129
    %v1146 = vmul.f32 %v1142, %v420
    %v1147 = vmul.f32 %v1138, %v424
    %v1148 = vmul.f32 %v1143, %v420
    %v1149 = vmul.f32 %v1139, %v424
    %v1150 = vmul.f32 %v1144, %v420
    %v1151 = vmul.f32 %v1140, %v424
    %v1152 = vmul.f32 %v1145, %v420
    %v1153 = vmul.f32 %v1141, %v424
    %1155 = vset.pattern.permute.xlu0 0
    %1156 = vperm.xlu0 %1155, %v1118
    %v1157 = vpop.permute.xlu0 %1156
    %1160 = vset.pattern.permute.xlu0 0
    %1161 = vperm.xlu0 %1160, %v1119
    %v1162 = vpop.permute.xlu0 %1161
    %1165 = vset.pattern.permute.xlu0 0
    %1166 = vperm.xlu0 %1165, %v1120
    %v1167 = vpop.permute.xlu0 %1166
    %1170 = vset.pattern.permute.xlu0 0
    %1171 = vperm.xlu0 %1170, %v1121
    %v1172 = vpop.permute.xlu0 %1171
    %v1174 = vadd.f32 %v1157, %v1146
    %v1175 = vadd.f32 %v1157, %v1147
    %v1176 = vadd.f32 %v1162, %v1148
    %v1177 = vadd.f32 %v1162, %v1149
    %v1178 = vadd.f32 %v1167, %v1150
    %v1179 = vadd.f32 %v1167, %v1151
    %v1180 = vadd.f32 %v1172, %v1152
    %v1181 = vadd.f32 %v1172, %v1153
    %1182 = vrot.lane.b32.xlu0 %v928, 10
    %v1183 = vpop.permute.xlu0 %1182
    %1184 = vrot.lane.b32.xlu0 %v934, 10
    %v1185 = vpop.permute.xlu0 %1184
    %1186 = vrot.lane.b32.xlu0 %v940, 10
    %v1187 = vpop.permute.xlu0 %1186
    %1188 = vrot.lane.b32.xlu0 %v946, 10
    %v1189 = vpop.permute.xlu0 %1188
    %1190 = vrot.lane.b32.xlu0 %v930, 10
    %v1191 = vpop.permute.xlu0 %1190
    %1192 = vrot.lane.b32.xlu0 %v936, 10
    %v1193 = vpop.permute.xlu0 %1192
    %1194 = vrot.lane.b32.xlu0 %v942, 10
    %v1195 = vpop.permute.xlu0 %1194
    %1196 = vrot.lane.b32.xlu0 %v948, 10
    %v1197 = vpop.permute.xlu0 %1196
    %v1198 = vsel %vm453, %v1183, %v1191
    %v1199 = vsel %vm453, %v1185, %v1193
    %v1200 = vsel %vm453, %v1187, %v1195
    %v1201 = vsel %vm453, %v1189, %v1197
    %v1202 = vsel %vm453, %v1191, %v1183
    %v1203 = vsel %vm453, %v1193, %v1185
    %v1204 = vsel %vm453, %v1195, %v1187
    %v1205 = vsel %vm453, %v1197, %v1189
    %v1206 = vmul.f32 %v1202, %v462
    %v1207 = vmul.f32 %v1198, %v466
    %v1208 = vmul.f32 %v1203, %v462
    %v1209 = vmul.f32 %v1199, %v466
    %v1210 = vmul.f32 %v1204, %v462
    %v1211 = vmul.f32 %v1200, %v466
    %v1212 = vmul.f32 %v1205, %v462
    %v1213 = vmul.f32 %v1201, %v466
    %v1214 = vadd.f32 %v1174, %v1206
    %v1215 = vadd.f32 %v1175, %v1207
    %v1216 = vadd.f32 %v1176, %v1208
    %v1217 = vadd.f32 %v1177, %v1209
    %v1218 = vadd.f32 %v1178, %v1210
    %v1219 = vadd.f32 %v1179, %v1211
    %v1220 = vadd.f32 %v1180, %v1212
    %v1221 = vadd.f32 %v1181, %v1213
    %1222 = vrot.lane.b32.xlu0 %v952, 9
    %v1223 = vpop.permute.xlu0 %1222
    %1224 = vrot.lane.b32.xlu0 %v958, 9
    %v1225 = vpop.permute.xlu0 %1224
    %1226 = vrot.lane.b32.xlu0 %v964, 9
    %v1227 = vpop.permute.xlu0 %1226
    %1228 = vrot.lane.b32.xlu0 %v970, 9
    %v1229 = vpop.permute.xlu0 %1228
    %1230 = vrot.lane.b32.xlu0 %v954, 9
    %v1231 = vpop.permute.xlu0 %1230
    %1232 = vrot.lane.b32.xlu0 %v960, 9
    %v1233 = vpop.permute.xlu0 %1232
    %1234 = vrot.lane.b32.xlu0 %v966, 9
    %v1235 = vpop.permute.xlu0 %1234
    %1236 = vrot.lane.b32.xlu0 %v972, 9
    %v1237 = vpop.permute.xlu0 %1236
    %v1238 = vsel %vm485, %v1223, %v1231
    %v1239 = vsel %vm485, %v1225, %v1233
    %v1240 = vsel %vm485, %v1227, %v1235
    %v1241 = vsel %vm485, %v1229, %v1237
    %v1242 = vsel %vm485, %v1231, %v1223
    %v1243 = vsel %vm485, %v1233, %v1225
    %v1244 = vsel %vm485, %v1235, %v1227
    %v1245 = vsel %vm485, %v1237, %v1229
    %v1246 = vmul.f32 %v1242, %v494
    %v1247 = vmul.f32 %v1238, %v498
    %v1248 = vmul.f32 %v1243, %v494
    %v1249 = vmul.f32 %v1239, %v498
    %v1250 = vmul.f32 %v1244, %v494
    %v1251 = vmul.f32 %v1240, %v498
    %v1252 = vmul.f32 %v1245, %v494
    %v1253 = vmul.f32 %v1241, %v498
    %v1254 = vadd.f32 %v1214, %v1246
    %v1255 = vadd.f32 %v1215, %v1247
    %v1256 = vadd.f32 %v1216, %v1248
    %v1257 = vadd.f32 %v1217, %v1249
    %v1258 = vadd.f32 %v1218, %v1250
    %v1259 = vadd.f32 %v1219, %v1251
    %v1260 = vadd.f32 %v1220, %v1252
    %v1261 = vadd.f32 %v1221, %v1253
    %1262 = vrot.lane.b32.xlu0 %v976, 1
    %v1263 = vpop.permute.xlu0 %1262
    %1264 = vrot.lane.b32.xlu0 %v982, 1
    %v1265 = vpop.permute.xlu0 %1264
    %1266 = vrot.lane.b32.xlu0 %v988, 1
    %v1267 = vpop.permute.xlu0 %1266
    %1268 = vrot.lane.b32.xlu0 %v994, 1
    %v1269 = vpop.permute.xlu0 %1268
    %1270 = vrot.lane.b32.xlu0 %v978, 1
    %v1271 = vpop.permute.xlu0 %1270
    %1272 = vrot.lane.b32.xlu0 %v984, 1
    %v1273 = vpop.permute.xlu0 %1272
    %1274 = vrot.lane.b32.xlu0 %v990, 1
    %v1275 = vpop.permute.xlu0 %1274
    %1276 = vrot.lane.b32.xlu0 %v996, 1
    %v1277 = vpop.permute.xlu0 %1276
    %v1278 = vsel %vm517, %v1263, %v1271
    %v1279 = vsel %vm517, %v1265, %v1273
    %v1280 = vsel %vm517, %v1267, %v1275
    %v1281 = vsel %vm517, %v1269, %v1277
    %v1282 = vsel %vm517, %v1271, %v1263
    %v1283 = vsel %vm517, %v1273, %v1265
    %v1284 = vsel %vm517, %v1275, %v1267
    %v1285 = vsel %vm517, %v1277, %v1269
    %v1286 = vmul.f32 %v1282, %v526
    %v1287 = vmul.f32 %v1278, %v530
    %v1288 = vmul.f32 %v1283, %v526
    %v1289 = vmul.f32 %v1279, %v530
    %v1290 = vmul.f32 %v1284, %v526
    %v1291 = vmul.f32 %v1280, %v530
    %v1292 = vmul.f32 %v1285, %v526
    %v1293 = vmul.f32 %v1281, %v530
    %v1294 = vadd.f32 %v1254, %v1286
    %v1295 = vadd.f32 %v1255, %v1287
    %v1296 = vadd.f32 %v1256, %v1288
    %v1297 = vadd.f32 %v1257, %v1289
    %v1298 = vadd.f32 %v1258, %v1290
    %v1299 = vadd.f32 %v1259, %v1291
    %v1300 = vadd.f32 %v1260, %v1292
    %v1301 = vadd.f32 %v1261, %v1293
    %v1302 = vmul.f32 %v1000, %v545
    %v1303 = vmul.f32 %v1002, %v549
    %v1304 = vmul.f32 %v1006, %v545
    %v1305 = vmul.f32 %v1008, %v549
    %v1306 = vmul.f32 %v1012, %v545
    %v1307 = vmul.f32 %v1014, %v549
    %v1308 = vmul.f32 %v1018, %v545
    %v1309 = vmul.f32 %v1020, %v549
    %v1310 = vadd.f32 %v1294, %v1302
    %v1311 = vadd.f32 %v1295, %v1303
    %v1312 = vadd.f32 %v1296, %v1304
    %v1313 = vadd.f32 %v1297, %v1305
    %v1314 = vadd.f32 %v1298, %v1306
    %v1315 = vadd.f32 %v1299, %v1307
    %v1316 = vadd.f32 %v1300, %v1308
    %v1317 = vadd.f32 %v1301, %v1309
    %1318 = vrot.lane.b32.xlu0 %v1024, 127
    %v1319 = vpop.permute.xlu0 %1318
    %1320 = vrot.lane.b32.xlu0 %v1030, 127
    %v1321 = vpop.permute.xlu0 %1320
    %1322 = vrot.lane.b32.xlu0 %v1036, 127
    %v1323 = vpop.permute.xlu0 %1322
    %1324 = vrot.lane.b32.xlu0 %v1042, 127
    %v1325 = vpop.permute.xlu0 %1324
    %1326 = vrot.lane.b32.xlu0 %v1026, 127
    %v1327 = vpop.permute.xlu0 %1326
    %1328 = vrot.lane.b32.xlu0 %v1032, 127
    %v1329 = vpop.permute.xlu0 %1328
    %1330 = vrot.lane.b32.xlu0 %v1038, 127
    %v1331 = vpop.permute.xlu0 %1330
    %1332 = vrot.lane.b32.xlu0 %v1044, 127
    %v1333 = vpop.permute.xlu0 %1332
    %v1334 = vsel %vm568, %v1319, %v1327
    %v1335 = vsel %vm568, %v1321, %v1329
    %v1336 = vsel %vm568, %v1323, %v1331
    %v1337 = vsel %vm568, %v1325, %v1333
    %v1338 = vsel %vm568, %v1327, %v1319
    %v1339 = vsel %vm568, %v1329, %v1321
    %v1340 = vsel %vm568, %v1331, %v1323
    %v1341 = vsel %vm568, %v1333, %v1325
    %v1342 = vmul.f32 %v1334, %v577
    %v1343 = vmul.f32 %v1338, %v581
    %v1344 = vmul.f32 %v1335, %v577
    %v1345 = vmul.f32 %v1339, %v581
    %v1346 = vmul.f32 %v1336, %v577
    %v1347 = vmul.f32 %v1340, %v581
    %v1348 = vmul.f32 %v1337, %v577
    %v1349 = vmul.f32 %v1341, %v581
    %v1350 = vadd.f32 %v1310, %v1342
    %v1351 = vadd.f32 %v1311, %v1343
    %v1352 = vadd.f32 %v1312, %v1344
    %v1353 = vadd.f32 %v1313, %v1345
    %v1354 = vadd.f32 %v1314, %v1346
    %v1355 = vadd.f32 %v1315, %v1347
    %v1356 = vadd.f32 %v1316, %v1348
    %v1357 = vadd.f32 %v1317, %v1349
    %1358 = vrot.lane.b32.xlu0 %v1048, 119
    %v1359 = vpop.permute.xlu0 %1358
    %1360 = vrot.lane.b32.xlu0 %v1054, 119
    %v1361 = vpop.permute.xlu0 %1360
    %1362 = vrot.lane.b32.xlu0 %v1060, 119
    %v1363 = vpop.permute.xlu0 %1362
    %1364 = vrot.lane.b32.xlu0 %v1066, 119
    %v1365 = vpop.permute.xlu0 %1364
    %1366 = vrot.lane.b32.xlu0 %v1050, 119
    %v1367 = vpop.permute.xlu0 %1366
    %1368 = vrot.lane.b32.xlu0 %v1056, 119
    %v1369 = vpop.permute.xlu0 %1368
    %1370 = vrot.lane.b32.xlu0 %v1062, 119
    %v1371 = vpop.permute.xlu0 %1370
    %1372 = vrot.lane.b32.xlu0 %v1068, 119
    %v1373 = vpop.permute.xlu0 %1372
    %v1374 = vsel %vm600, %v1359, %v1367
    %v1375 = vsel %vm600, %v1361, %v1369
    %v1376 = vsel %vm600, %v1363, %v1371
    %v1377 = vsel %vm600, %v1365, %v1373
    %v1378 = vsel %vm600, %v1367, %v1359
    %v1379 = vsel %vm600, %v1369, %v1361
    %v1380 = vsel %vm600, %v1371, %v1363
    %v1381 = vsel %vm600, %v1373, %v1365
    %v1382 = vmul.f32 %v1374, %v609
    %v1383 = vmul.f32 %v1378, %v613
    %v1384 = vmul.f32 %v1375, %v609
    %v1385 = vmul.f32 %v1379, %v613
    %v1386 = vmul.f32 %v1376, %v609
    %v1387 = vmul.f32 %v1380, %v613
    %v1388 = vmul.f32 %v1377, %v609
    %v1389 = vmul.f32 %v1381, %v613
    %v1390 = vadd.f32 %v1350, %v1382
    %v1391 = vadd.f32 %v1351, %v1383
    %v1392 = vadd.f32 %v1352, %v1384
    %v1393 = vadd.f32 %v1353, %v1385
    %v1394 = vadd.f32 %v1354, %v1386
    %v1395 = vadd.f32 %v1355, %v1387
    %v1396 = vadd.f32 %v1356, %v1388
    %v1397 = vadd.f32 %v1357, %v1389
    %1398 = vrot.lane.b32.xlu0 %v1072, 118
    %v1399 = vpop.permute.xlu0 %1398
    %1400 = vrot.lane.b32.xlu0 %v1078, 118
    %v1401 = vpop.permute.xlu0 %1400
    %1402 = vrot.lane.b32.xlu0 %v1084, 118
    %v1403 = vpop.permute.xlu0 %1402
    %1404 = vrot.lane.b32.xlu0 %v1090, 118
    %v1405 = vpop.permute.xlu0 %1404
    %1406 = vrot.lane.b32.xlu0 %v1074, 118
    %v1407 = vpop.permute.xlu0 %1406
    %1408 = vrot.lane.b32.xlu0 %v1080, 118
    %v1409 = vpop.permute.xlu0 %1408
    %1410 = vrot.lane.b32.xlu0 %v1086, 118
    %v1411 = vpop.permute.xlu0 %1410
    %1412 = vrot.lane.b32.xlu0 %v1092, 118
    %v1413 = vpop.permute.xlu0 %1412
    %v1414 = vsel %vm632, %v1399, %v1407
    %v1415 = vsel %vm632, %v1401, %v1409
    %v1416 = vsel %vm632, %v1403, %v1411
    %v1417 = vsel %vm632, %v1405, %v1413
    %v1418 = vsel %vm632, %v1407, %v1399
    %v1419 = vsel %vm632, %v1409, %v1401
    %v1420 = vsel %vm632, %v1411, %v1403
    %v1421 = vsel %vm632, %v1413, %v1405
    %v1422 = vmul.f32 %v1414, %v641
    %v1423 = vmul.f32 %v1418, %v645
    %v1424 = vmul.f32 %v1415, %v641
    %v1425 = vmul.f32 %v1419, %v645
    %v1426 = vmul.f32 %v1416, %v641
    %v1427 = vmul.f32 %v1420, %v645
    %v1428 = vmul.f32 %v1417, %v641
    %v1429 = vmul.f32 %v1421, %v645
    %v1430 = vadd.f32 %v1390, %v1422
    %v1431 = vadd.f32 %v1391, %v1423
    %v1432 = vadd.f32 %v1392, %v1424
    %v1433 = vadd.f32 %v1393, %v1425
    %v1434 = vadd.f32 %v1394, %v1426
    %v1435 = vadd.f32 %v1395, %v1427
    %v1436 = vadd.f32 %v1396, %v1428
    %v1437 = vadd.f32 %v1397, %v1429
    %1438 = vrot.lane.b32.xlu0 %v1096, 117
    %v1439 = vpop.permute.xlu0 %1438
    %1440 = vrot.lane.b32.xlu0 %v1102, 117
    %v1441 = vpop.permute.xlu0 %1440
    %1442 = vrot.lane.b32.xlu0 %v1108, 117
    %v1443 = vpop.permute.xlu0 %1442
    %1444 = vrot.lane.b32.xlu0 %v1114, 117
    %v1445 = vpop.permute.xlu0 %1444
    %1446 = vrot.lane.b32.xlu0 %v1098, 117
    %v1447 = vpop.permute.xlu0 %1446
    %1448 = vrot.lane.b32.xlu0 %v1104, 117
    %v1449 = vpop.permute.xlu0 %1448
    %1450 = vrot.lane.b32.xlu0 %v1110, 117
    %v1451 = vpop.permute.xlu0 %1450
    %1452 = vrot.lane.b32.xlu0 %v1116, 117
    %v1453 = vpop.permute.xlu0 %1452
    %v1454 = vsel %vm664, %v1439, %v1447
    %v1455 = vsel %vm664, %v1441, %v1449
    %v1456 = vsel %vm664, %v1443, %v1451
    %v1457 = vsel %vm664, %v1445, %v1453
    %v1458 = vsel %vm664, %v1447, %v1439
    %v1459 = vsel %vm664, %v1449, %v1441
    %v1460 = vsel %vm664, %v1451, %v1443
    %v1461 = vsel %vm664, %v1453, %v1445
    %v1462 = vmul.f32 %v1454, %v673
    %v1463 = vmul.f32 %v1458, %v677
    %v1464 = vmul.f32 %v1455, %v673
    %v1465 = vmul.f32 %v1459, %v677
    %v1466 = vmul.f32 %v1456, %v673
    %v1467 = vmul.f32 %v1460, %v677
    %v1468 = vmul.f32 %v1457, %v673
    %v1469 = vmul.f32 %v1461, %v677
    %v1470 = vadd.f32 %v1430, %v1462
    %v1471 = vadd.f32 %v1431, %v1463
    %v1472 = vadd.f32 %v1432, %v1464
    %v1473 = vadd.f32 %v1433, %v1465
    %v1474 = vadd.f32 %v1434, %v1466
    %v1475 = vadd.f32 %v1435, %v1467
    %v1476 = vadd.f32 %v1436, %v1468
    %v1477 = vadd.f32 %v1437, %v1469
    %v1478 = vtanh.pop %v1470
    %v1479 = vtanh.pop %v1471
    %v1480 = vtanh.pop %v1472
    %v1481 = vtanh.pop %v1473
    %v1482 = vtanh.pop %v1474
    %v1483 = vtanh.pop %v1475
    %v1484 = vtanh.pop %v1476
    %v1485 = vtanh.pop %v1477
    %v1486 = vld [vmem:[%s23] sm:$0xff]
    %v1487 = vld [vmem:[%s23 + $0x8] sm:$0xff]
    %v1488 = vld [vmem:[%s23 + $0x10] sm:$0xff]
    %v1489 = vld [vmem:[%s23 + $0x18] sm:$0xff]
    %v1490 = vld [vmem:[%s23 + $0x20] sm:$0xff]
    %v1491 = vld [vmem:[%s23 + $0x28] sm:$0xff]
    %v1492 = vld [vmem:[%s23 + $0x30] sm:$0xff]
    %v1493 = vld [vmem:[%s23 + $0x38] sm:$0xff]
    %v1494 = vld [vmem:[%s23 + $0x40] sm:$0xff]
    %v1495 = vld [vmem:[%s23 + $0x48] sm:$0xff]
    %v1496 = vld [vmem:[%s23 + $0x50] sm:$0xff]
    %v1497 = vld [vmem:[%s23 + $0x58] sm:$0xff]
    %v1498 = vld [vmem:[%s23 + $0x60] sm:$0xff]
    %v1499 = vld [vmem:[%s23 + $0x68] sm:$0xff]
    %v1500 = vld [vmem:[%s23 + $0x70] sm:$0xff]
    %v1501 = vld [vmem:[%s23 + $0x78] sm:$0xff]
    %v1502 = vld [vmem:[%s23 + $0x80] sm:$0xff]
    %v1503 = vld [vmem:[%s23 + $0x88] sm:$0xff]
    %v1504 = vld [vmem:[%s23 + $0x90] sm:$0xff]
    %v1505 = vld [vmem:[%s23 + $0x98] sm:$0xff]
    %v1506 = vld [vmem:[%s23 + $0xa0] sm:$0xff]
    %v1507 = vld [vmem:[%s23 + $0xa8] sm:$0xff]
    %v1508 = vld [vmem:[%s23 + $0xb0] sm:$0xff]
    %v1509 = vld [vmem:[%s23 + $0xb8] sm:$0xff]
    %v1510 = vld [vmem:[%s23 + $0xc0] sm:$0xff]
    %v1511 = vld [vmem:[%s23 + $0xc8] sm:$0xff]
    %v1512 = vld [vmem:[%s23 + $0xd0] sm:$0xff]
    %v1513 = vld [vmem:[%s23 + $0xd8] sm:$0xff]
    %v1514 = vld [vmem:[%s23 + $0xe0] sm:$0xff]
    %v1515 = vld [vmem:[%s23 + $0xe8] sm:$0xff]
    %v1516 = vld [vmem:[%s23 + $0xf0] sm:$0xff]
    %v1517 = vld [vmem:[%s23 + $0xf8] sm:$0xff]
    %v1518 = vld [vmem:[%s23 + $0x100] sm:$0xff]
    %v1519 = vld [vmem:[%s23 + $0x108] sm:$0xff]
    %v1520 = vld [vmem:[%s23 + $0x110] sm:$0xff]
    %v1521 = vld [vmem:[%s23 + $0x118] sm:$0xff]
    %v1522 = vld [vmem:[%s23 + $0x120] sm:$0xff]
    %v1523 = vld [vmem:[%s23 + $0x128] sm:$0xff]
    %v1524 = vld [vmem:[%s23 + $0x130] sm:$0xff]
    %v1525 = vld [vmem:[%s23 + $0x138] sm:$0xff]
    %v1526 = vld [vmem:[%s23 + $0x140] sm:$0xff]
    %v1527 = vld [vmem:[%s23 + $0x148] sm:$0xff]
    %v1528 = vld [vmem:[%s23 + $0x150] sm:$0xff]
    %v1529 = vld [vmem:[%s23 + $0x158] sm:$0xff]
    %v1530 = vld [vmem:[%s23 + $0x160] sm:$0xff]
    %v1531 = vld [vmem:[%s23 + $0x168] sm:$0xff]
    %v1532 = vld [vmem:[%s23 + $0x170] sm:$0xff]
    %v1533 = vld [vmem:[%s23 + $0x178] sm:$0xff]
    %v1534 = vld [vmem:[%s23 + $0x180] sm:$0xff]
    %v1535 = vld [vmem:[%s23 + $0x188] sm:$0xff]
    %v1536 = vld [vmem:[%s23 + $0x190] sm:$0xff]
    %v1537 = vld [vmem:[%s23 + $0x198] sm:$0xff]
    %v1538 = vld [vmem:[%s23 + $0x1a0] sm:$0xff]
    %v1539 = vld [vmem:[%s23 + $0x1a8] sm:$0xff]
    %v1540 = vld [vmem:[%s23 + $0x1b0] sm:$0xff]
    %v1541 = vld [vmem:[%s23 + $0x1b8] sm:$0xff]
    %v1542 = vld [vmem:[%s23 + $0x1c0] sm:$0xff]
    %v1543 = vld [vmem:[%s23 + $0x1c8] sm:$0xff]
    %v1544 = vld [vmem:[%s23 + $0x1d0] sm:$0xff]
    %v1545 = vld [vmem:[%s23 + $0x1d8] sm:$0xff]
    %v1546 = vld [vmem:[%s23 + $0x1e0] sm:$0xff]
    %v1547 = vld [vmem:[%s23 + $0x1e8] sm:$0xff]
    %v1548 = vld [vmem:[%s23 + $0x1f0] sm:$0xff]
    %v1549 = vld [vmem:[%s23 + $0x1f8] sm:$0xff]
    %v1550 = vld [vmem:[%s23 + $0x200] sm:$0xff]
    %v1551 = vld [vmem:[%s23 + $0x208] sm:$0xff]
    %v1552 = vld [vmem:[%s23 + $0x210] sm:$0xff]
    %v1553 = vld [vmem:[%s23 + $0x218] sm:$0xff]
    %v1554 = vld [vmem:[%s23 + $0x220] sm:$0xff]
    %v1555 = vld [vmem:[%s23 + $0x228] sm:$0xff]
    %v1556 = vld [vmem:[%s23 + $0x230] sm:$0xff]
    %v1557 = vld [vmem:[%s23 + $0x238] sm:$0xff]
    %vm1558 = vcmask 261120
    %v1560 = vsel %vm1558, %v1486, 0
    %v1563 = vsel %vm1558, %v1487, 0
    %v1566 = vsel %vm1558, %v1488, 0
    %v1569 = vsel %vm1558, %v1489, 0
    %v1572 = vsel %vm1558, %v1490, 0
    %v1575 = vsel %vm1558, %v1491, 0
    %v1578 = vsel %vm1558, %v1492, 0
    %v1581 = vsel %vm1558, %v1493, 0
    %v1584 = vsel %vm1558, %v1494, 0
    %v1587 = vsel %vm1558, %v1495, 0
    %v1590 = vsel %vm1558, %v1496, 0
    %v1593 = vsel %vm1558, %v1497, 0
    %v1596 = vsel %vm1558, %v1498, 0
    %v1599 = vsel %vm1558, %v1499, 0
    %v1602 = vsel %vm1558, %v1500, 0
    %v1605 = vsel %vm1558, %v1501, 0
    %v1608 = vsel %vm1558, %v1502, 0
    %v1611 = vsel %vm1558, %v1503, 0
    %v1614 = vsel %vm1558, %v1504, 0
    %v1617 = vsel %vm1558, %v1505, 0
    %v1620 = vsel %vm1558, %v1506, 0
    %v1623 = vsel %vm1558, %v1507, 0
    %v1626 = vsel %vm1558, %v1508, 0
    %v1629 = vsel %vm1558, %v1509, 0
    %v1632 = vsel %vm1558, %v1510, 0
    %v1635 = vsel %vm1558, %v1511, 0
    %v1638 = vsel %vm1558, %v1512, 0
    %v1641 = vsel %vm1558, %v1513, 0
    %v1644 = vsel %vm1558, %v1514, 0
    %v1647 = vsel %vm1558, %v1515, 0
    %v1650 = vsel %vm1558, %v1516, 0
    %v1653 = vsel %vm1558, %v1517, 0
    %v1656 = vsel %vm1558, %v1518, 0
    %v1659 = vsel %vm1558, %v1519, 0
    %v1662 = vsel %vm1558, %v1520, 0
    %v1665 = vsel %vm1558, %v1521, 0
    %v1668 = vsel %vm1558, %v1522, 0
    %v1671 = vsel %vm1558, %v1523, 0
    %v1674 = vsel %vm1558, %v1524, 0
    %v1677 = vsel %vm1558, %v1525, 0
    %v1680 = vsel %vm1558, %v1526, 0
    %v1683 = vsel %vm1558, %v1527, 0
    %v1686 = vsel %vm1558, %v1528, 0
    %v1689 = vsel %vm1558, %v1529, 0
    %v1692 = vsel %vm1558, %v1530, 0
    %v1695 = vsel %vm1558, %v1531, 0
    %v1698 = vsel %vm1558, %v1532, 0
    %v1701 = vsel %vm1558, %v1533, 0
    %v1704 = vsel %vm1558, %v1534, 0
    %v1707 = vsel %vm1558, %v1535, 0
    %v1710 = vsel %vm1558, %v1536, 0
    %v1713 = vsel %vm1558, %v1537, 0
    %v1716 = vsel %vm1558, %v1538, 0
    %v1719 = vsel %vm1558, %v1539, 0
    %v1722 = vsel %vm1558, %v1540, 0
    %v1725 = vsel %vm1558, %v1541, 0
    %v1728 = vsel %vm1558, %v1542, 0
    %v1731 = vsel %vm1558, %v1543, 0
    %v1734 = vsel %vm1558, %v1544, 0
    %v1737 = vsel %vm1558, %v1545, 0
    %v1740 = vsel %vm1558, %v1546, 0
    %v1743 = vsel %vm1558, %v1547, 0
    %v1746 = vsel %vm1558, %v1548, 0
    %v1749 = vsel %vm1558, %v1549, 0
    %v1752 = vsel %vm1558, %v1550, 0
    %v1755 = vsel %vm1558, %v1551, 0
    %v1758 = vsel %vm1558, %v1552, 0
    %v1761 = vsel %vm1558, %v1553, 0
    %v1764 = vsel %vm1558, %v1554, 0
    %v1767 = vsel %vm1558, %v1555, 0
    %v1770 = vsel %vm1558, %v1556, 0
    %v1773 = vsel %vm1558, %v1557, 0
    %1775 = vmatprep.subr.mxu0 0.0
    %1776 = vmatpush1.msra.mxu0 0.0
    %1777 = vmatprep.subr.mxu0 0.0
    %1778 = vmatpush1.msra.mxu0 0.0
    %1779 = vmatprep.subr.mxu0 0.0
    %1780 = vmatpush1.msra.mxu0 0.0
    %1781 = vmatprep.subr.mxu0 0.0
    %1782 = vmatpush1.msra.mxu0 0.0
    %1783 = vmatprep.subr.mxu0 0.0
    %1784 = vmatpush1.msra.mxu0 0.0
    %1785 = vmatprep.subr.mxu0 0.0
    %1786 = vmatpush1.msra.mxu0 0.0
    %1787 = vmatprep.subr.mxu0 0.0
    %1788 = vmatpush1.msra.mxu0 0.0
    %1789 = vmatprep.subr.mxu0 0.0
    %1790 = vmatpush1.msra.mxu0 0.0
    %1791 = vmatprep.subr.mxu0 0.0
    %1792 = vmatpush1.msra.mxu0 0.0
    %1793 = vmatprep.subr.mxu0 0.0
    %1794 = vmatpush1.msra.mxu0 0.0
    %1795 = vmatprep.subr.mxu0 0.0
    %1796 = vmatpush1.msra.mxu0 0.0
    %1797 = vmatprep.subr.mxu0 0.0
    %1798 = vmatpush1.msra.mxu0 0.0
    %1799 = vmatprep.subr.mxu0 %v1485
    %1800 = vmatpush1.msra.mxu0 %v1484
    %1801 = vmatprep.subr.mxu0 %v1483
    %1802 = vmatpush1.msra.mxu0 %v1482
    %1803 = vmatprep.subr.mxu0 %v1481
    %1804 = vmatpush1.msra.mxu0 %v1480
    %1805 = vmatprep.subr.mxu0 %v1479
    %1806 = vmatpush1.msra.mxu0 %v1478
    %1807 = vmatprep.subr.mxu0 0.0
    %1808 = vmatpush2.msra.mxu0 0.0
    %1809 = vmatprep.subr.mxu0 0.0
    %1810 = vmatpush2.msra.mxu0 0.0
    %1811 = vmatprep.subr.mxu0 0.0
    %1812 = vmatpush2.msra.mxu0 0.0
    %1813 = vmatprep.subr.mxu0 0.0
    %1814 = vmatpush2.msra.mxu0 0.0
    %1815 = vmatprep.subr.mxu0 0.0
    %1816 = vmatpush2.msra.mxu0 0.0
    %1817 = vmatprep.subr.mxu0 0.0
    %1818 = vmatpush2.msra.mxu0 0.0
    %1819 = vmatprep.subr.mxu0 0.0
    %1820 = vmatpush2.msra.mxu0 0.0
    %1821 = vmatprep.subr.mxu0 0.0
    %1822 = vmatpush2.msra.mxu0 0.0
    %1823 = vmatprep.subr.mxu0 0.0
    %1824 = vmatpush2.msra.mxu0 0.0
    %1825 = vmatprep.subr.mxu0 0.0
    %1826 = vmatpush2.msra.mxu0 0.0
    %1827 = vmatprep.subr.mxu0 0.0
    %1828 = vmatpush2.msra.mxu0 0.0
    %1829 = vmatprep.subr.mxu0 0.0
    %1830 = vmatpush2.msra.mxu0 0.0
    %1831 = vmatprep.subr.mxu0 0.0
    %1832 = vmatpush2.msra.mxu0 0.0
    %1833 = vmatprep.subr.mxu0 0.0
    %1834 = vmatpush2.msra.mxu0 0.0
    %1835 = vmatprep.subr.mxu0 0.0
    %1836 = vmatpush2.msra.mxu0 0.0
    %1837 = vmatprep.subr.mxu0 0.0
    %1838 = vmatpush2.msra.mxu0 0.0
    %1839 = vmatprep.mubr.f32.mxu0 0.0
    %1840 = vmatmul.mubr.f32.gmra.mxu0 %v1560
    %v1841 = vpop.f32.mrf.mxu0
    %v1842 = vadd.f32 0.0, %v1841
    %v1843 = vpop.f32.mrf.mxu0
    %v1844 = vadd.f32 0.0, %v1843
    %1845 = vmatprep.mubr.f32.mxu0 0.0
    %1846 = vmatmul.mubr.f32.gmra.mxu0 %v1563
    %v1847 = vpop.f32.mrf.mxu0
    %v1848 = vadd.f32 0.0, %v1847
    %v1849 = vpop.f32.mrf.mxu0
    %v1850 = vadd.f32 0.0, %v1849
    %1851 = vmatprep.mubr.f32.mxu0 0.0
    %1852 = vmatmul.mubr.f32.gmra.mxu0 %v1566
    %v1853 = vpop.f32.mrf.mxu0
    %v1854 = vadd.f32 0.0, %v1853
    %v1855 = vpop.f32.mrf.mxu0
    %v1856 = vadd.f32 0.0, %v1855
    %1857 = vmatprep.mubr.f32.mxu0 0.0
    %1858 = vmatmul.mubr.f32.gmra.mxu0 %v1569
    %v1859 = vpop.f32.mrf.mxu0
    %v1860 = vadd.f32 0.0, %v1859
    %v1861 = vpop.f32.mrf.mxu0
    %v1862 = vadd.f32 0.0, %v1861
    %1863 = vmatprep.mubr.f32.mxu0 0.0
    %1864 = vmatmul.mubr.f32.gmra.mxu0 %v1572
    %v1865 = vpop.f32.mrf.mxu0
    %v1866 = vadd.f32 0.0, %v1865
    %v1867 = vpop.f32.mrf.mxu0
    %v1868 = vadd.f32 0.0, %v1867
    %1869 = vmatprep.mubr.f32.mxu0 0.0
    %1870 = vmatmul.mubr.f32.gmra.mxu0 %v1575
    %v1871 = vpop.f32.mrf.mxu0
    %v1872 = vadd.f32 0.0, %v1871
    %v1873 = vpop.f32.mrf.mxu0
    %v1874 = vadd.f32 0.0, %v1873
    %1875 = vmatprep.mubr.f32.mxu0 0.0
    %1876 = vmatmul.mubr.f32.gmra.mxu0 %v1578
    %v1877 = vpop.f32.mrf.mxu0
    %v1878 = vadd.f32 0.0, %v1877
    %v1879 = vpop.f32.mrf.mxu0
    %v1880 = vadd.f32 0.0, %v1879
    %1881 = vmatprep.mubr.f32.mxu0 0.0
    %1882 = vmatmul.mubr.f32.gmra.mxu0 %v1581
    %v1883 = vpop.f32.mrf.mxu0
    %v1884 = vadd.f32 0.0, %v1883
    %v1885 = vpop.f32.mrf.mxu0
    %v1886 = vadd.f32 0.0, %v1885
    %1887 = vmatprep.mubr.f32.mxu0 0.0
    %1888 = vmatmul.mubr.f32.gmra.mxu0 %v1584
    %v1889 = vpop.f32.mrf.mxu0
    %v1890 = vadd.f32 0.0, %v1889
    %v1891 = vpop.f32.mrf.mxu0
    %v1892 = vadd.f32 0.0, %v1891
    %1893 = vmatprep.mubr.f32.mxu0 0.0
    %1894 = vmatmul.mubr.f32.gmra.mxu0 %v1587
    %v1895 = vpop.f32.mrf.mxu0
    %v1896 = vadd.f32 0.0, %v1895
    %v1897 = vpop.f32.mrf.mxu0
    %v1898 = vadd.f32 0.0, %v1897
    %1899 = vmatprep.mubr.f32.mxu0 0.0
    %1900 = vmatmul.mubr.f32.gmra.mxu0 %v1590
    %v1901 = vpop.f32.mrf.mxu0
    %v1902 = vadd.f32 0.0, %v1901
    %v1903 = vpop.f32.mrf.mxu0
    %v1904 = vadd.f32 0.0, %v1903
    %1905 = vmatprep.mubr.f32.mxu0 0.0
    %1906 = vmatmul.mubr.f32.gmra.mxu0 %v1593
    %v1907 = vpop.f32.mrf.mxu0
    %v1908 = vadd.f32 0.0, %v1907
    %v1909 = vpop.f32.mrf.mxu0
    %v1910 = vadd.f32 0.0, %v1909
    %1911 = vmatprep.mubr.f32.mxu0 0.0
    %1912 = vmatmul.mubr.f32.gmra.mxu0 %v1596
    %v1913 = vpop.f32.mrf.mxu0
    %v1914 = vadd.f32 0.0, %v1913
    %v1915 = vpop.f32.mrf.mxu0
    %v1916 = vadd.f32 0.0, %v1915
    %1917 = vmatprep.mubr.f32.mxu0 0.0
    %1918 = vmatmul.mubr.f32.gmra.mxu0 %v1599
    %v1919 = vpop.f32.mrf.mxu0
    %v1920 = vadd.f32 0.0, %v1919
    %v1921 = vpop.f32.mrf.mxu0
    %v1922 = vadd.f32 0.0, %v1921
    %1923 = vmatprep.mubr.f32.mxu0 0.0
    %1924 = vmatmul.mubr.f32.gmra.mxu0 %v1602
    %v1925 = vpop.f32.mrf.mxu0
    %v1926 = vadd.f32 0.0, %v1925
    %v1927 = vpop.f32.mrf.mxu0
    %v1928 = vadd.f32 0.0, %v1927
    %1929 = vmatprep.mubr.f32.mxu0 0.0
    %1930 = vmatmul.mubr.f32.gmra.mxu0 %v1605
    %v1931 = vpop.f32.mrf.mxu0
    %v1932 = vadd.f32 0.0, %v1931
    %v1933 = vpop.f32.mrf.mxu0
    %v1934 = vadd.f32 0.0, %v1933
    %1935 = vmatprep.mubr.f32.mxu0 0.0
    %1936 = vmatmul.mubr.f32.gmra.mxu0 %v1608
    %v1937 = vpop.f32.mrf.mxu0
    %v1938 = vadd.f32 0.0, %v1937
    %v1939 = vpop.f32.mrf.mxu0
    %v1940 = vadd.f32 0.0, %v1939
    %1941 = vmatprep.mubr.f32.mxu0 0.0
    %1942 = vmatmul.mubr.f32.gmra.mxu0 %v1611
    %v1943 = vpop.f32.mrf.mxu0
    %v1944 = vadd.f32 0.0, %v1943
    %v1945 = vpop.f32.mrf.mxu0
    %v1946 = vadd.f32 0.0, %v1945
    %1947 = vmatprep.mubr.f32.mxu0 0.0
    %1948 = vmatmul.mubr.f32.gmra.mxu0 %v1614
    %v1949 = vpop.f32.mrf.mxu0
    %v1950 = vadd.f32 0.0, %v1949
    %v1951 = vpop.f32.mrf.mxu0
    %v1952 = vadd.f32 0.0, %v1951
    %1953 = vmatprep.mubr.f32.mxu0 0.0
    %1954 = vmatmul.mubr.f32.gmra.mxu0 %v1617
    %v1955 = vpop.f32.mrf.mxu0
    %v1956 = vadd.f32 0.0, %v1955
    %v1957 = vpop.f32.mrf.mxu0
    %v1958 = vadd.f32 0.0, %v1957
    %1959 = vmatprep.mubr.f32.mxu0 0.0
    %1960 = vmatmul.mubr.f32.gmra.mxu0 %v1620
    %v1961 = vpop.f32.mrf.mxu0
    %v1962 = vadd.f32 0.0, %v1961
    %v1963 = vpop.f32.mrf.mxu0
    %v1964 = vadd.f32 0.0, %v1963
    %1965 = vmatprep.mubr.f32.mxu0 0.0
    %1966 = vmatmul.mubr.f32.gmra.mxu0 %v1623
    %v1967 = vpop.f32.mrf.mxu0
    %v1968 = vadd.f32 0.0, %v1967
    %v1969 = vpop.f32.mrf.mxu0
    %v1970 = vadd.f32 0.0, %v1969
    %1971 = vmatprep.mubr.f32.mxu0 0.0
    %1972 = vmatmul.mubr.f32.gmra.mxu0 %v1626
    %v1973 = vpop.f32.mrf.mxu0
    %v1974 = vadd.f32 0.0, %v1973
    %v1975 = vpop.f32.mrf.mxu0
    %v1976 = vadd.f32 0.0, %v1975
    %1977 = vmatprep.mubr.f32.mxu0 0.0
    %1978 = vmatmul.mubr.f32.gmra.mxu0 %v1629
    %v1979 = vpop.f32.mrf.mxu0
    %v1980 = vadd.f32 0.0, %v1979
    %v1981 = vpop.f32.mrf.mxu0
    %v1982 = vadd.f32 0.0, %v1981
    %1983 = vmatprep.mubr.f32.mxu0 0.0
    %1984 = vmatmul.mubr.f32.gmra.mxu0 %v1632
    %v1985 = vpop.f32.mrf.mxu0
    %v1986 = vadd.f32 0.0, %v1985
    %v1987 = vpop.f32.mrf.mxu0
    %v1988 = vadd.f32 0.0, %v1987
    %1989 = vmatprep.mubr.f32.mxu0 0.0
    %1990 = vmatmul.mubr.f32.gmra.mxu0 %v1635
    %v1991 = vpop.f32.mrf.mxu0
    %v1992 = vadd.f32 0.0, %v1991
    %v1993 = vpop.f32.mrf.mxu0
    %v1994 = vadd.f32 0.0, %v1993
    %1995 = vmatprep.mubr.f32.mxu0 0.0
    %1996 = vmatmul.mubr.f32.gmra.mxu0 %v1638
    %v1997 = vpop.f32.mrf.mxu0
    %v1998 = vadd.f32 0.0, %v1997
    %v1999 = vpop.f32.mrf.mxu0
    %v2000 = vadd.f32 0.0, %v1999
    %2001 = vmatprep.mubr.f32.mxu0 0.0
    %2002 = vmatmul.mubr.f32.gmra.mxu0 %v1641
    %v2003 = vpop.f32.mrf.mxu0
    %v2004 = vadd.f32 0.0, %v2003
    %v2005 = vpop.f32.mrf.mxu0
    %v2006 = vadd.f32 0.0, %v2005
    %2007 = vmatprep.mubr.f32.mxu0 0.0
    %2008 = vmatmul.mubr.f32.gmra.mxu0 %v1644
    %v2009 = vpop.f32.mrf.mxu0
    %v2010 = vadd.f32 0.0, %v2009
    %v2011 = vpop.f32.mrf.mxu0
    %v2012 = vadd.f32 0.0, %v2011
    %2013 = vmatprep.mubr.f32.mxu0 0.0
    %2014 = vmatmul.mubr.f32.gmra.mxu0 %v1647
    %v2015 = vpop.f32.mrf.mxu0
    %v2016 = vadd.f32 0.0, %v2015
    %v2017 = vpop.f32.mrf.mxu0
    %v2018 = vadd.f32 0.0, %v2017
    %2019 = vmatprep.mubr.f32.mxu0 0.0
    %2020 = vmatmul.mubr.f32.gmra.mxu0 %v1650
    %v2021 = vpop.f32.mrf.mxu0
    %v2022 = vadd.f32 0.0, %v2021
    %v2023 = vpop.f32.mrf.mxu0
    %v2024 = vadd.f32 0.0, %v2023
    %2025 = vmatprep.mubr.f32.mxu0 0.0
    %2026 = vmatmul.mubr.f32.gmra.mxu0 %v1653
    %v2027 = vpop.f32.mrf.mxu0
    %v2028 = vadd.f32 0.0, %v2027
    %v2029 = vpop.f32.mrf.mxu0
    %v2030 = vadd.f32 0.0, %v2029
    %2031 = vmatprep.mubr.f32.mxu0 0.0
    %2032 = vmatmul.mubr.f32.gmra.mxu0 %v1656
    %v2033 = vpop.f32.mrf.mxu0
    %v2034 = vadd.f32 0.0, %v2033
    %v2035 = vpop.f32.mrf.mxu0
    %v2036 = vadd.f32 0.0, %v2035
    %2037 = vmatprep.mubr.f32.mxu0 0.0
    %2038 = vmatmul.mubr.f32.gmra.mxu0 %v1659
    %v2039 = vpop.f32.mrf.mxu0
    %v2040 = vadd.f32 0.0, %v2039
    %v2041 = vpop.f32.mrf.mxu0
    %v2042 = vadd.f32 0.0, %v2041
    %2043 = vmatprep.mubr.f32.mxu0 0.0
    %2044 = vmatmul.mubr.f32.gmra.mxu0 %v1662
    %v2045 = vpop.f32.mrf.mxu0
    %v2046 = vadd.f32 0.0, %v2045
    %v2047 = vpop.f32.mrf.mxu0
    %v2048 = vadd.f32 0.0, %v2047
    %2049 = vmatprep.mubr.f32.mxu0 0.0
    %2050 = vmatmul.mubr.f32.gmra.mxu0 %v1665
    %v2051 = vpop.f32.mrf.mxu0
    %v2052 = vadd.f32 0.0, %v2051
    %v2053 = vpop.f32.mrf.mxu0
    %v2054 = vadd.f32 0.0, %v2053
    %2055 = vmatprep.mubr.f32.mxu0 0.0
    %2056 = vmatmul.mubr.f32.gmra.mxu0 %v1668
    %v2057 = vpop.f32.mrf.mxu0
    %v2058 = vadd.f32 0.0, %v2057
    %v2059 = vpop.f32.mrf.mxu0
    %v2060 = vadd.f32 0.0, %v2059
    %2061 = vmatprep.mubr.f32.mxu0 0.0
    %2062 = vmatmul.mubr.f32.gmra.mxu0 %v1671
    %v2063 = vpop.f32.mrf.mxu0
    %v2064 = vadd.f32 0.0, %v2063
    %v2065 = vpop.f32.mrf.mxu0
    %v2066 = vadd.f32 0.0, %v2065
    %2067 = vmatprep.mubr.f32.mxu0 0.0
    %2068 = vmatmul.mubr.f32.gmra.mxu0 %v1674
    %v2069 = vpop.f32.mrf.mxu0
    %v2070 = vadd.f32 0.0, %v2069
    %v2071 = vpop.f32.mrf.mxu0
    %v2072 = vadd.f32 0.0, %v2071
    %2073 = vmatprep.mubr.f32.mxu0 0.0
    %2074 = vmatmul.mubr.f32.gmra.mxu0 %v1677
    %v2075 = vpop.f32.mrf.mxu0
    %v2076 = vadd.f32 0.0, %v2075
    %v2077 = vpop.f32.mrf.mxu0
    %v2078 = vadd.f32 0.0, %v2077
    %2079 = vmatprep.mubr.f32.mxu0 0.0
    %2080 = vmatmul.mubr.f32.gmra.mxu0 %v1680
    %v2081 = vpop.f32.mrf.mxu0
    %v2082 = vadd.f32 0.0, %v2081
    %v2083 = vpop.f32.mrf.mxu0
    %v2084 = vadd.f32 0.0, %v2083
    %2085 = vmatprep.mubr.f32.mxu0 0.0
    %2086 = vmatmul.mubr.f32.gmra.mxu0 %v1683
    %v2087 = vpop.f32.mrf.mxu0
    %v2088 = vadd.f32 0.0, %v2087
    %v2089 = vpop.f32.mrf.mxu0
    %v2090 = vadd.f32 0.0, %v2089
    %2091 = vmatprep.mubr.f32.mxu0 0.0
    %2092 = vmatmul.mubr.f32.gmra.mxu0 %v1686
    %v2093 = vpop.f32.mrf.mxu0
    %v2094 = vadd.f32 0.0, %v2093
    %v2095 = vpop.f32.mrf.mxu0
    %v2096 = vadd.f32 0.0, %v2095
    %2097 = vmatprep.mubr.f32.mxu0 0.0
    %2098 = vmatmul.mubr.f32.gmra.mxu0 %v1689
    %v2099 = vpop.f32.mrf.mxu0
    %v2100 = vadd.f32 0.0, %v2099
    %v2101 = vpop.f32.mrf.mxu0
    %v2102 = vadd.f32 0.0, %v2101
    %2103 = vmatprep.mubr.f32.mxu0 0.0
    %2104 = vmatmul.mubr.f32.gmra.mxu0 %v1692
    %v2105 = vpop.f32.mrf.mxu0
    %v2106 = vadd.f32 0.0, %v2105
    %v2107 = vpop.f32.mrf.mxu0
    %v2108 = vadd.f32 0.0, %v2107
    %2109 = vmatprep.mubr.f32.mxu0 0.0
    %2110 = vmatmul.mubr.f32.gmra.mxu0 %v1695
    %v2111 = vpop.f32.mrf.mxu0
    %v2112 = vadd.f32 0.0, %v2111
    %v2113 = vpop.f32.mrf.mxu0
    %v2114 = vadd.f32 0.0, %v2113
    %2115 = vmatprep.mubr.f32.mxu0 0.0
    %2116 = vmatmul.mubr.f32.gmra.mxu0 %v1698
    %v2117 = vpop.f32.mrf.mxu0
    %v2118 = vadd.f32 0.0, %v2117
    %v2119 = vpop.f32.mrf.mxu0
    %v2120 = vadd.f32 0.0, %v2119
    %2121 = vmatprep.mubr.f32.mxu0 0.0
    %2122 = vmatmul.mubr.f32.gmra.mxu0 %v1701
    %v2123 = vpop.f32.mrf.mxu0
    %v2124 = vadd.f32 0.0, %v2123
    %v2125 = vpop.f32.mrf.mxu0
    %v2126 = vadd.f32 0.0, %v2125
    %2127 = vmatprep.mubr.f32.mxu0 0.0
    %2128 = vmatmul.mubr.f32.gmra.mxu0 %v1704
    %v2129 = vpop.f32.mrf.mxu0
    %v2130 = vadd.f32 0.0, %v2129
    %v2131 = vpop.f32.mrf.mxu0
    %v2132 = vadd.f32 0.0, %v2131
    %2133 = vmatprep.mubr.f32.mxu0 0.0
    %2134 = vmatmul.mubr.f32.gmra.mxu0 %v1707
    %v2135 = vpop.f32.mrf.mxu0
    %v2136 = vadd.f32 0.0, %v2135
    %v2137 = vpop.f32.mrf.mxu0
    %v2138 = vadd.f32 0.0, %v2137
    %2139 = vmatprep.mubr.f32.mxu0 0.0
    %2140 = vmatmul.mubr.f32.gmra.mxu0 %v1710
    %v2141 = vpop.f32.mrf.mxu0
    %v2142 = vadd.f32 0.0, %v2141
    %v2143 = vpop.f32.mrf.mxu0
    %v2144 = vadd.f32 0.0, %v2143
    %2145 = vmatprep.mubr.f32.mxu0 0.0
    %2146 = vmatmul.mubr.f32.gmra.mxu0 %v1713
    %v2147 = vpop.f32.mrf.mxu0
    %v2148 = vadd.f32 0.0, %v2147
    %v2149 = vpop.f32.mrf.mxu0
    %v2150 = vadd.f32 0.0, %v2149
    %2151 = vmatprep.mubr.f32.mxu0 0.0
    %2152 = vmatmul.mubr.f32.gmra.mxu0 %v1716
    %v2153 = vpop.f32.mrf.mxu0
    %v2154 = vadd.f32 0.0, %v2153
    %v2155 = vpop.f32.mrf.mxu0
    %v2156 = vadd.f32 0.0, %v2155
    %2157 = vmatprep.mubr.f32.mxu0 0.0
    %2158 = vmatmul.mubr.f32.gmra.mxu0 %v1719
    %v2159 = vpop.f32.mrf.mxu0
    %v2160 = vadd.f32 0.0, %v2159
    %v2161 = vpop.f32.mrf.mxu0
    %v2162 = vadd.f32 0.0, %v2161
    %2163 = vmatprep.mubr.f32.mxu0 0.0
    %2164 = vmatmul.mubr.f32.gmra.mxu0 %v1722
    %v2165 = vpop.f32.mrf.mxu0
    %v2166 = vadd.f32 0.0, %v2165
    %v2167 = vpop.f32.mrf.mxu0
    %v2168 = vadd.f32 0.0, %v2167
    %2169 = vmatprep.mubr.f32.mxu0 0.0
    %2170 = vmatmul.mubr.f32.gmra.mxu0 %v1725
    %v2171 = vpop.f32.mrf.mxu0
    %v2172 = vadd.f32 0.0, %v2171
    %v2173 = vpop.f32.mrf.mxu0
    %v2174 = vadd.f32 0.0, %v2173
    %2175 = vmatprep.mubr.f32.mxu0 0.0
    %2176 = vmatmul.mubr.f32.gmra.mxu0 %v1728
    %v2177 = vpop.f32.mrf.mxu0
    %v2178 = vadd.f32 0.0, %v2177
    %v2179 = vpop.f32.mrf.mxu0
    %v2180 = vadd.f32 0.0, %v2179
    %2181 = vmatprep.mubr.f32.mxu0 0.0
    %2182 = vmatmul.mubr.f32.gmra.mxu0 %v1731
    %v2183 = vpop.f32.mrf.mxu0
    %v2184 = vadd.f32 0.0, %v2183
    %v2185 = vpop.f32.mrf.mxu0
    %v2186 = vadd.f32 0.0, %v2185
    %2187 = vmatprep.mubr.f32.mxu0 0.0
    %2188 = vmatmul.mubr.f32.gmra.mxu0 %v1734
    %v2189 = vpop.f32.mrf.mxu0
    %v2190 = vadd.f32 0.0, %v2189
    %v2191 = vpop.f32.mrf.mxu0
    %v2192 = vadd.f32 0.0, %v2191
    %2193 = vmatprep.mubr.f32.mxu0 0.0
    %2194 = vmatmul.mubr.f32.gmra.mxu0 %v1737
    %v2195 = vpop.f32.mrf.mxu0
    %v2196 = vadd.f32 0.0, %v2195
    %v2197 = vpop.f32.mrf.mxu0
    %v2198 = vadd.f32 0.0, %v2197
    %2199 = vmatprep.mubr.f32.mxu0 0.0
    %2200 = vmatmul.mubr.f32.gmra.mxu0 %v1740
    %v2201 = vpop.f32.mrf.mxu0
    %v2202 = vadd.f32 0.0, %v2201
    %v2203 = vpop.f32.mrf.mxu0
    %v2204 = vadd.f32 0.0, %v2203
    %2205 = vmatprep.mubr.f32.mxu0 0.0
    %2206 = vmatmul.mubr.f32.gmra.mxu0 %v1743
    %v2207 = vpop.f32.mrf.mxu0
    %v2208 = vadd.f32 0.0, %v2207
    %v2209 = vpop.f32.mrf.mxu0
    %v2210 = vadd.f32 0.0, %v2209
    %2211 = vmatprep.mubr.f32.mxu0 0.0
    %2212 = vmatmul.mubr.f32.gmra.mxu0 %v1746
    %v2213 = vpop.f32.mrf.mxu0
    %v2214 = vadd.f32 0.0, %v2213
    %v2215 = vpop.f32.mrf.mxu0
    %v2216 = vadd.f32 0.0, %v2215
    %2217 = vmatprep.mubr.f32.mxu0 0.0
    %2218 = vmatmul.mubr.f32.gmra.mxu0 %v1749
    %v2219 = vpop.f32.mrf.mxu0
    %v2220 = vadd.f32 0.0, %v2219
    %v2221 = vpop.f32.mrf.mxu0
    %v2222 = vadd.f32 0.0, %v2221
    %2223 = vmatprep.mubr.f32.mxu0 0.0
    %2224 = vmatmul.mubr.f32.gmra.mxu0 %v1752
    %v2225 = vpop.f32.mrf.mxu0
    %v2226 = vadd.f32 0.0, %v2225
    %v2227 = vpop.f32.mrf.mxu0
    %v2228 = vadd.f32 0.0, %v2227
    %2229 = vmatprep.mubr.f32.mxu0 0.0
    %2230 = vmatmul.mubr.f32.gmra.mxu0 %v1755
    %v2231 = vpop.f32.mrf.mxu0
    %v2232 = vadd.f32 0.0, %v2231
    %v2233 = vpop.f32.mrf.mxu0
    %v2234 = vadd.f32 0.0, %v2233
    %2235 = vmatprep.mubr.f32.mxu0 0.0
    %2236 = vmatmul.mubr.f32.gmra.mxu0 %v1758
    %v2237 = vpop.f32.mrf.mxu0
    %v2238 = vadd.f32 0.0, %v2237
    %v2239 = vpop.f32.mrf.mxu0
    %v2240 = vadd.f32 0.0, %v2239
    %2241 = vmatprep.mubr.f32.mxu0 0.0
    %2242 = vmatmul.mubr.f32.gmra.mxu0 %v1761
    %v2243 = vpop.f32.mrf.mxu0
    %v2244 = vadd.f32 0.0, %v2243
    %v2245 = vpop.f32.mrf.mxu0
    %v2246 = vadd.f32 0.0, %v2245
    %2247 = vmatprep.mubr.f32.mxu0 0.0
    %2248 = vmatmul.mubr.f32.gmra.mxu0 %v1764
    %v2249 = vpop.f32.mrf.mxu0
    %v2250 = vadd.f32 0.0, %v2249
    %v2251 = vpop.f32.mrf.mxu0
    %v2252 = vadd.f32 0.0, %v2251
    %2253 = vmatprep.mubr.f32.mxu0 0.0
    %2254 = vmatmul.mubr.f32.gmra.mxu0 %v1767
    %v2255 = vpop.f32.mrf.mxu0
    %v2256 = vadd.f32 0.0, %v2255
    %v2257 = vpop.f32.mrf.mxu0
    %v2258 = vadd.f32 0.0, %v2257
    %2259 = vmatprep.mubr.f32.mxu0 0.0
    %2260 = vmatmul.mubr.f32.gmra.mxu0 %v1770
    %v2261 = vpop.f32.mrf.mxu0
    %v2262 = vadd.f32 0.0, %v2261
    %v2263 = vpop.f32.mrf.mxu0
    %v2264 = vadd.f32 0.0, %v2263
    %2265 = vmatprep.mubr.f32.mxu0 0.0
    %2266 = vmatmul.mubr.f32.gmra.mxu0 %v1773
    %v2267 = vpop.f32.mrf.mxu0
    %v2268 = vadd.f32 0.0, %v2267
    %v2269 = vpop.f32.mrf.mxu0
    %v2270 = vadd.f32 0.0, %v2269
    %2271 = vdwg.mxu0
    %v2272 = vld [vmem:[%s25] sm:$0xff]
    %v2273 = vld [vmem:[%s25 + $0x8] sm:$0xff]
    %v2274 = vld [vmem:[%s25 + $0x10] sm:$0xff]
    %v2275 = vld [vmem:[%s25 + $0x18] sm:$0xff]
    %v2276 = vld [vmem:[%s25 + $0x20] sm:$0xff]
    %v2277 = vld [vmem:[%s25 + $0x28] sm:$0xff]
    %v2278 = vld [vmem:[%s25 + $0x30] sm:$0xff]
    %v2279 = vld [vmem:[%s25 + $0x38] sm:$0xff]
    %2280 = vrot.lane.b32.xlu0 %v1842, 11
    %v2281 = vpop.permute.xlu0 %2280
    %2282 = vrot.lane.b32.xlu0 %v1848, 11
    %v2283 = vpop.permute.xlu0 %2282
    %2284 = vrot.lane.b32.xlu0 %v1854, 11
    %v2285 = vpop.permute.xlu0 %2284
    %2286 = vrot.lane.b32.xlu0 %v1860, 11
    %v2287 = vpop.permute.xlu0 %2286
    %2288 = vrot.lane.b32.xlu0 %v1866, 11
    %v2289 = vpop.permute.xlu0 %2288
    %2290 = vrot.lane.b32.xlu0 %v1872, 11
    %v2291 = vpop.permute.xlu0 %2290
    %2292 = vrot.lane.b32.xlu0 %v1878, 11
    %v2293 = vpop.permute.xlu0 %2292
    %2294 = vrot.lane.b32.xlu0 %v1884, 11
    %v2295 = vpop.permute.xlu0 %2294
    %2296 = vrot.lane.b32.xlu0 %v1844, 11
    %v2297 = vpop.permute.xlu0 %2296
    %2298 = vrot.lane.b32.xlu0 %v1850, 11
    %v2299 = vpop.permute.xlu0 %2298
    %2300 = vrot.lane.b32.xlu0 %v1856, 11
    %v2301 = vpop.permute.xlu0 %2300
    %2302 = vrot.lane.b32.xlu0 %v1862, 11
    %v2303 = vpop.permute.xlu0 %2302
    %2304 = vrot.lane.b32.xlu0 %v1868, 11
    %v2305 = vpop.permute.xlu0 %2304
    %2306 = vrot.lane.b32.xlu0 %v1874, 11
    %v2307 = vpop.permute.xlu0 %2306
    %2308 = vrot.lane.b32.xlu0 %v1880, 11
    %v2309 = vpop.permute.xlu0 %2308
    %2310 = vrot.lane.b32.xlu0 %v1886, 11
    %v2311 = vpop.permute.xlu0 %2310
    %v2312 = vsel %vm411, %v2281, %v2297
    %v2313 = vsel %vm411, %v2283, %v2299
    %v2314 = vsel %vm411, %v2285, %v2301
    %v2315 = vsel %vm411, %v2287, %v2303
    %v2316 = vsel %vm411, %v2289, %v2305
    %v2317 = vsel %vm411, %v2291, %v2307
    %v2318 = vsel %vm411, %v2293, %v2309
    %v2319 = vsel %vm411, %v2295, %v2311
    %v2320 = vsel %vm411, %v2297, %v2281
    %v2321 = vsel %vm411, %v2299, %v2283
    %v2322 = vsel %vm411, %v2301, %v2285
    %v2323 = vsel %vm411, %v2303, %v2287
    %v2324 = vsel %vm411, %v2305, %v2289
    %v2325 = vsel %vm411, %v2307, %v2291
    %v2326 = vsel %vm411, %v2309, %v2293
    %v2327 = vsel %vm411, %v2311, %v2295
    %v2328 = vmul.f32 %v2320, %v420
    %v2329 = vmul.f32 %v2312, %v424
    %v2330 = vmul.f32 %v2321, %v420
    %v2331 = vmul.f32 %v2313, %v424
    %v2332 = vmul.f32 %v2322, %v420
    %v2333 = vmul.f32 %v2314, %v424
    %v2334 = vmul.f32 %v2323, %v420
    %v2335 = vmul.f32 %v2315, %v424
    %v2336 = vmul.f32 %v2324, %v420
    %v2337 = vmul.f32 %v2316, %v424
    %v2338 = vmul.f32 %v2325, %v420
    %v2339 = vmul.f32 %v2317, %v424
    %v2340 = vmul.f32 %v2326, %v420
    %v2341 = vmul.f32 %v2318, %v424
    %v2342 = vmul.f32 %v2327, %v420
    %v2343 = vmul.f32 %v2319, %v424
    %2345 = vset.pattern.permute.xlu0 0
    %2346 = vperm.xlu0 %2345, %v2272
    %v2347 = vpop.permute.xlu0 %2346
    %2350 = vset.pattern.permute.xlu0 0
    %2351 = vperm.xlu0 %2350, %v2273
    %v2352 = vpop.permute.xlu0 %2351
    %2355 = vset.pattern.permute.xlu0 0
    %2356 = vperm.xlu0 %2355, %v2274
    %v2357 = vpop.permute.xlu0 %2356
    %2360 = vset.pattern.permute.xlu0 0
    %2361 = vperm.xlu0 %2360, %v2275
    %v2362 = vpop.permute.xlu0 %2361
    %2365 = vset.pattern.permute.xlu0 0
    %2366 = vperm.xlu0 %2365, %v2276
    %v2367 = vpop.permute.xlu0 %2366
    %2370 = vset.pattern.permute.xlu0 0
    %2371 = vperm.xlu0 %2370, %v2277
    %v2372 = vpop.permute.xlu0 %2371
    %2375 = vset.pattern.permute.xlu0 0
    %2376 = vperm.xlu0 %2375, %v2278
    %v2377 = vpop.permute.xlu0 %2376
    %2380 = vset.pattern.permute.xlu0 0
    %2381 = vperm.xlu0 %2380, %v2279
    %v2382 = vpop.permute.xlu0 %2381
    %v2384 = vadd.f32 %v2347, %v2328
    %v2385 = vadd.f32 %v2347, %v2329
    %v2386 = vadd.f32 %v2352, %v2330
    %v2387 = vadd.f32 %v2352, %v2331
    %v2388 = vadd.f32 %v2357, %v2332
    %v2389 = vadd.f32 %v2357, %v2333
    %v2390 = vadd.f32 %v2362, %v2334
    %v2391 = vadd.f32 %v2362, %v2335
    %v2392 = vadd.f32 %v2367, %v2336
    %v2393 = vadd.f32 %v2367, %v2337
    %v2394 = vadd.f32 %v2372, %v2338
    %v2395 = vadd.f32 %v2372, %v2339
    %v2396 = vadd.f32 %v2377, %v2340
    %v2397 = vadd.f32 %v2377, %v2341
    %v2398 = vadd.f32 %v2382, %v2342
    %v2399 = vadd.f32 %v2382, %v2343
    %2400 = vrot.lane.b32.xlu0 %v1890, 10
    %v2401 = vpop.permute.xlu0 %2400
    %2402 = vrot.lane.b32.xlu0 %v1896, 10
    %v2403 = vpop.permute.xlu0 %2402
    %2404 = vrot.lane.b32.xlu0 %v1902, 10
    %v2405 = vpop.permute.xlu0 %2404
    %2406 = vrot.lane.b32.xlu0 %v1908, 10
    %v2407 = vpop.permute.xlu0 %2406
    %2408 = vrot.lane.b32.xlu0 %v1914, 10
    %v2409 = vpop.permute.xlu0 %2408
    %2410 = vrot.lane.b32.xlu0 %v1920, 10
    %v2411 = vpop.permute.xlu0 %2410
    %2412 = vrot.lane.b32.xlu0 %v1926, 10
    %v2413 = vpop.permute.xlu0 %2412
    %2414 = vrot.lane.b32.xlu0 %v1932, 10
    %v2415 = vpop.permute.xlu0 %2414
    %2416 = vrot.lane.b32.xlu0 %v1892, 10
    %v2417 = vpop.permute.xlu0 %2416
    %2418 = vrot.lane.b32.xlu0 %v1898, 10
    %v2419 = vpop.permute.xlu0 %2418
    %2420 = vrot.lane.b32.xlu0 %v1904, 10
    %v2421 = vpop.permute.xlu0 %2420
    %2422 = vrot.lane.b32.xlu0 %v1910, 10
    %v2423 = vpop.permute.xlu0 %2422
    %2424 = vrot.lane.b32.xlu0 %v1916, 10
    %v2425 = vpop.permute.xlu0 %2424
    %2426 = vrot.lane.b32.xlu0 %v1922, 10
    %v2427 = vpop.permute.xlu0 %2426
    %2428 = vrot.lane.b32.xlu0 %v1928, 10
    %v2429 = vpop.permute.xlu0 %2428
    %2430 = vrot.lane.b32.xlu0 %v1934, 10
    %v2431 = vpop.permute.xlu0 %2430
    %v2432 = vsel %vm453, %v2401, %v2417
    %v2433 = vsel %vm453, %v2403, %v2419
    %v2434 = vsel %vm453, %v2405, %v2421
    %v2435 = vsel %vm453, %v2407, %v2423
    %v2436 = vsel %vm453, %v2409, %v2425
    %v2437 = vsel %vm453, %v2411, %v2427
    %v2438 = vsel %vm453, %v2413, %v2429
    %v2439 = vsel %vm453, %v2415, %v2431
    %v2440 = vsel %vm453, %v2417, %v2401
    %v2441 = vsel %vm453, %v2419, %v2403
    %v2442 = vsel %vm453, %v2421, %v2405
    %v2443 = vsel %vm453, %v2423, %v2407
    %v2444 = vsel %vm453, %v2425, %v2409
    %v2445 = vsel %vm453, %v2427, %v2411
    %v2446 = vsel %vm453, %v2429, %v2413
    %v2447 = vsel %vm453, %v2431, %v2415
    %v2448 = vmul.f32 %v2440, %v462
    %v2449 = vmul.f32 %v2432, %v466
    %v2450 = vmul.f32 %v2441, %v462
    %v2451 = vmul.f32 %v2433, %v466
    %v2452 = vmul.f32 %v2442, %v462
    %v2453 = vmul.f32 %v2434, %v466
    %v2454 = vmul.f32 %v2443, %v462
    %v2455 = vmul.f32 %v2435, %v466
    %v2456 = vmul.f32 %v2444, %v462
    %v2457 = vmul.f32 %v2436, %v466
    %v2458 = vmul.f32 %v2445, %v462
    %v2459 = vmul.f32 %v2437, %v466
    %v2460 = vmul.f32 %v2446, %v462
    %v2461 = vmul.f32 %v2438, %v466
    %v2462 = vmul.f32 %v2447, %v462
    %v2463 = vmul.f32 %v2439, %v466
    %v2464 = vadd.f32 %v2384, %v2448
    %v2465 = vadd.f32 %v2385, %v2449
    %v2466 = vadd.f32 %v2386, %v2450
    %v2467 = vadd.f32 %v2387, %v2451
    %v2468 = vadd.f32 %v2388, %v2452
    %v2469 = vadd.f32 %v2389, %v2453
    %v2470 = vadd.f32 %v2390, %v2454
    %v2471 = vadd.f32 %v2391, %v2455
    %v2472 = vadd.f32 %v2392, %v2456
    %v2473 = vadd.f32 %v2393, %v2457
    %v2474 = vadd.f32 %v2394, %v2458
    %v2475 = vadd.f32 %v2395, %v2459
    %v2476 = vadd.f32 %v2396, %v2460
    %v2477 = vadd.f32 %v2397, %v2461
    %v2478 = vadd.f32 %v2398, %v2462
    %v2479 = vadd.f32 %v2399, %v2463
    %2480 = vrot.lane.b32.xlu0 %v1938, 9
    %v2481 = vpop.permute.xlu0 %2480
    %2482 = vrot.lane.b32.xlu0 %v1944, 9
    %v2483 = vpop.permute.xlu0 %2482
    %2484 = vrot.lane.b32.xlu0 %v1950, 9
    %v2485 = vpop.permute.xlu0 %2484
    %2486 = vrot.lane.b32.xlu0 %v1956, 9
    %v2487 = vpop.permute.xlu0 %2486
    %2488 = vrot.lane.b32.xlu0 %v1962, 9
    %v2489 = vpop.permute.xlu0 %2488
    %2490 = vrot.lane.b32.xlu0 %v1968, 9
    %v2491 = vpop.permute.xlu0 %2490
    %2492 = vrot.lane.b32.xlu0 %v1974, 9
    %v2493 = vpop.permute.xlu0 %2492
    %2494 = vrot.lane.b32.xlu0 %v1980, 9
    %v2495 = vpop.permute.xlu0 %2494
    %2496 = vrot.lane.b32.xlu0 %v1940, 9
    %v2497 = vpop.permute.xlu0 %2496
    %2498 = vrot.lane.b32.xlu0 %v1946, 9
    %v2499 = vpop.permute.xlu0 %2498
    %2500 = vrot.lane.b32.xlu0 %v1952, 9
    %v2501 = vpop.permute.xlu0 %2500
    %2502 = vrot.lane.b32.xlu0 %v1958, 9
    %v2503 = vpop.permute.xlu0 %2502
    %2504 = vrot.lane.b32.xlu0 %v1964, 9
    %v2505 = vpop.permute.xlu0 %2504
    %2506 = vrot.lane.b32.xlu0 %v1970, 9
    %v2507 = vpop.permute.xlu0 %2506
    %2508 = vrot.lane.b32.xlu0 %v1976, 9
    %v2509 = vpop.permute.xlu0 %2508
    %2510 = vrot.lane.b32.xlu0 %v1982, 9
    %v2511 = vpop.permute.xlu0 %2510
    %v2512 = vsel %vm485, %v2481, %v2497
    %v2513 = vsel %vm485, %v2483, %v2499
    %v2514 = vsel %vm485, %v2485, %v2501
    %v2515 = vsel %vm485, %v2487, %v2503
    %v2516 = vsel %vm485, %v2489, %v2505
    %v2517 = vsel %vm485, %v2491, %v2507
    %v2518 = vsel %vm485, %v2493, %v2509
    %v2519 = vsel %vm485, %v2495, %v2511
    %v2520 = vsel %vm485, %v2497, %v2481
    %v2521 = vsel %vm485, %v2499, %v2483
    %v2522 = vsel %vm485, %v2501, %v2485
    %v2523 = vsel %vm485, %v2503, %v2487
    %v2524 = vsel %vm485, %v2505, %v2489
    %v2525 = vsel %vm485, %v2507, %v2491
    %v2526 = vsel %vm485, %v2509, %v2493
    %v2527 = vsel %vm485, %v2511, %v2495
    %v2528 = vmul.f32 %v2520, %v494
    %v2529 = vmul.f32 %v2512, %v498
    %v2530 = vmul.f32 %v2521, %v494
    %v2531 = vmul.f32 %v2513, %v498
    %v2532 = vmul.f32 %v2522, %v494
    %v2533 = vmul.f32 %v2514, %v498
    %v2534 = vmul.f32 %v2523, %v494
    %v2535 = vmul.f32 %v2515, %v498
    %v2536 = vmul.f32 %v2524, %v494
    %v2537 = vmul.f32 %v2516, %v498
    %v2538 = vmul.f32 %v2525, %v494
    %v2539 = vmul.f32 %v2517, %v498
    %v2540 = vmul.f32 %v2526, %v494
    %v2541 = vmul.f32 %v2518, %v498
    %v2542 = vmul.f32 %v2527, %v494
    %v2543 = vmul.f32 %v2519, %v498
    %v2544 = vadd.f32 %v2464, %v2528
    %v2545 = vadd.f32 %v2465, %v2529
    %v2546 = vadd.f32 %v2466, %v2530
    %v2547 = vadd.f32 %v2467, %v2531
    %v2548 = vadd.f32 %v2468, %v2532
    %v2549 = vadd.f32 %v2469, %v2533
    %v2550 = vadd.f32 %v2470, %v2534
    %v2551 = vadd.f32 %v2471, %v2535
    %v2552 = vadd.f32 %v2472, %v2536
    %v2553 = vadd.f32 %v2473, %v2537
    %v2554 = vadd.f32 %v2474, %v2538
    %v2555 = vadd.f32 %v2475, %v2539
    %v2556 = vadd.f32 %v2476, %v2540
    %v2557 = vadd.f32 %v2477, %v2541
    %v2558 = vadd.f32 %v2478, %v2542
    %v2559 = vadd.f32 %v2479, %v2543
    %2560 = vrot.lane.b32.xlu0 %v1986, 1
    %v2561 = vpop.permute.xlu0 %2560
    %2562 = vrot.lane.b32.xlu0 %v1992, 1
    %v2563 = vpop.permute.xlu0 %2562
    %2564 = vrot.lane.b32.xlu0 %v1998, 1
    %v2565 = vpop.permute.xlu0 %2564
    %2566 = vrot.lane.b32.xlu0 %v2004, 1
    %v2567 = vpop.permute.xlu0 %2566
    %2568 = vrot.lane.b32.xlu0 %v2010, 1
    %v2569 = vpop.permute.xlu0 %2568
    %2570 = vrot.lane.b32.xlu0 %v2016, 1
    %v2571 = vpop.permute.xlu0 %2570
    %2572 = vrot.lane.b32.xlu0 %v2022, 1
    %v2573 = vpop.permute.xlu0 %2572
    %2574 = vrot.lane.b32.xlu0 %v2028, 1
    %v2575 = vpop.permute.xlu0 %2574
    %2576 = vrot.lane.b32.xlu0 %v1988, 1
    %v2577 = vpop.permute.xlu0 %2576
    %2578 = vrot.lane.b32.xlu0 %v1994, 1
    %v2579 = vpop.permute.xlu0 %2578
    %2580 = vrot.lane.b32.xlu0 %v2000, 1
    %v2581 = vpop.permute.xlu0 %2580
    %2582 = vrot.lane.b32.xlu0 %v2006, 1
    %v2583 = vpop.permute.xlu0 %2582
    %2584 = vrot.lane.b32.xlu0 %v2012, 1
    %v2585 = vpop.permute.xlu0 %2584
    %2586 = vrot.lane.b32.xlu0 %v2018, 1
    %v2587 = vpop.permute.xlu0 %2586
    %2588 = vrot.lane.b32.xlu0 %v2024, 1
    %v2589 = vpop.permute.xlu0 %2588
    %2590 = vrot.lane.b32.xlu0 %v2030, 1
    %v2591 = vpop.permute.xlu0 %2590
    %v2592 = vsel %vm517, %v2561, %v2577
    %v2593 = vsel %vm517, %v2563, %v2579
    %v2594 = vsel %vm517, %v2565, %v2581
    %v2595 = vsel %vm517, %v2567, %v2583
    %v2596 = vsel %vm517, %v2569, %v2585
    %v2597 = vsel %vm517, %v2571, %v2587
    %v2598 = vsel %vm517, %v2573, %v2589
    %v2599 = vsel %vm517, %v2575, %v2591
    %v2600 = vsel %vm517, %v2577, %v2561
    %v2601 = vsel %vm517, %v2579, %v2563
    %v2602 = vsel %vm517, %v2581, %v2565
    %v2603 = vsel %vm517, %v2583, %v2567
    %v2604 = vsel %vm517, %v2585, %v2569
    %v2605 = vsel %vm517, %v2587, %v2571
    %v2606 = vsel %vm517, %v2589, %v2573
    %v2607 = vsel %vm517, %v2591, %v2575
    %v2608 = vmul.f32 %v2600, %v526
    %v2609 = vmul.f32 %v2592, %v530
    %v2610 = vmul.f32 %v2601, %v526
    %v2611 = vmul.f32 %v2593, %v530
    %v2612 = vmul.f32 %v2602, %v526
    %v2613 = vmul.f32 %v2594, %v530
    %v2614 = vmul.f32 %v2603, %v526
    %v2615 = vmul.f32 %v2595, %v530
    %v2616 = vmul.f32 %v2604, %v526
    %v2617 = vmul.f32 %v2596, %v530
    %v2618 = vmul.f32 %v2605, %v526
    %v2619 = vmul.f32 %v2597, %v530
    %v2620 = vmul.f32 %v2606, %v526
    %v2621 = vmul.f32 %v2598, %v530
    %v2622 = vmul.f32 %v2607, %v526
    %v2623 = vmul.f32 %v2599, %v530
    %v2624 = vadd.f32 %v2544, %v2608
    %v2625 = vadd.f32 %v2545, %v2609
    %v2626 = vadd.f32 %v2546, %v2610
    %v2627 = vadd.f32 %v2547, %v2611
    %v2628 = vadd.f32 %v2548, %v2612
    %v2629 = vadd.f32 %v2549, %v2613
    %v2630 = vadd.f32 %v2550, %v2614
    %v2631 = vadd.f32 %v2551, %v2615
    %v2632 = vadd.f32 %v2552, %v2616
    %v2633 = vadd.f32 %v2553, %v2617
    %v2634 = vadd.f32 %v2554, %v2618
    %v2635 = vadd.f32 %v2555, %v2619
    %v2636 = vadd.f32 %v2556, %v2620
    %v2637 = vadd.f32 %v2557, %v2621
    %v2638 = vadd.f32 %v2558, %v2622
    %v2639 = vadd.f32 %v2559, %v2623
    %v2640 = vmul.f32 %v2034, %v545
    %v2641 = vmul.f32 %v2036, %v549
    %v2642 = vmul.f32 %v2040, %v545
    %v2643 = vmul.f32 %v2042, %v549
    %v2644 = vmul.f32 %v2046, %v545
    %v2645 = vmul.f32 %v2048, %v549
    %v2646 = vmul.f32 %v2052, %v545
    %v2647 = vmul.f32 %v2054, %v549
    %v2648 = vmul.f32 %v2058, %v545
    %v2649 = vmul.f32 %v2060, %v549
    %v2650 = vmul.f32 %v2064, %v545
    %v2651 = vmul.f32 %v2066, %v549
    %v2652 = vmul.f32 %v2070, %v545
    %v2653 = vmul.f32 %v2072, %v549
    %v2654 = vmul.f32 %v2076, %v545
    %v2655 = vmul.f32 %v2078, %v549
    %v2656 = vadd.f32 %v2624, %v2640
    %v2657 = vadd.f32 %v2625, %v2641
    %v2658 = vadd.f32 %v2626, %v2642
    %v2659 = vadd.f32 %v2627, %v2643
    %v2660 = vadd.f32 %v2628, %v2644
    %v2661 = vadd.f32 %v2629, %v2645
    %v2662 = vadd.f32 %v2630, %v2646
    %v2663 = vadd.f32 %v2631, %v2647
    %v2664 = vadd.f32 %v2632, %v2648
    %v2665 = vadd.f32 %v2633, %v2649
    %v2666 = vadd.f32 %v2634, %v2650
    %v2667 = vadd.f32 %v2635, %v2651
    %v2668 = vadd.f32 %v2636, %v2652
    %v2669 = vadd.f32 %v2637, %v2653
    %v2670 = vadd.f32 %v2638, %v2654
    %v2671 = vadd.f32 %v2639, %v2655
    %2672 = vrot.lane.b32.xlu0 %v2082, 127
    %v2673 = vpop.permute.xlu0 %2672
    %2674 = vrot.lane.b32.xlu0 %v2088, 127
    %v2675 = vpop.permute.xlu0 %2674
    %2676 = vrot.lane.b32.xlu0 %v2094, 127
    %v2677 = vpop.permute.xlu0 %2676
    %2678 = vrot.lane.b32.xlu0 %v2100, 127
    %v2679 = vpop.permute.xlu0 %2678
    %2680 = vrot.lane.b32.xlu0 %v2106, 127
    %v2681 = vpop.permute.xlu0 %2680
    %2682 = vrot.lane.b32.xlu0 %v2112, 127
    %v2683 = vpop.permute.xlu0 %2682
    %2684 = vrot.lane.b32.xlu0 %v2118, 127
    %v2685 = vpop.permute.xlu0 %2684
    %2686 = vrot.lane.b32.xlu0 %v2124, 127
    %v2687 = vpop.permute.xlu0 %2686
    %2688 = vrot.lane.b32.xlu0 %v2084, 127
    %v2689 = vpop.permute.xlu0 %2688
    %2690 = vrot.lane.b32.xlu0 %v2090, 127
    %v2691 = vpop.permute.xlu0 %2690
    %2692 = vrot.lane.b32.xlu0 %v2096, 127
    %v2693 = vpop.permute.xlu0 %2692
    %2694 = vrot.lane.b32.xlu0 %v2102, 127
    %v2695 = vpop.permute.xlu0 %2694
    %2696 = vrot.lane.b32.xlu0 %v2108, 127
    %v2697 = vpop.permute.xlu0 %2696
    %2698 = vrot.lane.b32.xlu0 %v2114, 127
    %v2699 = vpop.permute.xlu0 %2698
    %2700 = vrot.lane.b32.xlu0 %v2120, 127
    %v2701 = vpop.permute.xlu0 %2700
    %2702 = vrot.lane.b32.xlu0 %v2126, 127
    %v2703 = vpop.permute.xlu0 %2702
    %v2704 = vsel %vm568, %v2673, %v2689
    %v2705 = vsel %vm568, %v2675, %v2691
    %v2706 = vsel %vm568, %v2677, %v2693
    %v2707 = vsel %vm568, %v2679, %v2695
    %v2708 = vsel %vm568, %v2681, %v2697
    %v2709 = vsel %vm568, %v2683, %v2699
    %v2710 = vsel %vm568, %v2685, %v2701
    %v2711 = vsel %vm568, %v2687, %v2703
    %v2712 = vsel %vm568, %v2689, %v2673
    %v2713 = vsel %vm568, %v2691, %v2675
    %v2714 = vsel %vm568, %v2693, %v2677
    %v2715 = vsel %vm568, %v2695, %v2679
    %v2716 = vsel %vm568, %v2697, %v2681
    %v2717 = vsel %vm568, %v2699, %v2683
    %v2718 = vsel %vm568, %v2701, %v2685
    %v2719 = vsel %vm568, %v2703, %v2687
    %v2720 = vmul.f32 %v2704, %v577
    %v2721 = vmul.f32 %v2712, %v581
    %v2722 = vmul.f32 %v2705, %v577
    %v2723 = vmul.f32 %v2713, %v581
    %v2724 = vmul.f32 %v2706, %v577
    %v2725 = vmul.f32 %v2714, %v581
    %v2726 = vmul.f32 %v2707, %v577
    %v2727 = vmul.f32 %v2715, %v581
    %v2728 = vmul.f32 %v2708, %v577
    %v2729 = vmul.f32 %v2716, %v581
    %v2730 = vmul.f32 %v2709, %v577
    %v2731 = vmul.f32 %v2717, %v581
    %v2732 = vmul.f32 %v2710, %v577
    %v2733 = vmul.f32 %v2718, %v581
    %v2734 = vmul.f32 %v2711, %v577
    %v2735 = vmul.f32 %v2719, %v581
    %v2736 = vadd.f32 %v2656, %v2720
    %v2737 = vadd.f32 %v2657, %v2721
    %v2738 = vadd.f32 %v2658, %v2722
    %v2739 = vadd.f32 %v2659, %v2723
    %v2740 = vadd.f32 %v2660, %v2724
    %v2741 = vadd.f32 %v2661, %v2725
    %v2742 = vadd.f32 %v2662, %v2726
    %v2743 = vadd.f32 %v2663, %v2727
    %v2744 = vadd.f32 %v2664, %v2728
    %v2745 = vadd.f32 %v2665, %v2729
    %v2746 = vadd.f32 %v2666, %v2730
    %v2747 = vadd.f32 %v2667, %v2731
    %v2748 = vadd.f32 %v2668, %v2732
    %v2749 = vadd.f32 %v2669, %v2733
    %v2750 = vadd.f32 %v2670, %v2734
    %v2751 = vadd.f32 %v2671, %v2735
    %2752 = vrot.lane.b32.xlu0 %v2130, 119
    %v2753 = vpop.permute.xlu0 %2752
    %2754 = vrot.lane.b32.xlu0 %v2136, 119
    %v2755 = vpop.permute.xlu0 %2754
    %2756 = vrot.lane.b32.xlu0 %v2142, 119
    %v2757 = vpop.permute.xlu0 %2756
    %2758 = vrot.lane.b32.xlu0 %v2148, 119
    %v2759 = vpop.permute.xlu0 %2758
    %2760 = vrot.lane.b32.xlu0 %v2154, 119
    %v2761 = vpop.permute.xlu0 %2760
    %2762 = vrot.lane.b32.xlu0 %v2160, 119
    %v2763 = vpop.permute.xlu0 %2762
    %2764 = vrot.lane.b32.xlu0 %v2166, 119
    %v2765 = vpop.permute.xlu0 %2764
    %2766 = vrot.lane.b32.xlu0 %v2172, 119
    %v2767 = vpop.permute.xlu0 %2766
    %2768 = vrot.lane.b32.xlu0 %v2132, 119
    %v2769 = vpop.permute.xlu0 %2768
    %2770 = vrot.lane.b32.xlu0 %v2138, 119
    %v2771 = vpop.permute.xlu0 %2770
    %2772 = vrot.lane.b32.xlu0 %v2144, 119
    %v2773 = vpop.permute.xlu0 %2772
    %2774 = vrot.lane.b32.xlu0 %v2150, 119
    %v2775 = vpop.permute.xlu0 %2774
    %2776 = vrot.lane.b32.xlu0 %v2156, 119
    %v2777 = vpop.permute.xlu0 %2776
    %2778 = vrot.lane.b32.xlu0 %v2162, 119
    %v2779 = vpop.permute.xlu0 %2778
    %2780 = vrot.lane.b32.xlu0 %v2168, 119
    %v2781 = vpop.permute.xlu0 %2780
    %2782 = vrot.lane.b32.xlu0 %v2174, 119
    %v2783 = vpop.permute.xlu0 %2782
    %v2784 = vsel %vm600, %v2753, %v2769
    %v2785 = vsel %vm600, %v2755, %v2771
    %v2786 = vsel %vm600, %v2757, %v2773
    %v2787 = vsel %vm600, %v2759, %v2775
    %v2788 = vsel %vm600, %v2761, %v2777
    %v2789 = vsel %vm600, %v2763, %v2779
    %v2790 = vsel %vm600, %v2765, %v2781
    %v2791 = vsel %vm600, %v2767, %v2783
    %v2792 = vsel %vm600, %v2769, %v2753
    %v2793 = vsel %vm600, %v2771, %v2755
    %v2794 = vsel %vm600, %v2773, %v2757
    %v2795 = vsel %vm600, %v2775, %v2759
    %v2796 = vsel %vm600, %v2777, %v2761
    %v2797 = vsel %vm600, %v2779, %v2763
    %v2798 = vsel %vm600, %v2781, %v2765
    %v2799 = vsel %vm600, %v2783, %v2767
    %v2800 = vmul.f32 %v2784, %v609
    %v2801 = vmul.f32 %v2792, %v613
    %v2802 = vmul.f32 %v2785, %v609
    %v2803 = vmul.f32 %v2793, %v613
    %v2804 = vmul.f32 %v2786, %v609
    %v2805 = vmul.f32 %v2794, %v613
    %v2806 = vmul.f32 %v2787, %v609
    %v2807 = vmul.f32 %v2795, %v613
    %v2808 = vmul.f32 %v2788, %v609
    %v2809 = vmul.f32 %v2796, %v613
    %v2810 = vmul.f32 %v2789, %v609
    %v2811 = vmul.f32 %v2797, %v613
    %v2812 = vmul.f32 %v2790, %v609
    %v2813 = vmul.f32 %v2798, %v613
    %v2814 = vmul.f32 %v2791, %v609
    %v2815 = vmul.f32 %v2799, %v613
    %v2816 = vadd.f32 %v2736, %v2800
    %v2817 = vadd.f32 %v2737, %v2801
    %v2818 = vadd.f32 %v2738, %v2802
    %v2819 = vadd.f32 %v2739, %v2803
    %v2820 = vadd.f32 %v2740, %v2804
    %v2821 = vadd.f32 %v2741, %v2805
    %v2822 = vadd.f32 %v2742, %v2806
    %v2823 = vadd.f32 %v2743, %v2807
    %v2824 = vadd.f32 %v2744, %v2808
    %v2825 = vadd.f32 %v2745, %v2809
    %v2826 = vadd.f32 %v2746, %v2810
    %v2827 = vadd.f32 %v2747, %v2811
    %v2828 = vadd.f32 %v2748, %v2812
    %v2829 = vadd.f32 %v2749, %v2813
    %v2830 = vadd.f32 %v2750, %v2814
    %v2831 = vadd.f32 %v2751, %v2815
    %2832 = vrot.lane.b32.xlu0 %v2178, 118
    %v2833 = vpop.permute.xlu0 %2832
    %2834 = vrot.lane.b32.xlu0 %v2184, 118
    %v2835 = vpop.permute.xlu0 %2834
    %2836 = vrot.lane.b32.xlu0 %v2190, 118
    %v2837 = vpop.permute.xlu0 %2836
    %2838 = vrot.lane.b32.xlu0 %v2196, 118
    %v2839 = vpop.permute.xlu0 %2838
    %2840 = vrot.lane.b32.xlu0 %v2202, 118
    %v2841 = vpop.permute.xlu0 %2840
    %2842 = vrot.lane.b32.xlu0 %v2208, 118
    %v2843 = vpop.permute.xlu0 %2842
    %2844 = vrot.lane.b32.xlu0 %v2214, 118
    %v2845 = vpop.permute.xlu0 %2844
    %2846 = vrot.lane.b32.xlu0 %v2220, 118
    %v2847 = vpop.permute.xlu0 %2846
    %2848 = vrot.lane.b32.xlu0 %v2180, 118
    %v2849 = vpop.permute.xlu0 %2848
    %2850 = vrot.lane.b32.xlu0 %v2186, 118
    %v2851 = vpop.permute.xlu0 %2850
    %2852 = vrot.lane.b32.xlu0 %v2192, 118
    %v2853 = vpop.permute.xlu0 %2852
    %2854 = vrot.lane.b32.xlu0 %v2198, 118
    %v2855 = vpop.permute.xlu0 %2854
    %2856 = vrot.lane.b32.xlu0 %v2204, 118
    %v2857 = vpop.permute.xlu0 %2856
    %2858 = vrot.lane.b32.xlu0 %v2210, 118
    %v2859 = vpop.permute.xlu0 %2858
    %2860 = vrot.lane.b32.xlu0 %v2216, 118
    %v2861 = vpop.permute.xlu0 %2860
    %2862 = vrot.lane.b32.xlu0 %v2222, 118
    %v2863 = vpop.permute.xlu0 %2862
    %v2864 = vsel %vm632, %v2833, %v2849
    %v2865 = vsel %vm632, %v2835, %v2851
    %v2866 = vsel %vm632, %v2837, %v2853
    %v2867 = vsel %vm632, %v2839, %v2855
    %v2868 = vsel %vm632, %v2841, %v2857
    %v2869 = vsel %vm632, %v2843, %v2859
    %v2870 = vsel %vm632, %v2845, %v2861
    %v2871 = vsel %vm632, %v2847, %v2863
    %v2872 = vsel %vm632, %v2849, %v2833
    %v2873 = vsel %vm632, %v2851, %v2835
    %v2874 = vsel %vm632, %v2853, %v2837
    %v2875 = vsel %vm632, %v2855, %v2839
    %v2876 = vsel %vm632, %v2857, %v2841
    %v2877 = vsel %vm632, %v2859, %v2843
    %v2878 = vsel %vm632, %v2861, %v2845
    %v2879 = vsel %vm632, %v2863, %v2847
    %v2880 = vmul.f32 %v2864, %v641
    %v2881 = vmul.f32 %v2872, %v645
    %v2882 = vmul.f32 %v2865, %v641
    %v2883 = vmul.f32 %v2873, %v645
    %v2884 = vmul.f32 %v2866, %v641
    %v2885 = vmul.f32 %v2874, %v645
    %v2886 = vmul.f32 %v2867, %v641
    %v2887 = vmul.f32 %v2875, %v645
    %v2888 = vmul.f32 %v2868, %v641
    %v2889 = vmul.f32 %v2876, %v645
    %v2890 = vmul.f32 %v2869, %v641
    %v2891 = vmul.f32 %v2877, %v645
    %v2892 = vmul.f32 %v2870, %v641
    %v2893 = vmul.f32 %v2878, %v645
    %v2894 = vmul.f32 %v2871, %v641
    %v2895 = vmul.f32 %v2879, %v645
    %v2896 = vadd.f32 %v2816, %v2880
    %v2897 = vadd.f32 %v2817, %v2881
    %v2898 = vadd.f32 %v2818, %v2882
    %v2899 = vadd.f32 %v2819, %v2883
    %v2900 = vadd.f32 %v2820, %v2884
    %v2901 = vadd.f32 %v2821, %v2885
    %v2902 = vadd.f32 %v2822, %v2886
    %v2903 = vadd.f32 %v2823, %v2887
    %v2904 = vadd.f32 %v2824, %v2888
    %v2905 = vadd.f32 %v2825, %v2889
    %v2906 = vadd.f32 %v2826, %v2890
    %v2907 = vadd.f32 %v2827, %v2891
    %v2908 = vadd.f32 %v2828, %v2892
    %v2909 = vadd.f32 %v2829, %v2893
    %v2910 = vadd.f32 %v2830, %v2894
    %v2911 = vadd.f32 %v2831, %v2895
    %2912 = vrot.lane.b32.xlu0 %v2226, 117
    %v2913 = vpop.permute.xlu0 %2912
    %2914 = vrot.lane.b32.xlu0 %v2232, 117
    %v2915 = vpop.permute.xlu0 %2914
    %2916 = vrot.lane.b32.xlu0 %v2238, 117
    %v2917 = vpop.permute.xlu0 %2916
    %2918 = vrot.lane.b32.xlu0 %v2244, 117
    %v2919 = vpop.permute.xlu0 %2918
    %2920 = vrot.lane.b32.xlu0 %v2250, 117
    %v2921 = vpop.permute.xlu0 %2920
    %2922 = vrot.lane.b32.xlu0 %v2256, 117
    %v2923 = vpop.permute.xlu0 %2922
    %2924 = vrot.lane.b32.xlu0 %v2262, 117
    %v2925 = vpop.permute.xlu0 %2924
    %2926 = vrot.lane.b32.xlu0 %v2268, 117
    %v2927 = vpop.permute.xlu0 %2926
    %2928 = vrot.lane.b32.xlu0 %v2228, 117
    %v2929 = vpop.permute.xlu0 %2928
    %2930 = vrot.lane.b32.xlu0 %v2234, 117
    %v2931 = vpop.permute.xlu0 %2930
    %2932 = vrot.lane.b32.xlu0 %v2240, 117
    %v2933 = vpop.permute.xlu0 %2932
    %2934 = vrot.lane.b32.xlu0 %v2246, 117
    %v2935 = vpop.permute.xlu0 %2934
    %2936 = vrot.lane.b32.xlu0 %v2252, 117
    %v2937 = vpop.permute.xlu0 %2936
    %2938 = vrot.lane.b32.xlu0 %v2258, 117
    %v2939 = vpop.permute.xlu0 %2938
    %2940 = vrot.lane.b32.xlu0 %v2264, 117
    %v2941 = vpop.permute.xlu0 %2940
    %2942 = vrot.lane.b32.xlu0 %v2270, 117
    %v2943 = vpop.permute.xlu0 %2942
    %v2944 = vsel %vm664, %v2913, %v2929
    %v2945 = vsel %vm664, %v2915, %v2931
    %v2946 = vsel %vm664, %v2917, %v2933
    %v2947 = vsel %vm664, %v2919, %v2935
    %v2948 = vsel %vm664, %v2921, %v2937
    %v2949 = vsel %vm664, %v2923, %v2939
    %v2950 = vsel %vm664, %v2925, %v2941
    %v2951 = vsel %vm664, %v2927, %v2943
    %v2952 = vsel %vm664, %v2929, %v2913
    %v2953 = vsel %vm664, %v2931, %v2915
    %v2954 = vsel %vm664, %v2933, %v2917
    %v2955 = vsel %vm664, %v2935, %v2919
    %v2956 = vsel %vm664, %v2937, %v2921
    %v2957 = vsel %vm664, %v2939, %v2923
    %v2958 = vsel %vm664, %v2941, %v2925
    %v2959 = vsel %vm664, %v2943, %v2927
    %v2960 = vmul.f32 %v2944, %v673
    %v2961 = vmul.f32 %v2952, %v677
    %v2962 = vmul.f32 %v2945, %v673
    %v2963 = vmul.f32 %v2953, %v677
    %v2964 = vmul.f32 %v2946, %v673
    %v2965 = vmul.f32 %v2954, %v677
    %v2966 = vmul.f32 %v2947, %v673
    %v2967 = vmul.f32 %v2955, %v677
    %v2968 = vmul.f32 %v2948, %v673
    %v2969 = vmul.f32 %v2956, %v677
    %v2970 = vmul.f32 %v2949, %v673
    %v2971 = vmul.f32 %v2957, %v677
    %v2972 = vmul.f32 %v2950, %v673
    %v2973 = vmul.f32 %v2958, %v677
    %v2974 = vmul.f32 %v2951, %v673
    %v2975 = vmul.f32 %v2959, %v677
    %v2976 = vadd.f32 %v2896, %v2960
    %v2977 = vadd.f32 %v2897, %v2961
    %v2978 = vadd.f32 %v2898, %v2962
    %v2979 = vadd.f32 %v2899, %v2963
    %v2980 = vadd.f32 %v2900, %v2964
    %v2981 = vadd.f32 %v2901, %v2965
    %v2982 = vadd.f32 %v2902, %v2966
    %v2983 = vadd.f32 %v2903, %v2967
    %v2984 = vadd.f32 %v2904, %v2968
    %v2985 = vadd.f32 %v2905, %v2969
    %v2986 = vadd.f32 %v2906, %v2970
    %v2987 = vadd.f32 %v2907, %v2971
    %v2988 = vadd.f32 %v2908, %v2972
    %v2989 = vadd.f32 %v2909, %v2973
    %v2990 = vadd.f32 %v2910, %v2974
    %v2991 = vadd.f32 %v2911, %v2975
    %v2992 = vld [vmem:[%s11] sm:$0xff]
    %v2993 = vld [vmem:[%s11 + $0x8] sm:$0xff]
    %v2994 = vld [vmem:[%s11 + $0x10] sm:$0xff]
    %v2995 = vld [vmem:[%s11 + $0x18] sm:$0xff]
    %v2996 = vld [vmem:[%s11 + $0x20] sm:$0xff]
    %v2997 = vld [vmem:[%s11 + $0x28] sm:$0xff]
    %v2998 = vld [vmem:[%s11 + $0x30] sm:$0xff]
    %v2999 = vld [vmem:[%s11 + $0x38] sm:$0xff]
    %v3000 = vld [vmem:[%s3] sm:$0xff]
    %v3001 = vld [vmem:[%s3 + $0x8] sm:$0xff]
    %v3002 = vld [vmem:[%s3 + $0x10] sm:$0xff]
    %v3003 = vld [vmem:[%s3 + $0x18] sm:$0xff]
    %v3004 = vld [vmem:[%s13] sm:$0xff]
    %v3005 = vld [vmem:[%s13 + $0x8] sm:$0xff]
    %v3006 = vld [vmem:[%s13 + $0x10] sm:$0xff]
    %v3007 = vld [vmem:[%s13 + $0x18] sm:$0xff]
    %v3008 = vld [vmem:[%s13 + $0x20] sm:$0xff]
    %v3009 = vld [vmem:[%s13 + $0x28] sm:$0xff]
    %v3010 = vld [vmem:[%s13 + $0x30] sm:$0xff]
    %v3011 = vld [vmem:[%s13 + $0x38] sm:$0xff]
    %3013 = vset.pattern.permute.xlu0 0
    %3014 = vperm.xlu0 %3013, %v3004
    %v3015 = vpop.permute.xlu0 %3014
    %3018 = vset.pattern.permute.xlu0 0
    %3019 = vperm.xlu0 %3018, %v3005
    %v3020 = vpop.permute.xlu0 %3019
    %3023 = vset.pattern.permute.xlu0 0
    %3024 = vperm.xlu0 %3023, %v3006
    %v3025 = vpop.permute.xlu0 %3024
    %3028 = vset.pattern.permute.xlu0 0
    %3029 = vperm.xlu0 %3028, %v3007
    %v3030 = vpop.permute.xlu0 %3029
    %3033 = vset.pattern.permute.xlu0 0
    %3034 = vperm.xlu0 %3033, %v3008
    %v3035 = vpop.permute.xlu0 %3034
    %3038 = vset.pattern.permute.xlu0 0
    %3039 = vperm.xlu0 %3038, %v3009
    %v3040 = vpop.permute.xlu0 %3039
    %3043 = vset.pattern.permute.xlu0 0
    %3044 = vperm.xlu0 %3043, %v3010
    %v3045 = vpop.permute.xlu0 %3044
    %3048 = vset.pattern.permute.xlu0 0
    %3049 = vperm.xlu0 %3048, %v3011
    %v3050 = vpop.permute.xlu0 %3049
    %v3053 = vsel %vm1558, %v2992, 0
    %v3056 = vsel %vm1558, %v2993, 0
    %v3059 = vsel %vm1558, %v2994, 0
    %v3062 = vsel %vm1558, %v2995, 0
    %v3065 = vsel %vm1558, %v2996, 0
    %v3068 = vsel %vm1558, %v2997, 0
    %v3071 = vsel %vm1558, %v2998, 0
    %v3074 = vsel %vm1558, %v2999, 0
    %3076 = vmatprep.subr.mxu0 0.0
    %3077 = vmatpush1.msra.mxu0 0.0
    %3078 = vmatprep.subr.mxu0 0.0
    %3079 = vmatpush1.msra.mxu0 0.0
    %3080 = vmatprep.subr.mxu0 0.0
    %3081 = vmatpush1.msra.mxu0 0.0
    %3082 = vmatprep.subr.mxu0 0.0
    %3083 = vmatpush1.msra.mxu0 0.0
    %3084 = vmatprep.subr.mxu0 0.0
    %3085 = vmatpush1.msra.mxu0 0.0
    %3086 = vmatprep.subr.mxu0 0.0
    %3087 = vmatpush1.msra.mxu0 0.0
    %3088 = vmatprep.subr.mxu0 0.0
    %3089 = vmatpush1.msra.mxu0 0.0
    %3090 = vmatprep.subr.mxu0 0.0
    %3091 = vmatpush1.msra.mxu0 0.0
    %3092 = vmatprep.subr.mxu0 0.0
    %3093 = vmatpush1.msra.mxu0 0.0
    %3094 = vmatprep.subr.mxu0 0.0
    %3095 = vmatpush1.msra.mxu0 0.0
    %3096 = vmatprep.subr.mxu0 0.0
    %3097 = vmatpush1.msra.mxu0 0.0
    %3098 = vmatprep.subr.mxu0 0.0
    %3099 = vmatpush1.msra.mxu0 0.0
    %3100 = vmatprep.subr.mxu0 0.0
    %3101 = vmatpush1.msra.mxu0 %v3003
    %3102 = vmatprep.subr.mxu0 0.0
    %3103 = vmatpush1.msra.mxu0 %v3002
    %3104 = vmatprep.subr.mxu0 0.0
    %3105 = vmatpush1.msra.mxu0 %v3001
    %3106 = vmatprep.subr.mxu0 0.0
    %3107 = vmatpush1.msra.mxu0 %v3000
    %3108 = vmatprep.subr.mxu0 0.0
    %3109 = vmatpush2.msra.mxu0 0.0
    %3110 = vmatprep.subr.mxu0 0.0
    %3111 = vmatpush2.msra.mxu0 0.0
    %3112 = vmatprep.subr.mxu0 0.0
    %3113 = vmatpush2.msra.mxu0 0.0
    %3114 = vmatprep.subr.mxu0 0.0
    %3115 = vmatpush2.msra.mxu0 0.0
    %3116 = vmatprep.subr.mxu0 0.0
    %3117 = vmatpush2.msra.mxu0 0.0
    %3118 = vmatprep.subr.mxu0 0.0
    %3119 = vmatpush2.msra.mxu0 0.0
    %3120 = vmatprep.subr.mxu0 0.0
    %3121 = vmatpush2.msra.mxu0 0.0
    %3122 = vmatprep.subr.mxu0 0.0
    %3123 = vmatpush2.msra.mxu0 0.0
    %3124 = vmatprep.subr.mxu0 0.0
    %3125 = vmatpush2.msra.mxu0 0.0
    %3126 = vmatprep.subr.mxu0 0.0
    %3127 = vmatpush2.msra.mxu0 0.0
    %3128 = vmatprep.subr.mxu0 0.0
    %3129 = vmatpush2.msra.mxu0 0.0
    %3130 = vmatprep.subr.mxu0 0.0
    %3131 = vmatpush2.msra.mxu0 0.0
    %3132 = vmatprep.subr.mxu0 0.0
    %3133 = vmatpush2.msra.mxu0 0.0
    %3134 = vmatprep.subr.mxu0 0.0
    %3135 = vmatpush2.msra.mxu0 0.0
    %3136 = vmatprep.subr.mxu0 0.0
    %3137 = vmatpush2.msra.mxu0 0.0
    %3138 = vmatprep.subr.mxu0 0.0
    %3139 = vmatpush2.msra.mxu0 0.0
    %3140 = vmatprep.mubr.f32.mxu0 0.0
    %3141 = vmatmul.mubr.f32.gmra.mxu0 %v3053
    %v3142 = vpop.f32.mrf.mxu0
    %v3143 = vadd.f32 %v3015, %v3142
    %v3144 = vpop.f32.mrf.mxu0
    %3145 = vmatprep.mubr.f32.mxu0 0.0
    %3146 = vmatmul.mubr.f32.gmra.mxu0 %v3056
    %v3147 = vpop.f32.mrf.mxu0
    %v3148 = vadd.f32 %v3020, %v3147
    %v3149 = vpop.f32.mrf.mxu0
    %3150 = vmatprep.mubr.f32.mxu0 0.0
    %3151 = vmatmul.mubr.f32.gmra.mxu0 %v3059
    %v3152 = vpop.f32.mrf.mxu0
    %v3153 = vadd.f32 %v3025, %v3152
    %v3154 = vpop.f32.mrf.mxu0
    %3155 = vmatprep.mubr.f32.mxu0 0.0
    %3156 = vmatmul.mubr.f32.gmra.mxu0 %v3062
    %v3157 = vpop.f32.mrf.mxu0
    %v3158 = vadd.f32 %v3030, %v3157
    %v3159 = vpop.f32.mrf.mxu0
    %3160 = vmatprep.mubr.f32.mxu0 0.0
    %3161 = vmatmul.mubr.f32.gmra.mxu0 %v3065
    %v3162 = vpop.f32.mrf.mxu0
    %v3163 = vadd.f32 %v3035, %v3162
    %v3164 = vpop.f32.mrf.mxu0
    %3165 = vmatprep.mubr.f32.mxu0 0.0
    %3166 = vmatmul.mubr.f32.gmra.mxu0 %v3068
    %v3167 = vpop.f32.mrf.mxu0
    %v3168 = vadd.f32 %v3040, %v3167
    %v3169 = vpop.f32.mrf.mxu0
    %3170 = vmatprep.mubr.f32.mxu0 0.0
    %3171 = vmatmul.mubr.f32.gmra.mxu0 %v3071
    %v3172 = vpop.f32.mrf.mxu0
    %v3173 = vadd.f32 %v3045, %v3172
    %v3174 = vpop.f32.mrf.mxu0
    %3175 = vmatprep.mubr.f32.mxu0 0.0
    %3176 = vmatmul.mubr.f32.gmra.mxu0 %v3074
    %v3177 = vpop.f32.mrf.mxu0
    %v3178 = vadd.f32 %v3050, %v3177
    %v3179 = vpop.f32.mrf.mxu0
    %3180 = vdwg.mxu0
    %v3181 = vld [vmem:[%s7] sm:$0xf]
    %v3184 = vunpack.c.l.s4 1983009808
    %v3185 = vunpack.c.0.s8 %v3184
    %v3186 = vlaneseq
    %v3187 = vshrl.u32 %v3186, 7
    %v3188 = vsub.s32 %v3185, %v3187
    %v3189 = vrot.slane %v3181, %v3188
    %v3190 = vcombine.high %v3189, %v3189
    %vm3191 = vcmask 15360
    %v3193 = vsel %vm3191, %v3143, 0
    %v3196 = vsel %vm3191, %v3148, 0
    %v3199 = vsel %vm3191, %v3153, 0
    %v3202 = vsel %vm3191, %v3158, 0
    %v3205 = vsel %vm3191, %v3163, 0
    %v3208 = vsel %vm3191, %v3168, 0
    %v3211 = vsel %vm3191, %v3173, 0
    %v3214 = vsel %vm3191, %v3178, 0
    %vm3216 = vcmask 1041408
    %v3217 = vsel %vm3216, %v3189, 0
    %v3219 = vsel %vm3216, %v3190, 0
    %3221 = vmatprep.subr.mxu0 0.0
    %3222 = vmatpush1.msra.mxu0 0.0
    %3223 = vmatprep.subr.mxu0 0.0
    %3224 = vmatpush1.msra.mxu0 0.0
    %3225 = vmatprep.subr.mxu0 0.0
    %3226 = vmatpush1.msra.mxu0 0.0
    %3227 = vmatprep.subr.mxu0 0.0
    %3228 = vmatpush1.msra.mxu0 0.0
    %3229 = vmatprep.subr.mxu0 0.0
    %3230 = vmatpush1.msra.mxu0 0.0
    %3231 = vmatprep.subr.mxu0 0.0
    %3232 = vmatpush1.msra.mxu0 0.0
    %3233 = vmatprep.subr.mxu0 0.0
    %3234 = vmatpush1.msra.mxu0 0.0
    %3235 = vmatprep.subr.mxu0 0.0
    %3236 = vmatpush1.msra.mxu0 0.0
    %3237 = vmatprep.subr.mxu0 0.0
    %3238 = vmatpush1.msra.mxu0 0.0
    %3239 = vmatprep.subr.mxu0 0.0
    %3240 = vmatpush1.msra.mxu0 0.0
    %3241 = vmatprep.subr.mxu0 0.0
    %3242 = vmatpush1.msra.mxu0 0.0
    %3243 = vmatprep.subr.mxu0 0.0
    %3244 = vmatpush1.msra.mxu0 0.0
    %3245 = vmatprep.subr.mxu0 0.0
    %3246 = vmatpush1.msra.mxu0 0.0
    %3247 = vmatprep.subr.mxu0 0.0
    %3248 = vmatpush1.msra.mxu0 0.0
    %3249 = vmatprep.subr.mxu0 0.0
    %3250 = vmatpush1.msra.mxu0 0.0
    %3251 = vmatprep.subr.mxu0 %v3219
    %3252 = vmatpush1.msra.mxu0 %v3217
    %3253 = vmatprep.subr.mxu0 0.0
    %3254 = vmatpush2.msra.mxu0 0.0
    %3255 = vmatprep.subr.mxu0 0.0
    %3256 = vmatpush2.msra.mxu0 0.0
    %3257 = vmatprep.subr.mxu0 0.0
    %3258 = vmatpush2.msra.mxu0 0.0
    %3259 = vmatprep.subr.mxu0 0.0
    %3260 = vmatpush2.msra.mxu0 0.0
    %3261 = vmatprep.subr.mxu0 0.0
    %3262 = vmatpush2.msra.mxu0 0.0
    %3263 = vmatprep.subr.mxu0 0.0
    %3264 = vmatpush2.msra.mxu0 0.0
    %3265 = vmatprep.subr.mxu0 0.0
    %3266 = vmatpush2.msra.mxu0 0.0
    %3267 = vmatprep.subr.mxu0 0.0
    %3268 = vmatpush2.msra.mxu0 0.0
    %3269 = vmatprep.subr.mxu0 0.0
    %3270 = vmatpush2.msra.mxu0 0.0
    %3271 = vmatprep.subr.mxu0 0.0
    %3272 = vmatpush2.msra.mxu0 0.0
    %3273 = vmatprep.subr.mxu0 0.0
    %3274 = vmatpush2.msra.mxu0 0.0
    %3275 = vmatprep.subr.mxu0 0.0
    %3276 = vmatpush2.msra.mxu0 0.0
    %3277 = vmatprep.subr.mxu0 0.0
    %3278 = vmatpush2.msra.mxu0 0.0
    %3279 = vmatprep.subr.mxu0 0.0
    %3280 = vmatpush2.msra.mxu0 0.0
    %3281 = vmatprep.subr.mxu0 0.0
    %3282 = vmatpush2.msra.mxu0 0.0
    %3283 = vmatprep.subr.mxu0 0.0
    %3284 = vmatpush2.msra.mxu0 0.0
    %3285 = vmatprep.mubr.f32.mxu0 0.0
    %3286 = vmatmul.mubr.f32.gmra.mxu0 %v3193
    %v3287 = vpop.f32.mrf.mxu0
    %v3288 = vadd.f32 0.0, %v3287
    %v3289 = vpop.f32.mrf.mxu0
    %v3290 = vadd.f32 0.0, %v3289
    %3291 = vmatprep.mubr.f32.mxu0 0.0
    %3292 = vmatmul.mubr.f32.gmra.mxu0 %v3196
    %v3293 = vpop.f32.mrf.mxu0
    %v3294 = vadd.f32 0.0, %v3293
    %v3295 = vpop.f32.mrf.mxu0
    %v3296 = vadd.f32 0.0, %v3295
    %3297 = vmatprep.mubr.f32.mxu0 0.0
    %3298 = vmatmul.mubr.f32.gmra.mxu0 %v3199
    %v3299 = vpop.f32.mrf.mxu0
    %v3300 = vadd.f32 0.0, %v3299
    %v3301 = vpop.f32.mrf.mxu0
    %v3302 = vadd.f32 0.0, %v3301
    %3303 = vmatprep.mubr.f32.mxu0 0.0
    %3304 = vmatmul.mubr.f32.gmra.mxu0 %v3202
    %v3305 = vpop.f32.mrf.mxu0
    %v3306 = vadd.f32 0.0, %v3305
    %v3307 = vpop.f32.mrf.mxu0
    %v3308 = vadd.f32 0.0, %v3307
    %3309 = vmatprep.mubr.f32.mxu0 0.0
    %3310 = vmatmul.mubr.f32.gmra.mxu0 %v3205
    %v3311 = vpop.f32.mrf.mxu0
    %v3312 = vadd.f32 0.0, %v3311
    %v3313 = vpop.f32.mrf.mxu0
    %v3314 = vadd.f32 0.0, %v3313
    %3315 = vmatprep.mubr.f32.mxu0 0.0
    %3316 = vmatmul.mubr.f32.gmra.mxu0 %v3208
    %v3317 = vpop.f32.mrf.mxu0
    %v3318 = vadd.f32 0.0, %v3317
    %v3319 = vpop.f32.mrf.mxu0
    %v3320 = vadd.f32 0.0, %v3319
    %3321 = vmatprep.mubr.f32.mxu0 0.0
    %3322 = vmatmul.mubr.f32.gmra.mxu0 %v3211
    %v3323 = vpop.f32.mrf.mxu0
    %v3324 = vadd.f32 0.0, %v3323
    %v3325 = vpop.f32.mrf.mxu0
    %v3326 = vadd.f32 0.0, %v3325
    %3327 = vmatprep.mubr.f32.mxu0 0.0
    %3328 = vmatmul.mubr.f32.gmra.mxu0 %v3214
    %v3329 = vpop.f32.mrf.mxu0
    %v3330 = vadd.f32 0.0, %v3329
    %v3331 = vpop.f32.mrf.mxu0
    %v3332 = vadd.f32 0.0, %v3331
    %3333 = vdwg.mxu0
    %v3334 = vmul.f32 %v2976, %v3288
    %v3335 = vmul.f32 %v2977, %v3290
    %v3336 = vmul.f32 %v2978, %v3294
    %v3337 = vmul.f32 %v2979, %v3296
    %v3338 = vmul.f32 %v2980, %v3300
    %v3339 = vmul.f32 %v2981, %v3302
    %v3340 = vmul.f32 %v2982, %v3306
    %v3341 = vmul.f32 %v2983, %v3308
    %v3342 = vmul.f32 %v2984, %v3312
    %v3343 = vmul.f32 %v2985, %v3314
    %v3344 = vmul.f32 %v2986, %v3318
    %v3345 = vmul.f32 %v2987, %v3320
    %v3346 = vmul.f32 %v2988, %v3324
    %v3347 = vmul.f32 %v2989, %v3326
    %v3348 = vmul.f32 %v2990, %v3330
    %v3349 = vmul.f32 %v2991, %v3332
    %v3350 = vadd.f32 %v3334, %v3336
    %v3351 = vadd.f32 %v3350, %v3338
    %v3352 = vadd.f32 %v3351, %v3340
    %v3353 = vadd.f32 %v3352, %v3342
    %v3354 = vadd.f32 %v3353, %v3344
    %v3355 = vadd.f32 %v3354, %v3346
    %v3356 = vadd.f32 %v3355, %v3348
    %v3357 = vrot.slane %v3356, 4
    %v3358 = vadd.f32 %v3356, %v3357
    %v3359 = vrot.slane %v3358, 2
    %v3360 = vadd.f32 %v3358, %v3359
    %v3361 = vrot.slane %v3360, 1
    %v3362 = vadd.f32 %v3360, %v3361
    %v3363 = vadd.f32 %v3335, %v3337
    %v3364 = vadd.f32 %v3363, %v3339
    %v3365 = vadd.f32 %v3364, %v3341
    %v3366 = vadd.f32 %v3365, %v3343
    %v3367 = vadd.f32 %v3366, %v3345
    %v3368 = vadd.f32 %v3367, %v3347
    %v3369 = vadd.f32 %v3368, %v3349
    %v3370 = vrot.slane %v3369, 4
    %v3371 = vadd.f32 %v3369, %v3370
    %v3372 = vrot.slane %v3371, 2
    %v3373 = vadd.f32 %v3371, %v3372
    %v3374 = vrot.slane %v3373, 1
    %v3375 = vadd.f32 %v3373, %v3374
    %v3376 = vmul.f32 %v3362, 0.125
    %v3377 = vmul.f32 %v3375, 0.125
    %vm3378 = vcmp.gt.f32.partialorder %v136, 0.5
    %v3381 = vcombine.low %v3376, %v3377
    %v3383 = vunpack.c.l.s4 1966171168
    %v3384 = vunpack.c.0.s8 %v3383
    %v3385 = vlaneseq
    %v3386 = vshrl.u32 %v3385, 7
    %v3387 = vsub.s32 %v3384, %v3386
    %v3388 = vrot.slane %v3381, %v3387
    %v3390 = vunpack.c.l.s4 1966171168
    %v3391 = vunpack.c.0.s8 %v3390
    %v3392 = vlaneseq
    %v3393 = vshrl.u32 %v3392, 7
    %v3394 = vsub.s32 %v3391, %v3393
    %v3395 = vrot.slane %v3388, %v3394
    %v3397 = vsel %vm3378, %v3395, -1e+30
    %v3399 = vlaneseq
    %v3400 = vshrl.u32 %v3399, 7
    %v3401 = vsub.s32 0, %v3400
    %v3402 = vrot.slane %v3397, %v3401
    %v3403 = vlaneseq
    %v3404 = vshrl.u32 %v3403, 7
    %v3405 = vsub.s32 1, %v3404
    %v3406 = vrot.slane %v3397, %v3405
    %vm3409 = vcmask 1040384
    %v3410 = vsel %vm3409, %v3402, -inf
    %v3411 = vsel %vm3409, %v3406, -inf
    %v3412 = vmax.f32 %v3410, %v3411
    %3413 = vmax.xlane.f32.xlu0 %v3412
    %v3414 = vpop.xlane.xlu0 %3413
    %v3416 = vlaneseq
    %v3417 = vshrl.u32 %v3416, 7
    %v3418 = vsub.s32 0, %v3417
    %v3419 = vrot.slane %v3414, %v3418
    %v3421 = vsub.f32 %v3397, %v3419
    %v3422 = vmul.f32 %v3421, 1.442695
    %v3423 = vpow.pop %v3422
    %v3424 = vld [vmem:[%s9] sm:$0xff]
    %v3425 = vld [vmem:[%s9 + $0x8] sm:$0xff]
    %v3426 = vld [vmem:[%s9 + $0x10] sm:$0xff]
    %v3427 = vld [vmem:[%s9 + $0x18] sm:$0xff]
    %v3428 = vld [vmem:[%s9 + $0x20] sm:$0xff]
    %v3429 = vld [vmem:[%s9 + $0x28] sm:$0xff]
    %v3430 = vld [vmem:[%s9 + $0x30] sm:$0xff]
    %v3431 = vld [vmem:[%s9 + $0x38] sm:$0xff]
    %v3432 = vld [vmem:[%s9 + $0x40] sm:$0xff]
    %v3433 = vld [vmem:[%s9 + $0x48] sm:$0xff]
    %v3434 = vld [vmem:[%s9 + $0x50] sm:$0xff]
    %v3435 = vld [vmem:[%s9 + $0x58] sm:$0xff]
    %v3436 = vld [vmem:[%s9 + $0x60] sm:$0xff]
    %v3437 = vld [vmem:[%s9 + $0x68] sm:$0xff]
    %v3438 = vld [vmem:[%s9 + $0x70] sm:$0xff]
    %v3439 = vld [vmem:[%s9 + $0x78] sm:$0xff]
    %v3440 = vld [vmem:[%s9 + $0x80] sm:$0xff]
    %v3441 = vld [vmem:[%s9 + $0x88] sm:$0xff]
    %v3442 = vld [vmem:[%s9 + $0x90] sm:$0xff]
    %v3443 = vld [vmem:[%s9 + $0x98] sm:$0xff]
    %v3444 = vld [vmem:[%s9 + $0xa0] sm:$0xff]
    %v3445 = vld [vmem:[%s9 + $0xa8] sm:$0xff]
    %v3446 = vld [vmem:[%s9 + $0xb0] sm:$0xff]
    %v3447 = vld [vmem:[%s9 + $0xb8] sm:$0xff]
    %v3448 = vld [vmem:[%s9 + $0xc0] sm:$0xff]
    %v3449 = vld [vmem:[%s9 + $0xc8] sm:$0xff]
    %v3450 = vld [vmem:[%s9 + $0xd0] sm:$0xff]
    %v3451 = vld [vmem:[%s9 + $0xd8] sm:$0xff]
    %v3452 = vld [vmem:[%s9 + $0xe0] sm:$0xff]
    %v3453 = vld [vmem:[%s9 + $0xe8] sm:$0xff]
    %v3454 = vld [vmem:[%s9 + $0xf0] sm:$0xff]
    %v3455 = vld [vmem:[%s9 + $0xf8] sm:$0xff]
    %v3457 = vlaneseq
    %v3458 = vshrl.u32 %v3457, 7
    %v3459 = vsub.s32 0, %v3458
    %v3460 = vrot.slane %v3423, %v3459
    %v3461 = vlaneseq
    %v3462 = vshrl.u32 %v3461, 7
    %v3463 = vsub.s32 1, %v3462
    %v3464 = vrot.slane %v3423, %v3463
    %3467 = vmatprep.subr.mxu0 0.0
    %3468 = vmatpush1.msra.mxu0 %v3439
    %3469 = vmatprep.subr.mxu0 0.0
    %3470 = vmatpush1.msra.mxu0 %v3438
    %3471 = vmatprep.subr.mxu0 0.0
    %3472 = vmatpush1.msra.mxu0 %v3437
    %3473 = vmatprep.subr.mxu0 0.0
    %3474 = vmatpush1.msra.mxu0 %v3436
    %3475 = vmatprep.subr.mxu0 0.0
    %3476 = vmatpush1.msra.mxu0 %v3435
    %3477 = vmatprep.subr.mxu0 0.0
    %3478 = vmatpush1.msra.mxu0 %v3434
    %3479 = vmatprep.subr.mxu0 0.0
    %3480 = vmatpush1.msra.mxu0 %v3433
    %3481 = vmatprep.subr.mxu0 0.0
    %3482 = vmatpush1.msra.mxu0 %v3432
    %3483 = vmatprep.subr.mxu0 0.0
    %3484 = vmatpush1.msra.mxu0 %v3431
    %3485 = vmatprep.subr.mxu0 0.0
    %3486 = vmatpush1.msra.mxu0 %v3430
    %3487 = vmatprep.subr.mxu0 0.0
    %3488 = vmatpush1.msra.mxu0 %v3429
    %3489 = vmatprep.subr.mxu0 0.0
    %3490 = vmatpush1.msra.mxu0 %v3428
    %3491 = vmatprep.subr.mxu0 0.0
    %3492 = vmatpush1.msra.mxu0 %v3427
    %3493 = vmatprep.subr.mxu0 0.0
    %3494 = vmatpush1.msra.mxu0 %v3426
    %3495 = vmatprep.subr.mxu0 0.0
    %3496 = vmatpush1.msra.mxu0 %v3425
    %3497 = vmatprep.subr.mxu0 0.0
    %3498 = vmatpush1.msra.mxu0 %v3424
    %3499 = vmatprep.subr.mxu0 0.0
    %3500 = vmatpush2.msra.mxu0 %v3455
    %3501 = vmatprep.subr.mxu0 0.0
    %3502 = vmatpush2.msra.mxu0 %v3454
    %3503 = vmatprep.subr.mxu0 0.0
    %3504 = vmatpush2.msra.mxu0 %v3453
    %3505 = vmatprep.subr.mxu0 0.0
    %3506 = vmatpush2.msra.mxu0 %v3452
    %3507 = vmatprep.subr.mxu0 0.0
    %3508 = vmatpush2.msra.mxu0 %v3451
    %3509 = vmatprep.subr.mxu0 0.0
    %3510 = vmatpush2.msra.mxu0 %v3450
    %3511 = vmatprep.subr.mxu0 0.0
    %3512 = vmatpush2.msra.mxu0 %v3449
    %3513 = vmatprep.subr.mxu0 0.0
    %3514 = vmatpush2.msra.mxu0 %v3448
    %3515 = vmatprep.subr.mxu0 0.0
    %3516 = vmatpush2.msra.mxu0 %v3447
    %3517 = vmatprep.subr.mxu0 0.0
    %3518 = vmatpush2.msra.mxu0 %v3446
    %3519 = vmatprep.subr.mxu0 0.0
    %3520 = vmatpush2.msra.mxu0 %v3445
    %3521 = vmatprep.subr.mxu0 0.0
    %3522 = vmatpush2.msra.mxu0 %v3444
    %3523 = vmatprep.subr.mxu0 0.0
    %3524 = vmatpush2.msra.mxu0 %v3443
    %3525 = vmatprep.subr.mxu0 0.0
    %3526 = vmatpush2.msra.mxu0 %v3442
    %3527 = vmatprep.subr.mxu0 0.0
    %3528 = vmatpush2.msra.mxu0 %v3441
    %3529 = vmatprep.subr.mxu0 0.0
    %3530 = vmatpush2.msra.mxu0 %v3440
    %3531 = vmatprep.mubr.f32.mxu0 %v3464
    %3532 = vmatmul.mubr.f32.gmra.mxu0 %v3460
    %v3533 = vpop.f32.mrf.mxu0
    %v3534 = vadd.f32 0.0, %v3533
    %v3535 = vpop.f32.mrf.mxu0
    %3536 = vdwg.mxu0
    %v3538 = vsel %vm3191, %v3534, 0
    %3540 = vmatprep.subr.mxu0 0.0
    %3541 = vmatpush1.msra.mxu0 0.0
    %3542 = vmatprep.subr.mxu0 0.0
    %3543 = vmatpush1.msra.mxu0 0.0
    %3544 = vmatprep.subr.mxu0 0.0
    %3545 = vmatpush1.msra.mxu0 0.0
    %3546 = vmatprep.subr.mxu0 0.0
    %3547 = vmatpush1.msra.mxu0 0.0
    %3548 = vmatprep.subr.mxu0 0.0
    %3549 = vmatpush1.msra.mxu0 0.0
    %3550 = vmatprep.subr.mxu0 0.0
    %3551 = vmatpush1.msra.mxu0 0.0
    %3552 = vmatprep.subr.mxu0 0.0
    %3553 = vmatpush1.msra.mxu0 0.0
    %3554 = vmatprep.subr.mxu0 0.0
    %3555 = vmatpush1.msra.mxu0 0.0
    %3556 = vmatprep.subr.mxu0 0.0
    %3557 = vmatpush1.msra.mxu0 0.0
    %3558 = vmatprep.subr.mxu0 0.0
    %3559 = vmatpush1.msra.mxu0 0.0
    %3560 = vmatprep.subr.mxu0 0.0
    %3561 = vmatpush1.msra.mxu0 0.0
    %3562 = vmatprep.subr.mxu0 0.0
    %3563 = vmatpush1.msra.mxu0 0.0
    %3564 = vmatprep.subr.mxu0 0.0
    %3565 = vmatpush1.msra.mxu0 0.0
    %3566 = vmatprep.subr.mxu0 0.0
    %3567 = vmatpush1.msra.mxu0 0.0
    %3568 = vmatprep.subr.mxu0 0.0
    %3569 = vmatpush1.msra.mxu0 0.0
    %3570 = vmatprep.subr.mxu0 %v3219
    %3571 = vmatpush1.msra.mxu0 %v3217
    %3572 = vmatprep.subr.mxu0 0.0
    %3573 = vmatpush2.msra.mxu0 0.0
    %3574 = vmatprep.subr.mxu0 0.0
    %3575 = vmatpush2.msra.mxu0 0.0
    %3576 = vmatprep.subr.mxu0 0.0
    %3577 = vmatpush2.msra.mxu0 0.0
    %3578 = vmatprep.subr.mxu0 0.0
    %3579 = vmatpush2.msra.mxu0 0.0
    %3580 = vmatprep.subr.mxu0 0.0
    %3581 = vmatpush2.msra.mxu0 0.0
    %3582 = vmatprep.subr.mxu0 0.0
    %3583 = vmatpush2.msra.mxu0 0.0
    %3584 = vmatprep.subr.mxu0 0.0
    %3585 = vmatpush2.msra.mxu0 0.0
    %3586 = vmatprep.subr.mxu0 0.0
    %3587 = vmatpush2.msra.mxu0 0.0
    %3588 = vmatprep.subr.mxu0 0.0
    %3589 = vmatpush2.msra.mxu0 0.0
    %3590 = vmatprep.subr.mxu0 0.0
    %3591 = vmatpush2.msra.mxu0 0.0
    %3592 = vmatprep.subr.mxu0 0.0
    %3593 = vmatpush2.msra.mxu0 0.0
    %3594 = vmatprep.subr.mxu0 0.0
    %3595 = vmatpush2.msra.mxu0 0.0
    %3596 = vmatprep.subr.mxu0 0.0
    %3597 = vmatpush2.msra.mxu0 0.0
    %3598 = vmatprep.subr.mxu0 0.0
    %3599 = vmatpush2.msra.mxu0 0.0
    %3600 = vmatprep.subr.mxu0 0.0
    %3601 = vmatpush2.msra.mxu0 0.0
    %3602 = vmatprep.subr.mxu0 0.0
    %3603 = vmatpush2.msra.mxu0 0.0
    %3604 = vmatprep.mubr.f32.mxu0 0.0
    %3605 = vmatmul.mubr.f32.gmra.mxu0 %v3538
    %v3606 = vpop.f32.mrf.mxu0
    %v3607 = vadd.f32 0.0, %v3606
    %v3608 = vpop.f32.mrf.mxu0
    %v3609 = vadd.f32 0.0, %v3608
    %3610 = vdwg.mxu0
    %v3613 = vcombine.low %v3607, %v3609
    %v3615 = vunpack.c.l.s4 1966171168
    %v3616 = vunpack.c.0.s8 %v3615
    %v3617 = vlaneseq
    %v3618 = vshrl.u32 %v3617, 7
    %v3619 = vsub.s32 %v3616, %v3618
    %v3620 = vrot.slane %v3613, %v3619
    %v3622 = vunpack.c.l.s4 1966171168
    %v3623 = vunpack.c.0.s8 %v3622
    %v3624 = vlaneseq
    %v3625 = vshrl.u32 %v3624, 7
    %v3626 = vsub.s32 %v3623, %v3625
    %v3627 = vrot.slane %v3620, %v3626
    %v3629 = vrcp.pop %v3627
    %v3630 = vmul.f32 %v3423, %v3629
    %v3631 = vld [vmem:[%s27] sm:$0xff]
    %v3632 = vld [vmem:[%s27 + $0x8] sm:$0xff]
    %v3633 = vld [vmem:[%s27 + $0x10] sm:$0xff]
    %v3634 = vld [vmem:[%s27 + $0x18] sm:$0xff]
    %v3635 = vld [vmem:[%s27 + $0x20] sm:$0xff]
    %v3636 = vld [vmem:[%s27 + $0x28] sm:$0xff]
    %v3637 = vld [vmem:[%s27 + $0x30] sm:$0xff]
    %v3638 = vld [vmem:[%s27 + $0x38] sm:$0xff]
    %v3639 = vld [vmem:[%s27 + $0x40] sm:$0xff]
    %v3641 = vlaneseq
    %v3642 = vshrl.u32 %v3641, 7
    %v3643 = vsub.s32 0, %v3642
    %v3644 = vrot.slane %v3630, %v3643
    %v3645 = vlaneseq
    %v3646 = vshrl.u32 %v3645, 7
    %v3647 = vsub.s32 1, %v3646
    %v3648 = vrot.slane %v3630, %v3647
    %vm3649 = vcmask 7168
    %v3651 = vsel %vm3649, %v3631, 0
    %v3654 = vsel %vm3649, %v3632, 0
    %v3657 = vsel %vm3649, %v3633, 0
    %v3660 = vsel %vm3649, %v3634, 0
    %v3663 = vsel %vm3649, %v3635, 0
    %v3666 = vsel %vm3649, %v3636, 0
    %v3669 = vsel %vm3649, %v3637, 0
    %v3672 = vsel %vm3649, %v3638, 0
    %v3675 = vsel %vm3649, %v3639, 0
    %v3677 = vsel %vm3409, %v3644, 0
    %v3679 = vsel %vm3409, %v3648, 0
    %3681 = vmatprep.subr.mxu0 0.0
    %3682 = vmatpush1.msra.mxu0 0.0
    %3683 = vmatprep.subr.mxu0 0.0
    %3684 = vmatpush1.msra.mxu0 0.0
    %3685 = vmatprep.subr.mxu0 0.0
    %3686 = vmatpush1.msra.mxu0 0.0
    %3687 = vmatprep.subr.mxu0 0.0
    %3688 = vmatpush1.msra.mxu0 0.0
    %3689 = vmatprep.subr.mxu0 0.0
    %3690 = vmatpush1.msra.mxu0 0.0
    %3691 = vmatprep.subr.mxu0 0.0
    %3692 = vmatpush1.msra.mxu0 0.0
    %3693 = vmatprep.subr.mxu0 0.0
    %3694 = vmatpush1.msra.mxu0 0.0
    %3695 = vmatprep.subr.mxu0 0.0
    %3696 = vmatpush1.msra.mxu0 0.0
    %3697 = vmatprep.subr.mxu0 0.0
    %3698 = vmatpush1.msra.mxu0 0.0
    %3699 = vmatprep.subr.mxu0 0.0
    %3700 = vmatpush1.msra.mxu0 0.0
    %3701 = vmatprep.subr.mxu0 0.0
    %3702 = vmatpush1.msra.mxu0 0.0
    %3703 = vmatprep.subr.mxu0 0.0
    %3704 = vmatpush1.msra.mxu0 0.0
    %3705 = vmatprep.subr.mxu0 0.0
    %3706 = vmatpush1.msra.mxu0 0.0
    %3707 = vmatprep.subr.mxu0 0.0
    %3708 = vmatpush1.msra.mxu0 0.0
    %3709 = vmatprep.subr.mxu0 0.0
    %3710 = vmatpush1.msra.mxu0 0.0
    %3711 = vmatprep.subr.mxu0 %v3679
    %3712 = vmatpush1.msra.mxu0 %v3677
    %3713 = vmatprep.subr.mxu0 0.0
    %3714 = vmatpush2.msra.mxu0 0.0
    %3715 = vmatprep.subr.mxu0 0.0
    %3716 = vmatpush2.msra.mxu0 0.0
    %3717 = vmatprep.subr.mxu0 0.0
    %3718 = vmatpush2.msra.mxu0 0.0
    %3719 = vmatprep.subr.mxu0 0.0
    %3720 = vmatpush2.msra.mxu0 0.0
    %3721 = vmatprep.subr.mxu0 0.0
    %3722 = vmatpush2.msra.mxu0 0.0
    %3723 = vmatprep.subr.mxu0 0.0
    %3724 = vmatpush2.msra.mxu0 0.0
    %3725 = vmatprep.subr.mxu0 0.0
    %3726 = vmatpush2.msra.mxu0 0.0
    %3727 = vmatprep.subr.mxu0 0.0
    %3728 = vmatpush2.msra.mxu0 0.0
    %3729 = vmatprep.subr.mxu0 0.0
    %3730 = vmatpush2.msra.mxu0 0.0
    %3731 = vmatprep.subr.mxu0 0.0
    %3732 = vmatpush2.msra.mxu0 0.0
    %3733 = vmatprep.subr.mxu0 0.0
    %3734 = vmatpush2.msra.mxu0 0.0
    %3735 = vmatprep.subr.mxu0 0.0
    %3736 = vmatpush2.msra.mxu0 0.0
    %3737 = vmatprep.subr.mxu0 0.0
    %3738 = vmatpush2.msra.mxu0 0.0
    %3739 = vmatprep.subr.mxu0 0.0
    %3740 = vmatpush2.msra.mxu0 0.0
    %3741 = vmatprep.subr.mxu0 0.0
    %3742 = vmatpush2.msra.mxu0 0.0
    %3743 = vmatprep.subr.mxu0 0.0
    %3744 = vmatpush2.msra.mxu0 0.0
    %3745 = vmatprep.mubr.f32.mxu0 0.0
    %3746 = vmatmul.mubr.f32.gmra.mxu0 %v3651
    %v3747 = vpop.f32.mrf.mxu0
    %v3748 = vadd.f32 0.0, %v3747
    %v3749 = vpop.f32.mrf.mxu0
    %v3750 = vadd.f32 0.0, %v3749
    %3751 = vmatprep.mubr.f32.mxu0 0.0
    %3752 = vmatmul.mubr.f32.gmra.mxu0 %v3654
    %v3753 = vpop.f32.mrf.mxu0
    %v3754 = vadd.f32 0.0, %v3753
    %v3755 = vpop.f32.mrf.mxu0
    %v3756 = vadd.f32 0.0, %v3755
    %3757 = vmatprep.mubr.f32.mxu0 0.0
    %3758 = vmatmul.mubr.f32.gmra.mxu0 %v3657
    %v3759 = vpop.f32.mrf.mxu0
    %v3760 = vadd.f32 0.0, %v3759
    %v3761 = vpop.f32.mrf.mxu0
    %v3762 = vadd.f32 0.0, %v3761
    %3763 = vmatprep.mubr.f32.mxu0 0.0
    %3764 = vmatmul.mubr.f32.gmra.mxu0 %v3660
    %v3765 = vpop.f32.mrf.mxu0
    %v3766 = vadd.f32 0.0, %v3765
    %v3767 = vpop.f32.mrf.mxu0
    %v3768 = vadd.f32 0.0, %v3767
    %3769 = vmatprep.mubr.f32.mxu0 0.0
    %3770 = vmatmul.mubr.f32.gmra.mxu0 %v3663
    %v3771 = vpop.f32.mrf.mxu0
    %v3772 = vadd.f32 0.0, %v3771
    %v3773 = vpop.f32.mrf.mxu0
    %v3774 = vadd.f32 0.0, %v3773
    %3775 = vmatprep.mubr.f32.mxu0 0.0
    %3776 = vmatmul.mubr.f32.gmra.mxu0 %v3666
    %v3777 = vpop.f32.mrf.mxu0
    %v3778 = vadd.f32 0.0, %v3777
    %v3779 = vpop.f32.mrf.mxu0
    %v3780 = vadd.f32 0.0, %v3779
    %3781 = vmatprep.mubr.f32.mxu0 0.0
    %3782 = vmatmul.mubr.f32.gmra.mxu0 %v3669
    %v3783 = vpop.f32.mrf.mxu0
    %v3784 = vadd.f32 0.0, %v3783
    %v3785 = vpop.f32.mrf.mxu0
    %v3786 = vadd.f32 0.0, %v3785
    %3787 = vmatprep.mubr.f32.mxu0 0.0
    %3788 = vmatmul.mubr.f32.gmra.mxu0 %v3672
    %v3789 = vpop.f32.mrf.mxu0
    %v3790 = vadd.f32 0.0, %v3789
    %v3791 = vpop.f32.mrf.mxu0
    %v3792 = vadd.f32 0.0, %v3791
    %3793 = vmatprep.mubr.f32.mxu0 0.0
    %3794 = vmatmul.mubr.f32.gmra.mxu0 %v3675
    %v3795 = vpop.f32.mrf.mxu0
    %v3796 = vadd.f32 0.0, %v3795
    %v3797 = vpop.f32.mrf.mxu0
    %v3798 = vadd.f32 0.0, %v3797
    %3799 = vdwg.mxu0
    %v3800 = vld [vmem:[%s29] sm:$0xff]
    %3801 = vrot.lane.b32.xlu0 %v3748, 11
    %v3802 = vpop.permute.xlu0 %3801
    %3803 = vrot.lane.b32.xlu0 %v3750, 11
    %v3804 = vpop.permute.xlu0 %3803
    %v3805 = vsel %vm411, %v3802, %v3804
    %v3806 = vsel %vm411, %v3804, %v3802
    %v3807 = vmul.f32 %v3806, %v420
    %v3808 = vmul.f32 %v3805, %v424
    %3810 = vset.pattern.permute.xlu0 0
    %3811 = vperm.xlu0 %3810, %v3800
    %v3812 = vpop.permute.xlu0 %3811
    %v3814 = vadd.f32 %v3812, %v3807
    %v3815 = vadd.f32 %v3812, %v3808
    %3816 = vrot.lane.b32.xlu0 %v3754, 10
    %v3817 = vpop.permute.xlu0 %3816
    %3818 = vrot.lane.b32.xlu0 %v3756, 10
    %v3819 = vpop.permute.xlu0 %3818
    %v3820 = vsel %vm453, %v3817, %v3819
    %v3821 = vsel %vm453, %v3819, %v3817
    %v3822 = vmul.f32 %v3821, %v462
    %v3823 = vmul.f32 %v3820, %v466
    %v3824 = vadd.f32 %v3814, %v3822
    %v3825 = vadd.f32 %v3815, %v3823
    %3826 = vrot.lane.b32.xlu0 %v3760, 9
    %v3827 = vpop.permute.xlu0 %3826
    %3828 = vrot.lane.b32.xlu0 %v3762, 9
    %v3829 = vpop.permute.xlu0 %3828
    %v3830 = vsel %vm485, %v3827, %v3829
    %v3831 = vsel %vm485, %v3829, %v3827
    %v3832 = vmul.f32 %v3831, %v494
    %v3833 = vmul.f32 %v3830, %v498
    %v3834 = vadd.f32 %v3824, %v3832
    %v3835 = vadd.f32 %v3825, %v3833
    %3836 = vrot.lane.b32.xlu0 %v3766, 1
    %v3837 = vpop.permute.xlu0 %3836
    %3838 = vrot.lane.b32.xlu0 %v3768, 1
    %v3839 = vpop.permute.xlu0 %3838
    %v3840 = vsel %vm517, %v3837, %v3839
    %v3841 = vsel %vm517, %v3839, %v3837
    %v3842 = vmul.f32 %v3841, %v526
    %v3843 = vmul.f32 %v3840, %v530
    %v3844 = vadd.f32 %v3834, %v3842
    %v3845 = vadd.f32 %v3835, %v3843
    %v3846 = vmul.f32 %v3772, %v545
    %v3847 = vmul.f32 %v3774, %v549
    %v3848 = vadd.f32 %v3844, %v3846
    %v3849 = vadd.f32 %v3845, %v3847
    %3850 = vrot.lane.b32.xlu0 %v3778, 127
    %v3851 = vpop.permute.xlu0 %3850
    %3852 = vrot.lane.b32.xlu0 %v3780, 127
    %v3853 = vpop.permute.xlu0 %3852
    %v3854 = vsel %vm568, %v3851, %v3853
    %v3855 = vsel %vm568, %v3853, %v3851
    %v3856 = vmul.f32 %v3854, %v577
    %v3857 = vmul.f32 %v3855, %v581
    %v3858 = vadd.f32 %v3848, %v3856
    %v3859 = vadd.f32 %v3849, %v3857
    %3860 = vrot.lane.b32.xlu0 %v3784, 119
    %v3861 = vpop.permute.xlu0 %3860
    %3862 = vrot.lane.b32.xlu0 %v3786, 119
    %v3863 = vpop.permute.xlu0 %3862
    %v3864 = vsel %vm600, %v3861, %v3863
    %v3865 = vsel %vm600, %v3863, %v3861
    %v3866 = vmul.f32 %v3864, %v609
    %v3867 = vmul.f32 %v3865, %v613
    %v3868 = vadd.f32 %v3858, %v3866
    %v3869 = vadd.f32 %v3859, %v3867
    %3870 = vrot.lane.b32.xlu0 %v3790, 118
    %v3871 = vpop.permute.xlu0 %3870
    %3872 = vrot.lane.b32.xlu0 %v3792, 118
    %v3873 = vpop.permute.xlu0 %3872
    %v3874 = vsel %vm632, %v3871, %v3873
    %v3875 = vsel %vm632, %v3873, %v3871
    %v3876 = vmul.f32 %v3874, %v641
    %v3877 = vmul.f32 %v3875, %v645
    %v3878 = vadd.f32 %v3868, %v3876
    %v3879 = vadd.f32 %v3869, %v3877
    %3880 = vrot.lane.b32.xlu0 %v3796, 117
    %v3881 = vpop.permute.xlu0 %3880
    %3882 = vrot.lane.b32.xlu0 %v3798, 117
    %v3883 = vpop.permute.xlu0 %3882
    %v3884 = vsel %vm664, %v3881, %v3883
    %v3885 = vsel %vm664, %v3883, %v3881
    %v3886 = vmul.f32 %v3884, %v673
    %v3887 = vmul.f32 %v3885, %v677
    %v3888 = vadd.f32 %v3878, %v3886
    %v3889 = vadd.f32 %v3879, %v3887
    %v3890 = vtanh.pop %v3888
    %v3891 = vtanh.pop %v3889
    %v3892 = vld [vmem:[%s31] sm:$0xff]
    %v3893 = vld [vmem:[%s31 + $0x8] sm:$0xff]
    %v3894 = vld [vmem:[%s31 + $0x10] sm:$0xff]
    %v3895 = vld [vmem:[%s31 + $0x18] sm:$0xff]
    %v3896 = vld [vmem:[%s31 + $0x20] sm:$0xff]
    %v3897 = vld [vmem:[%s31 + $0x28] sm:$0xff]
    %v3898 = vld [vmem:[%s31 + $0x30] sm:$0xff]
    %v3899 = vld [vmem:[%s31 + $0x38] sm:$0xff]
    %v3900 = vld [vmem:[%s31 + $0x40] sm:$0xff]
    %v3901 = vld [vmem:[%s31 + $0x48] sm:$0xff]
    %v3902 = vld [vmem:[%s31 + $0x50] sm:$0xff]
    %v3903 = vld [vmem:[%s31 + $0x58] sm:$0xff]
    %v3904 = vld [vmem:[%s31 + $0x60] sm:$0xff]
    %v3905 = vld [vmem:[%s31 + $0x68] sm:$0xff]
    %v3906 = vld [vmem:[%s31 + $0x70] sm:$0xff]
    %v3907 = vld [vmem:[%s31 + $0x78] sm:$0xff]
    %v3908 = vld [vmem:[%s31 + $0x80] sm:$0xff]
    %v3909 = vld [vmem:[%s31 + $0x88] sm:$0xff]
    %vm3910 = vcmask 64512
    %v3912 = vsel %vm3910, %v3892, 0
    %v3915 = vsel %vm3910, %v3893, 0
    %v3918 = vsel %vm3910, %v3894, 0
    %v3921 = vsel %vm3910, %v3895, 0
    %v3924 = vsel %vm3910, %v3896, 0
    %v3927 = vsel %vm3910, %v3897, 0
    %v3930 = vsel %vm3910, %v3898, 0
    %v3933 = vsel %vm3910, %v3899, 0
    %v3936 = vsel %vm3910, %v3900, 0
    %v3939 = vsel %vm3910, %v3901, 0
    %v3942 = vsel %vm3910, %v3902, 0
    %v3945 = vsel %vm3910, %v3903, 0
    %v3948 = vsel %vm3910, %v3904, 0
    %v3951 = vsel %vm3910, %v3905, 0
    %v3954 = vsel %vm3910, %v3906, 0
    %v3957 = vsel %vm3910, %v3907, 0
    %v3960 = vsel %vm3910, %v3908, 0
    %v3963 = vsel %vm3910, %v3909, 0
    %3965 = vmatprep.subr.mxu0 0.0
    %3966 = vmatpush1.msra.mxu0 0.0
    %3967 = vmatprep.subr.mxu0 0.0
    %3968 = vmatpush1.msra.mxu0 0.0
    %3969 = vmatprep.subr.mxu0 0.0
    %3970 = vmatpush1.msra.mxu0 0.0
    %3971 = vmatprep.subr.mxu0 0.0
    %3972 = vmatpush1.msra.mxu0 0.0
    %3973 = vmatprep.subr.mxu0 0.0
    %3974 = vmatpush1.msra.mxu0 0.0
    %3975 = vmatprep.subr.mxu0 0.0
    %3976 = vmatpush1.msra.mxu0 0.0
    %3977 = vmatprep.subr.mxu0 0.0
    %3978 = vmatpush1.msra.mxu0 0.0
    %3979 = vmatprep.subr.mxu0 0.0
    %3980 = vmatpush1.msra.mxu0 0.0
    %3981 = vmatprep.subr.mxu0 0.0
    %3982 = vmatpush1.msra.mxu0 0.0
    %3983 = vmatprep.subr.mxu0 0.0
    %3984 = vmatpush1.msra.mxu0 0.0
    %3985 = vmatprep.subr.mxu0 0.0
    %3986 = vmatpush1.msra.mxu0 0.0
    %3987 = vmatprep.subr.mxu0 0.0
    %3988 = vmatpush1.msra.mxu0 0.0
    %3989 = vmatprep.subr.mxu0 0.0
    %3990 = vmatpush1.msra.mxu0 0.0
    %3991 = vmatprep.subr.mxu0 0.0
    %3992 = vmatpush1.msra.mxu0 0.0
    %3993 = vmatprep.subr.mxu0 0.0
    %3994 = vmatpush1.msra.mxu0 0.0
    %3995 = vmatprep.subr.mxu0 %v3891
    %3996 = vmatpush1.msra.mxu0 %v3890
    %3997 = vmatprep.subr.mxu0 0.0
    %3998 = vmatpush2.msra.mxu0 0.0
    %3999 = vmatprep.subr.mxu0 0.0
    %4000 = vmatpush2.msra.mxu0 0.0
    %4001 = vmatprep.subr.mxu0 0.0
    %4002 = vmatpush2.msra.mxu0 0.0
    %4003 = vmatprep.subr.mxu0 0.0
    %4004 = vmatpush2.msra.mxu0 0.0
    %4005 = vmatprep.subr.mxu0 0.0
    %4006 = vmatpush2.msra.mxu0 0.0
    %4007 = vmatprep.subr.mxu0 0.0
    %4008 = vmatpush2.msra.mxu0 0.0
    %4009 = vmatprep.subr.mxu0 0.0
    %4010 = vmatpush2.msra.mxu0 0.0
    %4011 = vmatprep.subr.mxu0 0.0
    %4012 = vmatpush2.msra.mxu0 0.0
    %4013 = vmatprep.subr.mxu0 0.0
    %4014 = vmatpush2.msra.mxu0 0.0
    %4015 = vmatprep.subr.mxu0 0.0
    %4016 = vmatpush2.msra.mxu0 0.0
    %4017 = vmatprep.subr.mxu0 0.0
    %4018 = vmatpush2.msra.mxu0 0.0
    %4019 = vmatprep.subr.mxu0 0.0
    %4020 = vmatpush2.msra.mxu0 0.0
    %4021 = vmatprep.subr.mxu0 0.0
    %4022 = vmatpush2.msra.mxu0 0.0
    %4023 = vmatprep.subr.mxu0 0.0
    %4024 = vmatpush2.msra.mxu0 0.0
    %4025 = vmatprep.subr.mxu0 0.0
    %4026 = vmatpush2.msra.mxu0 0.0
    %4027 = vmatprep.subr.mxu0 0.0
    %4028 = vmatpush2.msra.mxu0 0.0
    %4029 = vmatprep.mubr.f32.mxu0 0.0
    %4030 = vmatmul.mubr.f32.gmra.mxu0 %v3912
    %v4031 = vpop.f32.mrf.mxu0
    %v4032 = vadd.f32 0.0, %v4031
    %v4033 = vpop.f32.mrf.mxu0
    %v4034 = vadd.f32 0.0, %v4033
    %4035 = vmatprep.mubr.f32.mxu0 0.0
    %4036 = vmatmul.mubr.f32.gmra.mxu0 %v3915
    %v4037 = vpop.f32.mrf.mxu0
    %v4038 = vadd.f32 0.0, %v4037
    %v4039 = vpop.f32.mrf.mxu0
    %v4040 = vadd.f32 0.0, %v4039
    %4041 = vmatprep.mubr.f32.mxu0 0.0
    %4042 = vmatmul.mubr.f32.gmra.mxu0 %v3918
    %v4043 = vpop.f32.mrf.mxu0
    %v4044 = vadd.f32 0.0, %v4043
    %v4045 = vpop.f32.mrf.mxu0
    %v4046 = vadd.f32 0.0, %v4045
    %4047 = vmatprep.mubr.f32.mxu0 0.0
    %4048 = vmatmul.mubr.f32.gmra.mxu0 %v3921
    %v4049 = vpop.f32.mrf.mxu0
    %v4050 = vadd.f32 0.0, %v4049
    %v4051 = vpop.f32.mrf.mxu0
    %v4052 = vadd.f32 0.0, %v4051
    %4053 = vmatprep.mubr.f32.mxu0 0.0
    %4054 = vmatmul.mubr.f32.gmra.mxu0 %v3924
    %v4055 = vpop.f32.mrf.mxu0
    %v4056 = vadd.f32 0.0, %v4055
    %v4057 = vpop.f32.mrf.mxu0
    %v4058 = vadd.f32 0.0, %v4057
    %4059 = vmatprep.mubr.f32.mxu0 0.0
    %4060 = vmatmul.mubr.f32.gmra.mxu0 %v3927
    %v4061 = vpop.f32.mrf.mxu0
    %v4062 = vadd.f32 0.0, %v4061
    %v4063 = vpop.f32.mrf.mxu0
    %v4064 = vadd.f32 0.0, %v4063
    %4065 = vmatprep.mubr.f32.mxu0 0.0
    %4066 = vmatmul.mubr.f32.gmra.mxu0 %v3930
    %v4067 = vpop.f32.mrf.mxu0
    %v4068 = vadd.f32 0.0, %v4067
    %v4069 = vpop.f32.mrf.mxu0
    %v4070 = vadd.f32 0.0, %v4069
    %4071 = vmatprep.mubr.f32.mxu0 0.0
    %4072 = vmatmul.mubr.f32.gmra.mxu0 %v3933
    %v4073 = vpop.f32.mrf.mxu0
    %v4074 = vadd.f32 0.0, %v4073
    %v4075 = vpop.f32.mrf.mxu0
    %v4076 = vadd.f32 0.0, %v4075
    %4077 = vmatprep.mubr.f32.mxu0 0.0
    %4078 = vmatmul.mubr.f32.gmra.mxu0 %v3936
    %v4079 = vpop.f32.mrf.mxu0
    %v4080 = vadd.f32 0.0, %v4079
    %v4081 = vpop.f32.mrf.mxu0
    %v4082 = vadd.f32 0.0, %v4081
    %4083 = vmatprep.mubr.f32.mxu0 0.0
    %4084 = vmatmul.mubr.f32.gmra.mxu0 %v3939
    %v4085 = vpop.f32.mrf.mxu0
    %v4086 = vadd.f32 0.0, %v4085
    %v4087 = vpop.f32.mrf.mxu0
    %v4088 = vadd.f32 0.0, %v4087
    %4089 = vmatprep.mubr.f32.mxu0 0.0
    %4090 = vmatmul.mubr.f32.gmra.mxu0 %v3942
    %v4091 = vpop.f32.mrf.mxu0
    %v4092 = vadd.f32 0.0, %v4091
    %v4093 = vpop.f32.mrf.mxu0
    %v4094 = vadd.f32 0.0, %v4093
    %4095 = vmatprep.mubr.f32.mxu0 0.0
    %4096 = vmatmul.mubr.f32.gmra.mxu0 %v3945
    %v4097 = vpop.f32.mrf.mxu0
    %v4098 = vadd.f32 0.0, %v4097
    %v4099 = vpop.f32.mrf.mxu0
    %v4100 = vadd.f32 0.0, %v4099
    %4101 = vmatprep.mubr.f32.mxu0 0.0
    %4102 = vmatmul.mubr.f32.gmra.mxu0 %v3948
    %v4103 = vpop.f32.mrf.mxu0
    %v4104 = vadd.f32 0.0, %v4103
    %v4105 = vpop.f32.mrf.mxu0
    %v4106 = vadd.f32 0.0, %v4105
    %4107 = vmatprep.mubr.f32.mxu0 0.0
    %4108 = vmatmul.mubr.f32.gmra.mxu0 %v3951
    %v4109 = vpop.f32.mrf.mxu0
    %v4110 = vadd.f32 0.0, %v4109
    %v4111 = vpop.f32.mrf.mxu0
    %v4112 = vadd.f32 0.0, %v4111
    %4113 = vmatprep.mubr.f32.mxu0 0.0
    %4114 = vmatmul.mubr.f32.gmra.mxu0 %v3954
    %v4115 = vpop.f32.mrf.mxu0
    %v4116 = vadd.f32 0.0, %v4115
    %v4117 = vpop.f32.mrf.mxu0
    %v4118 = vadd.f32 0.0, %v4117
    %4119 = vmatprep.mubr.f32.mxu0 0.0
    %4120 = vmatmul.mubr.f32.gmra.mxu0 %v3957
    %v4121 = vpop.f32.mrf.mxu0
    %v4122 = vadd.f32 0.0, %v4121
    %v4123 = vpop.f32.mrf.mxu0
    %v4124 = vadd.f32 0.0, %v4123
    %4125 = vmatprep.mubr.f32.mxu0 0.0
    %4126 = vmatmul.mubr.f32.gmra.mxu0 %v3960
    %v4127 = vpop.f32.mrf.mxu0
    %v4128 = vadd.f32 0.0, %v4127
    %v4129 = vpop.f32.mrf.mxu0
    %v4130 = vadd.f32 0.0, %v4129
    %4131 = vmatprep.mubr.f32.mxu0 0.0
    %4132 = vmatmul.mubr.f32.gmra.mxu0 %v3963
    %v4133 = vpop.f32.mrf.mxu0
    %v4134 = vadd.f32 0.0, %v4133
    %v4135 = vpop.f32.mrf.mxu0
    %v4136 = vadd.f32 0.0, %v4135
    %4137 = vdwg.mxu0
    %v4138 = vld [vmem:[%s33] sm:$0xff]
    %v4139 = vld [vmem:[%s33 + $0x8] sm:$0xff]
    %4140 = vrot.lane.b32.xlu0 %v4032, 11
    %v4141 = vpop.permute.xlu0 %4140
    %4142 = vrot.lane.b32.xlu0 %v4038, 11
    %v4143 = vpop.permute.xlu0 %4142
    %4144 = vrot.lane.b32.xlu0 %v4034, 11
    %v4145 = vpop.permute.xlu0 %4144
    %4146 = vrot.lane.b32.xlu0 %v4040, 11
    %v4147 = vpop.permute.xlu0 %4146
    %v4148 = vsel %vm411, %v4141, %v4145
    %v4149 = vsel %vm411, %v4143, %v4147
    %v4150 = vsel %vm411, %v4145, %v4141
    %v4151 = vsel %vm411, %v4147, %v4143
    %v4152 = vmul.f32 %v4150, %v420
    %v4153 = vmul.f32 %v4148, %v424
    %v4154 = vmul.f32 %v4151, %v420
    %v4155 = vmul.f32 %v4149, %v424
    %4157 = vset.pattern.permute.xlu0 0
    %4158 = vperm.xlu0 %4157, %v4138
    %v4159 = vpop.permute.xlu0 %4158
    %4162 = vset.pattern.permute.xlu0 0
    %4163 = vperm.xlu0 %4162, %v4139
    %v4164 = vpop.permute.xlu0 %4163
    %v4166 = vadd.f32 %v4159, %v4152
    %v4167 = vadd.f32 %v4159, %v4153
    %v4168 = vadd.f32 %v4164, %v4154
    %v4169 = vadd.f32 %v4164, %v4155
    %4170 = vrot.lane.b32.xlu0 %v4044, 10
    %v4171 = vpop.permute.xlu0 %4170
    %4172 = vrot.lane.b32.xlu0 %v4050, 10
    %v4173 = vpop.permute.xlu0 %4172
    %4174 = vrot.lane.b32.xlu0 %v4046, 10
    %v4175 = vpop.permute.xlu0 %4174
    %4176 = vrot.lane.b32.xlu0 %v4052, 10
    %v4177 = vpop.permute.xlu0 %4176
    %v4178 = vsel %vm453, %v4171, %v4175
    %v4179 = vsel %vm453, %v4173, %v4177
    %v4180 = vsel %vm453, %v4175, %v4171
    %v4181 = vsel %vm453, %v4177, %v4173
    %v4182 = vmul.f32 %v4180, %v462
    %v4183 = vmul.f32 %v4178, %v466
    %v4184 = vmul.f32 %v4181, %v462
    %v4185 = vmul.f32 %v4179, %v466
    %v4186 = vadd.f32 %v4166, %v4182
    %v4187 = vadd.f32 %v4167, %v4183
    %v4188 = vadd.f32 %v4168, %v4184
    %v4189 = vadd.f32 %v4169, %v4185
    %4190 = vrot.lane.b32.xlu0 %v4056, 9
    %v4191 = vpop.permute.xlu0 %4190
    %4192 = vrot.lane.b32.xlu0 %v4062, 9
    %v4193 = vpop.permute.xlu0 %4192
    %4194 = vrot.lane.b32.xlu0 %v4058, 9
    %v4195 = vpop.permute.xlu0 %4194
    %4196 = vrot.lane.b32.xlu0 %v4064, 9
    %v4197 = vpop.permute.xlu0 %4196
    %v4198 = vsel %vm485, %v4191, %v4195
    %v4199 = vsel %vm485, %v4193, %v4197
    %v4200 = vsel %vm485, %v4195, %v4191
    %v4201 = vsel %vm485, %v4197, %v4193
    %v4202 = vmul.f32 %v4200, %v494
    %v4203 = vmul.f32 %v4198, %v498
    %v4204 = vmul.f32 %v4201, %v494
    %v4205 = vmul.f32 %v4199, %v498
    %v4206 = vadd.f32 %v4186, %v4202
    %v4207 = vadd.f32 %v4187, %v4203
    %v4208 = vadd.f32 %v4188, %v4204
    %v4209 = vadd.f32 %v4189, %v4205
    %4210 = vrot.lane.b32.xlu0 %v4068, 1
    %v4211 = vpop.permute.xlu0 %4210
    %4212 = vrot.lane.b32.xlu0 %v4074, 1
    %v4213 = vpop.permute.xlu0 %4212
    %4214 = vrot.lane.b32.xlu0 %v4070, 1
    %v4215 = vpop.permute.xlu0 %4214
    %4216 = vrot.lane.b32.xlu0 %v4076, 1
    %v4217 = vpop.permute.xlu0 %4216
    %v4218 = vsel %vm517, %v4211, %v4215
    %v4219 = vsel %vm517, %v4213, %v4217
    %v4220 = vsel %vm517, %v4215, %v4211
    %v4221 = vsel %vm517, %v4217, %v4213
    %v4222 = vmul.f32 %v4220, %v526
    %v4223 = vmul.f32 %v4218, %v530
    %v4224 = vmul.f32 %v4221, %v526
    %v4225 = vmul.f32 %v4219, %v530
    %v4226 = vadd.f32 %v4206, %v4222
    %v4227 = vadd.f32 %v4207, %v4223
    %v4228 = vadd.f32 %v4208, %v4224
    %v4229 = vadd.f32 %v4209, %v4225
    %v4230 = vmul.f32 %v4080, %v545
    %v4231 = vmul.f32 %v4082, %v549
    %v4232 = vmul.f32 %v4086, %v545
    %v4233 = vmul.f32 %v4088, %v549
    %v4234 = vadd.f32 %v4226, %v4230
    %v4235 = vadd.f32 %v4227, %v4231
    %v4236 = vadd.f32 %v4228, %v4232
    %v4237 = vadd.f32 %v4229, %v4233
    %4238 = vrot.lane.b32.xlu0 %v4092, 127
    %v4239 = vpop.permute.xlu0 %4238
    %4240 = vrot.lane.b32.xlu0 %v4098, 127
    %v4241 = vpop.permute.xlu0 %4240
    %4242 = vrot.lane.b32.xlu0 %v4094, 127
    %v4243 = vpop.permute.xlu0 %4242
    %4244 = vrot.lane.b32.xlu0 %v4100, 127
    %v4245 = vpop.permute.xlu0 %4244
    %v4246 = vsel %vm568, %v4239, %v4243
    %v4247 = vsel %vm568, %v4241, %v4245
    %v4248 = vsel %vm568, %v4243, %v4239
    %v4249 = vsel %vm568, %v4245, %v4241
    %v4250 = vmul.f32 %v4246, %v577
    %v4251 = vmul.f32 %v4248, %v581
    %v4252 = vmul.f32 %v4247, %v577
    %v4253 = vmul.f32 %v4249, %v581
    %v4254 = vadd.f32 %v4234, %v4250
    %v4255 = vadd.f32 %v4235, %v4251
    %v4256 = vadd.f32 %v4236, %v4252
    %v4257 = vadd.f32 %v4237, %v4253
    %4258 = vrot.lane.b32.xlu0 %v4104, 119
    %v4259 = vpop.permute.xlu0 %4258
    %4260 = vrot.lane.b32.xlu0 %v4110, 119
    %v4261 = vpop.permute.xlu0 %4260
    %4262 = vrot.lane.b32.xlu0 %v4106, 119
    %v4263 = vpop.permute.xlu0 %4262
    %4264 = vrot.lane.b32.xlu0 %v4112, 119
    %v4265 = vpop.permute.xlu0 %4264
    %v4266 = vsel %vm600, %v4259, %v4263
    %v4267 = vsel %vm600, %v4261, %v4265
    %v4268 = vsel %vm600, %v4263, %v4259
    %v4269 = vsel %vm600, %v4265, %v4261
    %v4270 = vmul.f32 %v4266, %v609
    %v4271 = vmul.f32 %v4268, %v613
    %v4272 = vmul.f32 %v4267, %v609
    %v4273 = vmul.f32 %v4269, %v613
    %v4274 = vadd.f32 %v4254, %v4270
    %v4275 = vadd.f32 %v4255, %v4271
    %v4276 = vadd.f32 %v4256, %v4272
    %v4277 = vadd.f32 %v4257, %v4273
    %4278 = vrot.lane.b32.xlu0 %v4116, 118
    %v4279 = vpop.permute.xlu0 %4278
    %4280 = vrot.lane.b32.xlu0 %v4122, 118
    %v4281 = vpop.permute.xlu0 %4280
    %4282 = vrot.lane.b32.xlu0 %v4118, 118
    %v4283 = vpop.permute.xlu0 %4282
    %4284 = vrot.lane.b32.xlu0 %v4124, 118
    %v4285 = vpop.permute.xlu0 %4284
    %v4286 = vsel %vm632, %v4279, %v4283
    %v4287 = vsel %vm632, %v4281, %v4285
    %v4288 = vsel %vm632, %v4283, %v4279
    %v4289 = vsel %vm632, %v4285, %v4281
    %v4290 = vmul.f32 %v4286, %v641
    %v4291 = vmul.f32 %v4288, %v645
    %v4292 = vmul.f32 %v4287, %v641
    %v4293 = vmul.f32 %v4289, %v645
    %v4294 = vadd.f32 %v4274, %v4290
    %v4295 = vadd.f32 %v4275, %v4291
    %v4296 = vadd.f32 %v4276, %v4292
    %v4297 = vadd.f32 %v4277, %v4293
    %4298 = vrot.lane.b32.xlu0 %v4128, 117
    %v4299 = vpop.permute.xlu0 %4298
    %4300 = vrot.lane.b32.xlu0 %v4134, 117
    %v4301 = vpop.permute.xlu0 %4300
    %4302 = vrot.lane.b32.xlu0 %v4130, 117
    %v4303 = vpop.permute.xlu0 %4302
    %4304 = vrot.lane.b32.xlu0 %v4136, 117
    %v4305 = vpop.permute.xlu0 %4304
    %v4306 = vsel %vm664, %v4299, %v4303
    %v4307 = vsel %vm664, %v4301, %v4305
    %v4308 = vsel %vm664, %v4303, %v4299
    %v4309 = vsel %vm664, %v4305, %v4301
    %v4310 = vmul.f32 %v4306, %v673
    %v4311 = vmul.f32 %v4308, %v677
    %v4312 = vmul.f32 %v4307, %v673
    %v4313 = vmul.f32 %v4309, %v677
    %v4314 = vadd.f32 %v4294, %v4310
    %v4315 = vadd.f32 %v4295, %v4311
    %v4316 = vadd.f32 %v4296, %v4312
    %v4317 = vadd.f32 %v4297, %v4313
    %v4318 = vtanh.pop %v4314
    %v4319 = vtanh.pop %v4315
    %v4320 = vtanh.pop %v4316
    %v4321 = vtanh.pop %v4317
    %v4322 = vld [vmem:[%s35] sm:$0xf]
    %v4323 = vld [vmem:[%s37] sm:$0xf]
    %4325 = vset.pattern.permute.xlu0 0
    %4326 = vperm.xlu0 %4325, %v4323
    %v4327 = vpop.permute.xlu0 %4326
    %v4330 = vsel %vm728, %v4322, 0
    %4332 = vmatprep.subr.mxu0 0.0
    %4333 = vmatpush1.msra.mxu0 0.0
    %4334 = vmatprep.subr.mxu0 0.0
    %4335 = vmatpush1.msra.mxu0 0.0
    %4336 = vmatprep.subr.mxu0 0.0
    %4337 = vmatpush1.msra.mxu0 0.0
    %4338 = vmatprep.subr.mxu0 0.0
    %4339 = vmatpush1.msra.mxu0 0.0
    %4340 = vmatprep.subr.mxu0 0.0
    %4341 = vmatpush1.msra.mxu0 0.0
    %4342 = vmatprep.subr.mxu0 0.0
    %4343 = vmatpush1.msra.mxu0 0.0
    %4344 = vmatprep.subr.mxu0 0.0
    %4345 = vmatpush1.msra.mxu0 0.0
    %4346 = vmatprep.subr.mxu0 0.0
    %4347 = vmatpush1.msra.mxu0 0.0
    %4348 = vmatprep.subr.mxu0 0.0
    %4349 = vmatpush1.msra.mxu0 0.0
    %4350 = vmatprep.subr.mxu0 0.0
    %4351 = vmatpush1.msra.mxu0 0.0
    %4352 = vmatprep.subr.mxu0 0.0
    %4353 = vmatpush1.msra.mxu0 0.0
    %4354 = vmatprep.subr.mxu0 0.0
    %4355 = vmatpush1.msra.mxu0 0.0
    %4356 = vmatprep.subr.mxu0 0.0
    %4357 = vmatpush1.msra.mxu0 0.0
    %4358 = vmatprep.subr.mxu0 0.0
    %4359 = vmatpush1.msra.mxu0 0.0
    %4360 = vmatprep.subr.mxu0 %v4321
    %4361 = vmatpush1.msra.mxu0 %v4320
    %4362 = vmatprep.subr.mxu0 %v4319
    %4363 = vmatpush1.msra.mxu0 %v4318
    %4364 = vmatprep.subr.mxu0 0.0
    %4365 = vmatpush2.msra.mxu0 0.0
    %4366 = vmatprep.subr.mxu0 0.0
    %4367 = vmatpush2.msra.mxu0 0.0
    %4368 = vmatprep.subr.mxu0 0.0
    %4369 = vmatpush2.msra.mxu0 0.0
    %4370 = vmatprep.subr.mxu0 0.0
    %4371 = vmatpush2.msra.mxu0 0.0
    %4372 = vmatprep.subr.mxu0 0.0
    %4373 = vmatpush2.msra.mxu0 0.0
    %4374 = vmatprep.subr.mxu0 0.0
    %4375 = vmatpush2.msra.mxu0 0.0
    %4376 = vmatprep.subr.mxu0 0.0
    %4377 = vmatpush2.msra.mxu0 0.0
    %4378 = vmatprep.subr.mxu0 0.0
    %4379 = vmatpush2.msra.mxu0 0.0
    %4380 = vmatprep.subr.mxu0 0.0
    %4381 = vmatpush2.msra.mxu0 0.0
    %4382 = vmatprep.subr.mxu0 0.0
    %4383 = vmatpush2.msra.mxu0 0.0
    %4384 = vmatprep.subr.mxu0 0.0
    %4385 = vmatpush2.msra.mxu0 0.0
    %4386 = vmatprep.subr.mxu0 0.0
    %4387 = vmatpush2.msra.mxu0 0.0
    %4388 = vmatprep.subr.mxu0 0.0
    %4389 = vmatpush2.msra.mxu0 0.0
    %4390 = vmatprep.subr.mxu0 0.0
    %4391 = vmatpush2.msra.mxu0 0.0
    %4392 = vmatprep.subr.mxu0 0.0
    %4393 = vmatpush2.msra.mxu0 0.0
    %4394 = vmatprep.subr.mxu0 0.0
    %4395 = vmatpush2.msra.mxu0 0.0
    %4396 = vmatprep.mubr.f32.mxu0 0.0
    %4397 = vmatmul.mubr.f32.gmra.mxu0 %v4330
    %v4398 = vpop.f32.mrf.mxu0
    %v4399 = vadd.f32 %v4327, %v4398
    %v4400 = vpop.f32.mrf.mxu0
    %v4401 = vadd.f32 %v4327, %v4400
    %4402 = vdwg.mxu0
    %v4403 = vld [vmem:[%s47] sm:$0xf]
    %v4404 = vld [vmem:[%s49] sm:$0xf]
    %4406 = vset.pattern.permute.xlu0 0
    %4407 = vperm.xlu0 %4406, %v4404
    %v4408 = vpop.permute.xlu0 %4407
    %v4411 = vsel %vm728, %v4403, 0
    %4413 = vmatprep.subr.mxu0 0.0
    %4414 = vmatpush1.msra.mxu0 0.0
    %4415 = vmatprep.subr.mxu0 0.0
    %4416 = vmatpush1.msra.mxu0 0.0
    %4417 = vmatprep.subr.mxu0 0.0
    %4418 = vmatpush1.msra.mxu0 0.0
    %4419 = vmatprep.subr.mxu0 0.0
    %4420 = vmatpush1.msra.mxu0 0.0
    %4421 = vmatprep.subr.mxu0 0.0
    %4422 = vmatpush1.msra.mxu0 0.0
    %4423 = vmatprep.subr.mxu0 0.0
    %4424 = vmatpush1.msra.mxu0 0.0
    %4425 = vmatprep.subr.mxu0 0.0
    %4426 = vmatpush1.msra.mxu0 0.0
    %4427 = vmatprep.subr.mxu0 0.0
    %4428 = vmatpush1.msra.mxu0 0.0
    %4429 = vmatprep.subr.mxu0 0.0
    %4430 = vmatpush1.msra.mxu0 0.0
    %4431 = vmatprep.subr.mxu0 0.0
    %4432 = vmatpush1.msra.mxu0 0.0
    %4433 = vmatprep.subr.mxu0 0.0
    %4434 = vmatpush1.msra.mxu0 0.0
    %4435 = vmatprep.subr.mxu0 0.0
    %4436 = vmatpush1.msra.mxu0 0.0
    %4437 = vmatprep.subr.mxu0 0.0
    %4438 = vmatpush1.msra.mxu0 0.0
    %4439 = vmatprep.subr.mxu0 0.0
    %4440 = vmatpush1.msra.mxu0 0.0
    %4441 = vmatprep.subr.mxu0 %v4321
    %4442 = vmatpush1.msra.mxu0 %v4320
    %4443 = vmatprep.subr.mxu0 %v4319
    %4444 = vmatpush1.msra.mxu0 %v4318
    %4445 = vmatprep.subr.mxu0 0.0
    %4446 = vmatpush2.msra.mxu0 0.0
    %4447 = vmatprep.subr.mxu0 0.0
    %4448 = vmatpush2.msra.mxu0 0.0
    %4449 = vmatprep.subr.mxu0 0.0
    %4450 = vmatpush2.msra.mxu0 0.0
    %4451 = vmatprep.subr.mxu0 0.0
    %4452 = vmatpush2.msra.mxu0 0.0
    %4453 = vmatprep.subr.mxu0 0.0
    %4454 = vmatpush2.msra.mxu0 0.0
    %4455 = vmatprep.subr.mxu0 0.0
    %4456 = vmatpush2.msra.mxu0 0.0
    %4457 = vmatprep.subr.mxu0 0.0
    %4458 = vmatpush2.msra.mxu0 0.0
    %4459 = vmatprep.subr.mxu0 0.0
    %4460 = vmatpush2.msra.mxu0 0.0
    %4461 = vmatprep.subr.mxu0 0.0
    %4462 = vmatpush2.msra.mxu0 0.0
    %4463 = vmatprep.subr.mxu0 0.0
    %4464 = vmatpush2.msra.mxu0 0.0
    %4465 = vmatprep.subr.mxu0 0.0
    %4466 = vmatpush2.msra.mxu0 0.0
    %4467 = vmatprep.subr.mxu0 0.0
    %4468 = vmatpush2.msra.mxu0 0.0
    %4469 = vmatprep.subr.mxu0 0.0
    %4470 = vmatpush2.msra.mxu0 0.0
    %4471 = vmatprep.subr.mxu0 0.0
    %4472 = vmatpush2.msra.mxu0 0.0
    %4473 = vmatprep.subr.mxu0 0.0
    %4474 = vmatpush2.msra.mxu0 0.0
    %4475 = vmatprep.subr.mxu0 0.0
    %4476 = vmatpush2.msra.mxu0 0.0
    %4477 = vmatprep.mubr.f32.mxu0 0.0
    %4478 = vmatmul.mubr.f32.gmra.mxu0 %v4411
    %v4479 = vpop.f32.mrf.mxu0
    %v4480 = vadd.f32 %v4408, %v4479
    %v4481 = vpop.f32.mrf.mxu0
    %v4482 = vadd.f32 %v4408, %v4481
    %4483 = vdwg.mxu0
    %v4484 = vtanh.pop %v4480
    %v4485 = vtanh.pop %v4482
    %v4486 = vld [vmem:[%s39] sm:$0xff]
    %v4487 = vld [vmem:[%s39 + $0x8] sm:$0xff]
    %v4488 = vld [vmem:[%s39 + $0x10] sm:$0xff]
    %v4489 = vld [vmem:[%s39 + $0x18] sm:$0xff]
    %v4490 = vld [vmem:[%s39 + $0x20] sm:$0xff]
    %v4491 = vld [vmem:[%s39 + $0x28] sm:$0xff]
    %v4492 = vld [vmem:[%s39 + $0x30] sm:$0xff]
    %v4493 = vld [vmem:[%s39 + $0x38] sm:$0xff]
    %v4494 = vld [vmem:[%s39 + $0x40] sm:$0xff]
    %v4495 = vld [vmem:[%s39 + $0x48] sm:$0xff]
    %v4496 = vld [vmem:[%s39 + $0x50] sm:$0xff]
    %v4497 = vld [vmem:[%s39 + $0x58] sm:$0xff]
    %v4498 = vld [vmem:[%s39 + $0x60] sm:$0xff]
    %v4499 = vld [vmem:[%s39 + $0x68] sm:$0xff]
    %v4500 = vld [vmem:[%s39 + $0x70] sm:$0xff]
    %v4501 = vld [vmem:[%s39 + $0x78] sm:$0xff]
    %v4502 = vlaneseq
    %v4503 = vshrl.u32 %v4502, 7
    %v4504 = vsub.s32 0, %v4503
    %v4505 = vrot.slane %v4399, %v4504
    %v4506 = vlaneseq
    %v4507 = vshrl.u32 %v4506, 7
    %v4508 = vsub.s32 0, %v4507
    %v4509 = vrot.slane %v4401, %v4508
    %v4510 = vmul.f32 %v4486, %v4505
    %v4511 = vmul.f32 %v4487, %v4509
    %v4512 = vmul.f32 %v4488, %v4505
    %v4513 = vmul.f32 %v4489, %v4509
    %v4514 = vmul.f32 %v4490, %v4505
    %v4515 = vmul.f32 %v4491, %v4509
    %v4516 = vmul.f32 %v4492, %v4505
    %v4517 = vmul.f32 %v4493, %v4509
    %v4518 = vmul.f32 %v4494, %v4505
    %v4519 = vmul.f32 %v4495, %v4509
    %v4520 = vmul.f32 %v4496, %v4505
    %v4521 = vmul.f32 %v4497, %v4509
    %v4522 = vmul.f32 %v4498, %v4505
    %v4523 = vmul.f32 %v4499, %v4509
    %v4524 = vmul.f32 %v4500, %v4505
    %v4525 = vmul.f32 %v4501, %v4509
    %s4526 = scalar_lea.vmem %s39, 128
    %v4527 = vld [vmem:[%s4526] sm:$0xff]
    %v4528 = vld [vmem:[%s4526 + $0x8] sm:$0xff]
    %v4529 = vld [vmem:[%s4526 + $0x10] sm:$0xff]
    %v4530 = vld [vmem:[%s4526 + $0x18] sm:$0xff]
    %v4531 = vld [vmem:[%s4526 + $0x20] sm:$0xff]
    %v4532 = vld [vmem:[%s4526 + $0x28] sm:$0xff]
    %v4533 = vld [vmem:[%s4526 + $0x30] sm:$0xff]
    %v4534 = vld [vmem:[%s4526 + $0x38] sm:$0xff]
    %v4535 = vld [vmem:[%s4526 + $0x40] sm:$0xff]
    %v4536 = vld [vmem:[%s4526 + $0x48] sm:$0xff]
    %v4537 = vld [vmem:[%s4526 + $0x50] sm:$0xff]
    %v4538 = vld [vmem:[%s4526 + $0x58] sm:$0xff]
    %v4539 = vld [vmem:[%s4526 + $0x60] sm:$0xff]
    %v4540 = vld [vmem:[%s4526 + $0x68] sm:$0xff]
    %v4541 = vld [vmem:[%s4526 + $0x70] sm:$0xff]
    %v4542 = vld [vmem:[%s4526 + $0x78] sm:$0xff]
    %v4543 = vlaneseq
    %v4544 = vshrl.u32 %v4543, 7
    %v4545 = vsub.s32 1, %v4544
    %v4546 = vrot.slane %v4399, %v4545
    %v4547 = vlaneseq
    %v4548 = vshrl.u32 %v4547, 7
    %v4549 = vsub.s32 1, %v4548
    %v4550 = vrot.slane %v4401, %v4549
    %v4551 = vmul.f32 %v4527, %v4546
    %v4552 = vmul.f32 %v4528, %v4550
    %v4553 = vmul.f32 %v4529, %v4546
    %v4554 = vmul.f32 %v4530, %v4550
    %v4555 = vmul.f32 %v4531, %v4546
    %v4556 = vmul.f32 %v4532, %v4550
    %v4557 = vmul.f32 %v4533, %v4546
    %v4558 = vmul.f32 %v4534, %v4550
    %v4559 = vmul.f32 %v4535, %v4546
    %v4560 = vmul.f32 %v4536, %v4550
    %v4561 = vmul.f32 %v4537, %v4546
    %v4562 = vmul.f32 %v4538, %v4550
    %v4563 = vmul.f32 %v4539, %v4546
    %v4564 = vmul.f32 %v4540, %v4550
    %v4565 = vmul.f32 %v4541, %v4546
    %v4566 = vmul.f32 %v4542, %v4550
    %v4567 = vadd.f32 %v4510, %v4551
    %v4568 = vadd.f32 %v4511, %v4552
    %v4569 = vadd.f32 %v4512, %v4553
    %v4570 = vadd.f32 %v4513, %v4554
    %v4571 = vadd.f32 %v4514, %v4555
    %v4572 = vadd.f32 %v4515, %v4556
    %v4573 = vadd.f32 %v4516, %v4557
    %v4574 = vadd.f32 %v4517, %v4558
    %v4575 = vadd.f32 %v4518, %v4559
    %v4576 = vadd.f32 %v4519, %v4560
    %v4577 = vadd.f32 %v4520, %v4561
    %v4578 = vadd.f32 %v4521, %v4562
    %v4579 = vadd.f32 %v4522, %v4563
    %v4580 = vadd.f32 %v4523, %v4564
    %v4581 = vadd.f32 %v4524, %v4565
    %v4582 = vadd.f32 %v4525, %v4566
    %s4583 = scalar_lea.vmem %s39, 256
    %v4584 = vld [vmem:[%s4583] sm:$0xff]
    %v4585 = vld [vmem:[%s4583 + $0x8] sm:$0xff]
    %v4586 = vld [vmem:[%s4583 + $0x10] sm:$0xff]
    %v4587 = vld [vmem:[%s4583 + $0x18] sm:$0xff]
    %v4588 = vld [vmem:[%s4583 + $0x20] sm:$0xff]
    %v4589 = vld [vmem:[%s4583 + $0x28] sm:$0xff]
    %v4590 = vld [vmem:[%s4583 + $0x30] sm:$0xff]
    %v4591 = vld [vmem:[%s4583 + $0x38] sm:$0xff]
    %v4592 = vld [vmem:[%s4583 + $0x40] sm:$0xff]
    %v4593 = vld [vmem:[%s4583 + $0x48] sm:$0xff]
    %v4594 = vld [vmem:[%s4583 + $0x50] sm:$0xff]
    %v4595 = vld [vmem:[%s4583 + $0x58] sm:$0xff]
    %v4596 = vld [vmem:[%s4583 + $0x60] sm:$0xff]
    %v4597 = vld [vmem:[%s4583 + $0x68] sm:$0xff]
    %v4598 = vld [vmem:[%s4583 + $0x70] sm:$0xff]
    %v4599 = vld [vmem:[%s4583 + $0x78] sm:$0xff]
    %v4600 = vlaneseq
    %v4601 = vshrl.u32 %v4600, 7
    %v4602 = vsub.s32 2, %v4601
    %v4603 = vrot.slane %v4399, %v4602
    %v4604 = vlaneseq
    %v4605 = vshrl.u32 %v4604, 7
    %v4606 = vsub.s32 2, %v4605
    %v4607 = vrot.slane %v4401, %v4606
    %v4608 = vmul.f32 %v4584, %v4603
    %v4609 = vmul.f32 %v4585, %v4607
    %v4610 = vmul.f32 %v4586, %v4603
    %v4611 = vmul.f32 %v4587, %v4607
    %v4612 = vmul.f32 %v4588, %v4603
    %v4613 = vmul.f32 %v4589, %v4607
    %v4614 = vmul.f32 %v4590, %v4603
    %v4615 = vmul.f32 %v4591, %v4607
    %v4616 = vmul.f32 %v4592, %v4603
    %v4617 = vmul.f32 %v4593, %v4607
    %v4618 = vmul.f32 %v4594, %v4603
    %v4619 = vmul.f32 %v4595, %v4607
    %v4620 = vmul.f32 %v4596, %v4603
    %v4621 = vmul.f32 %v4597, %v4607
    %v4622 = vmul.f32 %v4598, %v4603
    %v4623 = vmul.f32 %v4599, %v4607
    %v4624 = vadd.f32 %v4567, %v4608
    %v4625 = vadd.f32 %v4568, %v4609
    %v4626 = vadd.f32 %v4569, %v4610
    %v4627 = vadd.f32 %v4570, %v4611
    %v4628 = vadd.f32 %v4571, %v4612
    %v4629 = vadd.f32 %v4572, %v4613
    %v4630 = vadd.f32 %v4573, %v4614
    %v4631 = vadd.f32 %v4574, %v4615
    %v4632 = vadd.f32 %v4575, %v4616
    %v4633 = vadd.f32 %v4576, %v4617
    %v4634 = vadd.f32 %v4577, %v4618
    %v4635 = vadd.f32 %v4578, %v4619
    %v4636 = vadd.f32 %v4579, %v4620
    %v4637 = vadd.f32 %v4580, %v4621
    %v4638 = vadd.f32 %v4581, %v4622
    %v4639 = vadd.f32 %v4582, %v4623
    %s4640 = scalar_lea.vmem %s39, 384
    %v4641 = vld [vmem:[%s4640] sm:$0xff]
    %v4642 = vld [vmem:[%s4640 + $0x8] sm:$0xff]
    %v4643 = vld [vmem:[%s4640 + $0x10] sm:$0xff]
    %v4644 = vld [vmem:[%s4640 + $0x18] sm:$0xff]
    %v4645 = vld [vmem:[%s4640 + $0x20] sm:$0xff]
    %v4646 = vld [vmem:[%s4640 + $0x28] sm:$0xff]
    %v4647 = vld [vmem:[%s4640 + $0x30] sm:$0xff]
    %v4648 = vld [vmem:[%s4640 + $0x38] sm:$0xff]
    %v4649 = vld [vmem:[%s4640 + $0x40] sm:$0xff]
    %v4650 = vld [vmem:[%s4640 + $0x48] sm:$0xff]
    %v4651 = vld [vmem:[%s4640 + $0x50] sm:$0xff]
    %v4652 = vld [vmem:[%s4640 + $0x58] sm:$0xff]
    %v4653 = vld [vmem:[%s4640 + $0x60] sm:$0xff]
    %v4654 = vld [vmem:[%s4640 + $0x68] sm:$0xff]
    %v4655 = vld [vmem:[%s4640 + $0x70] sm:$0xff]
    %v4656 = vld [vmem:[%s4640 + $0x78] sm:$0xff]
    %v4657 = vlaneseq
    %v4658 = vshrl.u32 %v4657, 7
    %v4659 = vsub.s32 3, %v4658
    %v4660 = vrot.slane %v4399, %v4659
    %v4661 = vlaneseq
    %v4662 = vshrl.u32 %v4661, 7
    %v4663 = vsub.s32 3, %v4662
    %v4664 = vrot.slane %v4401, %v4663
    %v4665 = vmul.f32 %v4641, %v4660
    %v4666 = vmul.f32 %v4642, %v4664
    %v4667 = vmul.f32 %v4643, %v4660
    %v4668 = vmul.f32 %v4644, %v4664
    %v4669 = vmul.f32 %v4645, %v4660
    %v4670 = vmul.f32 %v4646, %v4664
    %v4671 = vmul.f32 %v4647, %v4660
    %v4672 = vmul.f32 %v4648, %v4664
    %v4673 = vmul.f32 %v4649, %v4660
    %v4674 = vmul.f32 %v4650, %v4664
    %v4675 = vmul.f32 %v4651, %v4660
    %v4676 = vmul.f32 %v4652, %v4664
    %v4677 = vmul.f32 %v4653, %v4660
    %v4678 = vmul.f32 %v4654, %v4664
    %v4679 = vmul.f32 %v4655, %v4660
    %v4680 = vmul.f32 %v4656, %v4664
    %v4681 = vadd.f32 %v4624, %v4665
    %v4682 = vadd.f32 %v4625, %v4666
    %v4683 = vadd.f32 %v4626, %v4667
    %v4684 = vadd.f32 %v4627, %v4668
    %v4685 = vadd.f32 %v4628, %v4669
    %v4686 = vadd.f32 %v4629, %v4670
    %v4687 = vadd.f32 %v4630, %v4671
    %v4688 = vadd.f32 %v4631, %v4672
    %v4689 = vadd.f32 %v4632, %v4673
    %v4690 = vadd.f32 %v4633, %v4674
    %v4691 = vadd.f32 %v4634, %v4675
    %v4692 = vadd.f32 %v4635, %v4676
    %v4693 = vadd.f32 %v4636, %v4677
    %v4694 = vadd.f32 %v4637, %v4678
    %v4695 = vadd.f32 %v4638, %v4679
    %v4696 = vadd.f32 %v4639, %v4680
    %v4697 = vld [vmem:[%s41] sm:$0xff]
    %v4698 = vld [vmem:[%s41 + $0x8] sm:$0xff]
    %v4699 = vld [vmem:[%s41 + $0x10] sm:$0xff]
    %v4700 = vld [vmem:[%s41 + $0x18] sm:$0xff]
    %v4701 = vld [vmem:[%s41 + $0x20] sm:$0xff]
    %v4702 = vld [vmem:[%s41 + $0x28] sm:$0xff]
    %v4703 = vld [vmem:[%s41 + $0x30] sm:$0xff]
    %v4704 = vld [vmem:[%s41 + $0x38] sm:$0xff]
    %4706 = vset.pattern.permute.xlu0 0
    %4707 = vperm.xlu0 %4706, %v4697
    %v4708 = vpop.permute.xlu0 %4707
    %4711 = vset.pattern.permute.xlu0 0
    %4712 = vperm.xlu0 %4711, %v4698
    %v4713 = vpop.permute.xlu0 %4712
    %4716 = vset.pattern.permute.xlu0 0
    %4717 = vperm.xlu0 %4716, %v4699
    %v4718 = vpop.permute.xlu0 %4717
    %4721 = vset.pattern.permute.xlu0 0
    %4722 = vperm.xlu0 %4721, %v4700
    %v4723 = vpop.permute.xlu0 %4722
    %4726 = vset.pattern.permute.xlu0 0
    %4727 = vperm.xlu0 %4726, %v4701
    %v4728 = vpop.permute.xlu0 %4727
    %4731 = vset.pattern.permute.xlu0 0
    %4732 = vperm.xlu0 %4731, %v4702
    %v4733 = vpop.permute.xlu0 %4732
    %4736 = vset.pattern.permute.xlu0 0
    %4737 = vperm.xlu0 %4736, %v4703
    %v4738 = vpop.permute.xlu0 %4737
    %4741 = vset.pattern.permute.xlu0 0
    %4742 = vperm.xlu0 %4741, %v4704
    %v4743 = vpop.permute.xlu0 %4742
    %4745 = vmatprep.subr.mxu0 0.0
    %4746 = vmatpush1.msra.mxu0 %v3439
    %4747 = vmatprep.subr.mxu0 0.0
    %4748 = vmatpush1.msra.mxu0 %v3438
    %4749 = vmatprep.subr.mxu0 0.0
    %4750 = vmatpush1.msra.mxu0 %v3437
    %4751 = vmatprep.subr.mxu0 0.0
    %4752 = vmatpush1.msra.mxu0 %v3436
    %4753 = vmatprep.subr.mxu0 0.0
    %4754 = vmatpush1.msra.mxu0 %v3435
    %4755 = vmatprep.subr.mxu0 0.0
    %4756 = vmatpush1.msra.mxu0 %v3434
    %4757 = vmatprep.subr.mxu0 0.0
    %4758 = vmatpush1.msra.mxu0 %v3433
    %4759 = vmatprep.subr.mxu0 0.0
    %4760 = vmatpush1.msra.mxu0 %v3432
    %4761 = vmatprep.subr.mxu0 0.0
    %4762 = vmatpush1.msra.mxu0 %v3431
    %4763 = vmatprep.subr.mxu0 0.0
    %4764 = vmatpush1.msra.mxu0 %v3430
    %4765 = vmatprep.subr.mxu0 0.0
    %4766 = vmatpush1.msra.mxu0 %v3429
    %4767 = vmatprep.subr.mxu0 0.0
    %4768 = vmatpush1.msra.mxu0 %v3428
    %4769 = vmatprep.subr.mxu0 0.0
    %4770 = vmatpush1.msra.mxu0 %v3427
    %4771 = vmatprep.subr.mxu0 0.0
    %4772 = vmatpush1.msra.mxu0 %v3426
    %4773 = vmatprep.subr.mxu0 0.0
    %4774 = vmatpush1.msra.mxu0 %v3425
    %4775 = vmatprep.subr.mxu0 0.0
    %4776 = vmatpush1.msra.mxu0 %v3424
    %4777 = vmatprep.subr.mxu0 0.0
    %4778 = vmatpush2.msra.mxu0 %v3455
    %4779 = vmatprep.subr.mxu0 0.0
    %4780 = vmatpush2.msra.mxu0 %v3454
    %4781 = vmatprep.subr.mxu0 0.0
    %4782 = vmatpush2.msra.mxu0 %v3453
    %4783 = vmatprep.subr.mxu0 0.0
    %4784 = vmatpush2.msra.mxu0 %v3452
    %4785 = vmatprep.subr.mxu0 0.0
    %4786 = vmatpush2.msra.mxu0 %v3451
    %4787 = vmatprep.subr.mxu0 0.0
    %4788 = vmatpush2.msra.mxu0 %v3450
    %4789 = vmatprep.subr.mxu0 0.0
    %4790 = vmatpush2.msra.mxu0 %v3449
    %4791 = vmatprep.subr.mxu0 0.0
    %4792 = vmatpush2.msra.mxu0 %v3448
    %4793 = vmatprep.subr.mxu0 0.0
    %4794 = vmatpush2.msra.mxu0 %v3447
    %4795 = vmatprep.subr.mxu0 0.0
    %4796 = vmatpush2.msra.mxu0 %v3446
    %4797 = vmatprep.subr.mxu0 0.0
    %4798 = vmatpush2.msra.mxu0 %v3445
    %4799 = vmatprep.subr.mxu0 0.0
    %4800 = vmatpush2.msra.mxu0 %v3444
    %4801 = vmatprep.subr.mxu0 0.0
    %4802 = vmatpush2.msra.mxu0 %v3443
    %4803 = vmatprep.subr.mxu0 0.0
    %4804 = vmatpush2.msra.mxu0 %v3442
    %4805 = vmatprep.subr.mxu0 0.0
    %4806 = vmatpush2.msra.mxu0 %v3441
    %4807 = vmatprep.subr.mxu0 0.0
    %4808 = vmatpush2.msra.mxu0 %v3440
    %4809 = vmatprep.mubr.f32.mxu0 %v4682
    %4810 = vmatmul.mubr.f32.gmra.mxu0 %v4681
    %v4811 = vpop.f32.mrf.mxu0
    %v4812 = vadd.f32 %v4708, %v4811
    %v4813 = vpop.f32.mrf.mxu0
    %4814 = vmatprep.mubr.f32.mxu0 %v4684
    %4815 = vmatmul.mubr.f32.gmra.mxu0 %v4683
    %v4816 = vpop.f32.mrf.mxu0
    %v4817 = vadd.f32 %v4713, %v4816
    %v4818 = vpop.f32.mrf.mxu0
    %4819 = vmatprep.mubr.f32.mxu0 %v4686
    %4820 = vmatmul.mubr.f32.gmra.mxu0 %v4685
    %v4821 = vpop.f32.mrf.mxu0
    %v4822 = vadd.f32 %v4718, %v4821
    %v4823 = vpop.f32.mrf.mxu0
    %4824 = vmatprep.mubr.f32.mxu0 %v4688
    %4825 = vmatmul.mubr.f32.gmra.mxu0 %v4687
    %v4826 = vpop.f32.mrf.mxu0
    %v4827 = vadd.f32 %v4723, %v4826
    %v4828 = vpop.f32.mrf.mxu0
    %4829 = vmatprep.mubr.f32.mxu0 %v4690
    %4830 = vmatmul.mubr.f32.gmra.mxu0 %v4689
    %v4831 = vpop.f32.mrf.mxu0
    %v4832 = vadd.f32 %v4728, %v4831
    %v4833 = vpop.f32.mrf.mxu0
    %4834 = vmatprep.mubr.f32.mxu0 %v4692
    %4835 = vmatmul.mubr.f32.gmra.mxu0 %v4691
    %v4836 = vpop.f32.mrf.mxu0
    %v4837 = vadd.f32 %v4733, %v4836
    %v4838 = vpop.f32.mrf.mxu0
    %4839 = vmatprep.mubr.f32.mxu0 %v4694
    %4840 = vmatmul.mubr.f32.gmra.mxu0 %v4693
    %v4841 = vpop.f32.mrf.mxu0
    %v4842 = vadd.f32 %v4738, %v4841
    %v4843 = vpop.f32.mrf.mxu0
    %4844 = vmatprep.mubr.f32.mxu0 %v4696
    %4845 = vmatmul.mubr.f32.gmra.mxu0 %v4695
    %v4846 = vpop.f32.mrf.mxu0
    %v4847 = vadd.f32 %v4743, %v4846
    %v4848 = vpop.f32.mrf.mxu0
    %4849 = vdwg.mxu0
    %v4850 = vtanh.pop %v4812
    %v4851 = vtanh.pop %v4817
    %v4852 = vtanh.pop %v4822
    %v4853 = vtanh.pop %v4827
    %v4854 = vtanh.pop %v4832
    %v4855 = vtanh.pop %v4837
    %v4856 = vtanh.pop %v4842
    %v4857 = vtanh.pop %v4847
    %v4858 = vld [vmem:[%s43] sm:$0x3f]
    %v4859 = vld [vmem:[%s45] sm:$0x3f]
    %4861 = vset.pattern.permute.xlu0 0
    %4862 = vperm.xlu0 %4861, %v4859
    %v4863 = vpop.permute.xlu0 %4862
    %vm4865 = vcmask 523264
    %v4867 = vsel %vm4865, %v4858, 0
    %4869 = vmatprep.subr.mxu0 0.0
    %4870 = vmatpush1.msra.mxu0 0.0
    %4871 = vmatprep.subr.mxu0 0.0
    %4872 = vmatpush1.msra.mxu0 0.0
    %4873 = vmatprep.subr.mxu0 0.0
    %4874 = vmatpush1.msra.mxu0 0.0
    %4875 = vmatprep.subr.mxu0 0.0
    %4876 = vmatpush1.msra.mxu0 0.0
    %4877 = vmatprep.subr.mxu0 0.0
    %4878 = vmatpush1.msra.mxu0 0.0
    %4879 = vmatprep.subr.mxu0 0.0
    %4880 = vmatpush1.msra.mxu0 0.0
    %4881 = vmatprep.subr.mxu0 0.0
    %4882 = vmatpush1.msra.mxu0 0.0
    %4883 = vmatprep.subr.mxu0 0.0
    %4884 = vmatpush1.msra.mxu0 0.0
    %4885 = vmatprep.subr.mxu0 0.0
    %4886 = vmatpush1.msra.mxu0 %v4857
    %4887 = vmatprep.subr.mxu0 0.0
    %4888 = vmatpush1.msra.mxu0 %v4856
    %4889 = vmatprep.subr.mxu0 0.0
    %4890 = vmatpush1.msra.mxu0 %v4855
    %4891 = vmatprep.subr.mxu0 0.0
    %4892 = vmatpush1.msra.mxu0 %v4854
    %4893 = vmatprep.subr.mxu0 0.0
    %4894 = vmatpush1.msra.mxu0 %v4853
    %4895 = vmatprep.subr.mxu0 0.0
    %4896 = vmatpush1.msra.mxu0 %v4852
    %4897 = vmatprep.subr.mxu0 0.0
    %4898 = vmatpush1.msra.mxu0 %v4851
    %4899 = vmatprep.subr.mxu0 0.0
    %4900 = vmatpush1.msra.mxu0 %v4850
    %4901 = vmatprep.subr.mxu0 0.0
    %4902 = vmatpush2.msra.mxu0 0.0
    %4903 = vmatprep.subr.mxu0 0.0
    %4904 = vmatpush2.msra.mxu0 0.0
    %4905 = vmatprep.subr.mxu0 0.0
    %4906 = vmatpush2.msra.mxu0 0.0
    %4907 = vmatprep.subr.mxu0 0.0
    %4908 = vmatpush2.msra.mxu0 0.0
    %4909 = vmatprep.subr.mxu0 0.0
    %4910 = vmatpush2.msra.mxu0 0.0
    %4911 = vmatprep.subr.mxu0 0.0
    %4912 = vmatpush2.msra.mxu0 0.0
    %4913 = vmatprep.subr.mxu0 0.0
    %4914 = vmatpush2.msra.mxu0 0.0
    %4915 = vmatprep.subr.mxu0 0.0
    %4916 = vmatpush2.msra.mxu0 0.0
    %4917 = vmatprep.subr.mxu0 0.0
    %4918 = vmatpush2.msra.mxu0 0.0
    %4919 = vmatprep.subr.mxu0 0.0
    %4920 = vmatpush2.msra.mxu0 0.0
    %4921 = vmatprep.subr.mxu0 0.0
    %4922 = vmatpush2.msra.mxu0 0.0
    %4923 = vmatprep.subr.mxu0 0.0
    %4924 = vmatpush2.msra.mxu0 0.0
    %4925 = vmatprep.subr.mxu0 0.0
    %4926 = vmatpush2.msra.mxu0 0.0
    %4927 = vmatprep.subr.mxu0 0.0
    %4928 = vmatpush2.msra.mxu0 0.0
    %4929 = vmatprep.subr.mxu0 0.0
    %4930 = vmatpush2.msra.mxu0 0.0
    %4931 = vmatprep.subr.mxu0 0.0
    %4932 = vmatpush2.msra.mxu0 0.0
    %4933 = vmatprep.mubr.f32.mxu0 0.0
    %4934 = vmatmul.mubr.f32.gmra.mxu0 %v4867
    %v4935 = vpop.f32.mrf.mxu0
    %v4936 = vadd.f32 %v4863, %v4935
    %v4937 = vpop.f32.mrf.mxu0
    %4938 = vdwg.mxu0
    %vm4939 = vcmask 13312
    %4940 = vst.msk [vmem:[%s59] sm:$0x3f] %vm4939, %v4936
    %v4941 = vld [vmem:[%s51] sm:$0xff]
    %v4942 = vld [vmem:[%s51 + $0x8] sm:$0xff]
    %v4943 = vld [vmem:[%s51 + $0x10] sm:$0xff]
    %v4944 = vld [vmem:[%s51 + $0x18] sm:$0xff]
    %v4945 = vld [vmem:[%s51 + $0x20] sm:$0xff]
    %v4946 = vld [vmem:[%s51 + $0x28] sm:$0xff]
    %v4947 = vld [vmem:[%s51 + $0x30] sm:$0xff]
    %v4948 = vld [vmem:[%s51 + $0x38] sm:$0xff]
    %v4949 = vld [vmem:[%s51 + $0x40] sm:$0xff]
    %v4950 = vld [vmem:[%s51 + $0x48] sm:$0xff]
    %v4951 = vld [vmem:[%s51 + $0x50] sm:$0xff]
    %v4952 = vld [vmem:[%s51 + $0x58] sm:$0xff]
    %v4953 = vld [vmem:[%s51 + $0x60] sm:$0xff]
    %v4954 = vld [vmem:[%s51 + $0x68] sm:$0xff]
    %v4955 = vld [vmem:[%s51 + $0x70] sm:$0xff]
    %v4956 = vld [vmem:[%s51 + $0x78] sm:$0xff]
    %v4957 = vlaneseq
    %v4958 = vshrl.u32 %v4957, 7
    %v4959 = vsub.s32 0, %v4958
    %v4960 = vrot.slane %v4484, %v4959
    %v4961 = vlaneseq
    %v4962 = vshrl.u32 %v4961, 7
    %v4963 = vsub.s32 0, %v4962
    %v4964 = vrot.slane %v4485, %v4963
    %v4965 = vmul.f32 %v4941, %v4960
    %v4966 = vmul.f32 %v4942, %v4964
    %v4967 = vmul.f32 %v4943, %v4960
    %v4968 = vmul.f32 %v4944, %v4964
    %v4969 = vmul.f32 %v4945, %v4960
    %v4970 = vmul.f32 %v4946, %v4964
    %v4971 = vmul.f32 %v4947, %v4960
    %v4972 = vmul.f32 %v4948, %v4964
    %v4973 = vmul.f32 %v4949, %v4960
    %v4974 = vmul.f32 %v4950, %v4964
    %v4975 = vmul.f32 %v4951, %v4960
    %v4976 = vmul.f32 %v4952, %v4964
    %v4977 = vmul.f32 %v4953, %v4960
    %v4978 = vmul.f32 %v4954, %v4964
    %v4979 = vmul.f32 %v4955, %v4960
    %v4980 = vmul.f32 %v4956, %v4964
    %s4981 = scalar_lea.vmem %s51, 128
    %v4982 = vld [vmem:[%s4981] sm:$0xff]
    %v4983 = vld [vmem:[%s4981 + $0x8] sm:$0xff]
    %v4984 = vld [vmem:[%s4981 + $0x10] sm:$0xff]
    %v4985 = vld [vmem:[%s4981 + $0x18] sm:$0xff]
    %v4986 = vld [vmem:[%s4981 + $0x20] sm:$0xff]
    %v4987 = vld [vmem:[%s4981 + $0x28] sm:$0xff]
    %v4988 = vld [vmem:[%s4981 + $0x30] sm:$0xff]
    %v4989 = vld [vmem:[%s4981 + $0x38] sm:$0xff]
    %v4990 = vld [vmem:[%s4981 + $0x40] sm:$0xff]
    %v4991 = vld [vmem:[%s4981 + $0x48] sm:$0xff]
    %v4992 = vld [vmem:[%s4981 + $0x50] sm:$0xff]
    %v4993 = vld [vmem:[%s4981 + $0x58] sm:$0xff]
    %v4994 = vld [vmem:[%s4981 + $0x60] sm:$0xff]
    %v4995 = vld [vmem:[%s4981 + $0x68] sm:$0xff]
    %v4996 = vld [vmem:[%s4981 + $0x70] sm:$0xff]
    %v4997 = vld [vmem:[%s4981 + $0x78] sm:$0xff]
    %v4998 = vlaneseq
    %v4999 = vshrl.u32 %v4998, 7
    %v5000 = vsub.s32 1, %v4999
    %v5001 = vrot.slane %v4484, %v5000
    %v5002 = vlaneseq
    %v5003 = vshrl.u32 %v5002, 7
    %v5004 = vsub.s32 1, %v5003
    %v5005 = vrot.slane %v4485, %v5004
    %v5006 = vmul.f32 %v4982, %v5001
    %v5007 = vmul.f32 %v4983, %v5005
    %v5008 = vmul.f32 %v4984, %v5001
    %v5009 = vmul.f32 %v4985, %v5005
    %v5010 = vmul.f32 %v4986, %v5001
    %v5011 = vmul.f32 %v4987, %v5005
    %v5012 = vmul.f32 %v4988, %v5001
    %v5013 = vmul.f32 %v4989, %v5005
    %v5014 = vmul.f32 %v4990, %v5001
    %v5015 = vmul.f32 %v4991, %v5005
    %v5016 = vmul.f32 %v4992, %v5001
    %v5017 = vmul.f32 %v4993, %v5005
    %v5018 = vmul.f32 %v4994, %v5001
    %v5019 = vmul.f32 %v4995, %v5005
    %v5020 = vmul.f32 %v4996, %v5001
    %v5021 = vmul.f32 %v4997, %v5005
    %v5022 = vadd.f32 %v4965, %v5006
    %v5023 = vadd.f32 %v4966, %v5007
    %v5024 = vadd.f32 %v4967, %v5008
    %v5025 = vadd.f32 %v4968, %v5009
    %v5026 = vadd.f32 %v4969, %v5010
    %v5027 = vadd.f32 %v4970, %v5011
    %v5028 = vadd.f32 %v4971, %v5012
    %v5029 = vadd.f32 %v4972, %v5013
    %v5030 = vadd.f32 %v4973, %v5014
    %v5031 = vadd.f32 %v4974, %v5015
    %v5032 = vadd.f32 %v4975, %v5016
    %v5033 = vadd.f32 %v4976, %v5017
    %v5034 = vadd.f32 %v4977, %v5018
    %v5035 = vadd.f32 %v4978, %v5019
    %v5036 = vadd.f32 %v4979, %v5020
    %v5037 = vadd.f32 %v4980, %v5021
    %s5038 = scalar_lea.vmem %s51, 256
    %v5039 = vld [vmem:[%s5038] sm:$0xff]
    %v5040 = vld [vmem:[%s5038 + $0x8] sm:$0xff]
    %v5041 = vld [vmem:[%s5038 + $0x10] sm:$0xff]
    %v5042 = vld [vmem:[%s5038 + $0x18] sm:$0xff]
    %v5043 = vld [vmem:[%s5038 + $0x20] sm:$0xff]
    %v5044 = vld [vmem:[%s5038 + $0x28] sm:$0xff]
    %v5045 = vld [vmem:[%s5038 + $0x30] sm:$0xff]
    %v5046 = vld [vmem:[%s5038 + $0x38] sm:$0xff]
    %v5047 = vld [vmem:[%s5038 + $0x40] sm:$0xff]
    %v5048 = vld [vmem:[%s5038 + $0x48] sm:$0xff]
    %v5049 = vld [vmem:[%s5038 + $0x50] sm:$0xff]
    %v5050 = vld [vmem:[%s5038 + $0x58] sm:$0xff]
    %v5051 = vld [vmem:[%s5038 + $0x60] sm:$0xff]
    %v5052 = vld [vmem:[%s5038 + $0x68] sm:$0xff]
    %v5053 = vld [vmem:[%s5038 + $0x70] sm:$0xff]
    %v5054 = vld [vmem:[%s5038 + $0x78] sm:$0xff]
    %v5055 = vlaneseq
    %v5056 = vshrl.u32 %v5055, 7
    %v5057 = vsub.s32 2, %v5056
    %v5058 = vrot.slane %v4484, %v5057
    %v5059 = vlaneseq
    %v5060 = vshrl.u32 %v5059, 7
    %v5061 = vsub.s32 2, %v5060
    %v5062 = vrot.slane %v4485, %v5061
    %v5063 = vmul.f32 %v5039, %v5058
    %v5064 = vmul.f32 %v5040, %v5062
    %v5065 = vmul.f32 %v5041, %v5058
    %v5066 = vmul.f32 %v5042, %v5062
    %v5067 = vmul.f32 %v5043, %v5058
    %v5068 = vmul.f32 %v5044, %v5062
    %v5069 = vmul.f32 %v5045, %v5058
    %v5070 = vmul.f32 %v5046, %v5062
    %v5071 = vmul.f32 %v5047, %v5058
    %v5072 = vmul.f32 %v5048, %v5062
    %v5073 = vmul.f32 %v5049, %v5058
    %v5074 = vmul.f32 %v5050, %v5062
    %v5075 = vmul.f32 %v5051, %v5058
    %v5076 = vmul.f32 %v5052, %v5062
    %v5077 = vmul.f32 %v5053, %v5058
    %v5078 = vmul.f32 %v5054, %v5062
    %v5079 = vadd.f32 %v5022, %v5063
    %v5080 = vadd.f32 %v5023, %v5064
    %v5081 = vadd.f32 %v5024, %v5065
    %v5082 = vadd.f32 %v5025, %v5066
    %v5083 = vadd.f32 %v5026, %v5067
    %v5084 = vadd.f32 %v5027, %v5068
    %v5085 = vadd.f32 %v5028, %v5069
    %v5086 = vadd.f32 %v5029, %v5070
    %v5087 = vadd.f32 %v5030, %v5071
    %v5088 = vadd.f32 %v5031, %v5072
    %v5089 = vadd.f32 %v5032, %v5073
    %v5090 = vadd.f32 %v5033, %v5074
    %v5091 = vadd.f32 %v5034, %v5075
    %v5092 = vadd.f32 %v5035, %v5076
    %v5093 = vadd.f32 %v5036, %v5077
    %v5094 = vadd.f32 %v5037, %v5078
    %s5095 = scalar_lea.vmem %s51, 384
    %v5096 = vld [vmem:[%s5095] sm:$0xff]
    %v5097 = vld [vmem:[%s5095 + $0x8] sm:$0xff]
    %v5098 = vld [vmem:[%s5095 + $0x10] sm:$0xff]
    %v5099 = vld [vmem:[%s5095 + $0x18] sm:$0xff]
    %v5100 = vld [vmem:[%s5095 + $0x20] sm:$0xff]
    %v5101 = vld [vmem:[%s5095 + $0x28] sm:$0xff]
    %v5102 = vld [vmem:[%s5095 + $0x30] sm:$0xff]
    %v5103 = vld [vmem:[%s5095 + $0x38] sm:$0xff]
    %v5104 = vld [vmem:[%s5095 + $0x40] sm:$0xff]
    %v5105 = vld [vmem:[%s5095 + $0x48] sm:$0xff]
    %v5106 = vld [vmem:[%s5095 + $0x50] sm:$0xff]
    %v5107 = vld [vmem:[%s5095 + $0x58] sm:$0xff]
    %v5108 = vld [vmem:[%s5095 + $0x60] sm:$0xff]
    %v5109 = vld [vmem:[%s5095 + $0x68] sm:$0xff]
    %v5110 = vld [vmem:[%s5095 + $0x70] sm:$0xff]
    %v5111 = vld [vmem:[%s5095 + $0x78] sm:$0xff]
    %v5112 = vlaneseq
    %v5113 = vshrl.u32 %v5112, 7
    %v5114 = vsub.s32 3, %v5113
    %v5115 = vrot.slane %v4484, %v5114
    %v5116 = vlaneseq
    %v5117 = vshrl.u32 %v5116, 7
    %v5118 = vsub.s32 3, %v5117
    %v5119 = vrot.slane %v4485, %v5118
    %v5120 = vmul.f32 %v5096, %v5115
    %v5121 = vmul.f32 %v5097, %v5119
    %v5122 = vmul.f32 %v5098, %v5115
    %v5123 = vmul.f32 %v5099, %v5119
    %v5124 = vmul.f32 %v5100, %v5115
    %v5125 = vmul.f32 %v5101, %v5119
    %v5126 = vmul.f32 %v5102, %v5115
    %v5127 = vmul.f32 %v5103, %v5119
    %v5128 = vmul.f32 %v5104, %v5115
    %v5129 = vmul.f32 %v5105, %v5119
    %v5130 = vmul.f32 %v5106, %v5115
    %v5131 = vmul.f32 %v5107, %v5119
    %v5132 = vmul.f32 %v5108, %v5115
    %v5133 = vmul.f32 %v5109, %v5119
    %v5134 = vmul.f32 %v5110, %v5115
    %v5135 = vmul.f32 %v5111, %v5119
    %v5136 = vadd.f32 %v5079, %v5120
    %v5137 = vadd.f32 %v5080, %v5121
    %v5138 = vadd.f32 %v5081, %v5122
    %v5139 = vadd.f32 %v5082, %v5123
    %v5140 = vadd.f32 %v5083, %v5124
    %v5141 = vadd.f32 %v5084, %v5125
    %v5142 = vadd.f32 %v5085, %v5126
    %v5143 = vadd.f32 %v5086, %v5127
    %v5144 = vadd.f32 %v5087, %v5128
    %v5145 = vadd.f32 %v5088, %v5129
    %v5146 = vadd.f32 %v5089, %v5130
    %v5147 = vadd.f32 %v5090, %v5131
    %v5148 = vadd.f32 %v5091, %v5132
    %v5149 = vadd.f32 %v5092, %v5133
    %v5150 = vadd.f32 %v5093, %v5134
    %v5151 = vadd.f32 %v5094, %v5135
    %v5152 = vld [vmem:[%s9] sm:$0xff]
    %v5153 = vld [vmem:[%s9 + $0x8] sm:$0xff]
    %v5154 = vld [vmem:[%s9 + $0x10] sm:$0xff]
    %v5155 = vld [vmem:[%s9 + $0x18] sm:$0xff]
    %v5156 = vld [vmem:[%s9 + $0x20] sm:$0xff]
    %v5157 = vld [vmem:[%s9 + $0x28] sm:$0xff]
    %v5158 = vld [vmem:[%s9 + $0x30] sm:$0xff]
    %v5159 = vld [vmem:[%s9 + $0x38] sm:$0xff]
    %v5160 = vld [vmem:[%s9 + $0x40] sm:$0xff]
    %v5161 = vld [vmem:[%s9 + $0x48] sm:$0xff]
    %v5162 = vld [vmem:[%s9 + $0x50] sm:$0xff]
    %v5163 = vld [vmem:[%s9 + $0x58] sm:$0xff]
    %v5164 = vld [vmem:[%s9 + $0x60] sm:$0xff]
    %v5165 = vld [vmem:[%s9 + $0x68] sm:$0xff]
    %v5166 = vld [vmem:[%s9 + $0x70] sm:$0xff]
    %v5167 = vld [vmem:[%s9 + $0x78] sm:$0xff]
    %v5168 = vld [vmem:[%s9 + $0x80] sm:$0xff]
    %v5169 = vld [vmem:[%s9 + $0x88] sm:$0xff]
    %v5170 = vld [vmem:[%s9 + $0x90] sm:$0xff]
    %v5171 = vld [vmem:[%s9 + $0x98] sm:$0xff]
    %v5172 = vld [vmem:[%s9 + $0xa0] sm:$0xff]
    %v5173 = vld [vmem:[%s9 + $0xa8] sm:$0xff]
    %v5174 = vld [vmem:[%s9 + $0xb0] sm:$0xff]
    %v5175 = vld [vmem:[%s9 + $0xb8] sm:$0xff]
    %v5176 = vld [vmem:[%s9 + $0xc0] sm:$0xff]
    %v5177 = vld [vmem:[%s9 + $0xc8] sm:$0xff]
    %v5178 = vld [vmem:[%s9 + $0xd0] sm:$0xff]
    %v5179 = vld [vmem:[%s9 + $0xd8] sm:$0xff]
    %v5180 = vld [vmem:[%s9 + $0xe0] sm:$0xff]
    %v5181 = vld [vmem:[%s9 + $0xe8] sm:$0xff]
    %v5182 = vld [vmem:[%s9 + $0xf0] sm:$0xff]
    %v5183 = vld [vmem:[%s9 + $0xf8] sm:$0xff]
    %v5184 = vld [vmem:[%s53] sm:$0xff]
    %v5185 = vld [vmem:[%s53 + $0x8] sm:$0xff]
    %v5186 = vld [vmem:[%s53 + $0x10] sm:$0xff]
    %v5187 = vld [vmem:[%s53 + $0x18] sm:$0xff]
    %v5188 = vld [vmem:[%s53 + $0x20] sm:$0xff]
    %v5189 = vld [vmem:[%s53 + $0x28] sm:$0xff]
    %v5190 = vld [vmem:[%s53 + $0x30] sm:$0xff]
    %v5191 = vld [vmem:[%s53 + $0x38] sm:$0xff]
    %5193 = vset.pattern.permute.xlu0 0
    %5194 = vperm.xlu0 %5193, %v5184
    %v5195 = vpop.permute.xlu0 %5194
    %5198 = vset.pattern.permute.xlu0 0
    %5199 = vperm.xlu0 %5198, %v5185
    %v5200 = vpop.permute.xlu0 %5199
    %5203 = vset.pattern.permute.xlu0 0
    %5204 = vperm.xlu0 %5203, %v5186
    %v5205 = vpop.permute.xlu0 %5204
    %5208 = vset.pattern.permute.xlu0 0
    %5209 = vperm.xlu0 %5208, %v5187
    %v5210 = vpop.permute.xlu0 %5209
    %5213 = vset.pattern.permute.xlu0 0
    %5214 = vperm.xlu0 %5213, %v5188
    %v5215 = vpop.permute.xlu0 %5214
    %5218 = vset.pattern.permute.xlu0 0
    %5219 = vperm.xlu0 %5218, %v5189
    %v5220 = vpop.permute.xlu0 %5219
    %5223 = vset.pattern.permute.xlu0 0
    %5224 = vperm.xlu0 %5223, %v5190
    %v5225 = vpop.permute.xlu0 %5224
    %5228 = vset.pattern.permute.xlu0 0
    %5229 = vperm.xlu0 %5228, %v5191
    %v5230 = vpop.permute.xlu0 %5229
    %5232 = vmatprep.subr.mxu0 0.0
    %5233 = vmatpush1.msra.mxu0 %v5167
    %5234 = vmatprep.subr.mxu0 0.0
    %5235 = vmatpush1.msra.mxu0 %v5166
    %5236 = vmatprep.subr.mxu0 0.0
    %5237 = vmatpush1.msra.mxu0 %v5165
    %5238 = vmatprep.subr.mxu0 0.0
    %5239 = vmatpush1.msra.mxu0 %v5164
    %5240 = vmatprep.subr.mxu0 0.0
    %5241 = vmatpush1.msra.mxu0 %v5163
    %5242 = vmatprep.subr.mxu0 0.0
    %5243 = vmatpush1.msra.mxu0 %v5162
    %5244 = vmatprep.subr.mxu0 0.0
    %5245 = vmatpush1.msra.mxu0 %v5161
    %5246 = vmatprep.subr.mxu0 0.0
    %5247 = vmatpush1.msra.mxu0 %v5160
    %5248 = vmatprep.subr.mxu0 0.0
    %5249 = vmatpush1.msra.mxu0 %v5159
    %5250 = vmatprep.subr.mxu0 0.0
    %5251 = vmatpush1.msra.mxu0 %v5158
    %5252 = vmatprep.subr.mxu0 0.0
    %5253 = vmatpush1.msra.mxu0 %v5157
    %5254 = vmatprep.subr.mxu0 0.0
    %5255 = vmatpush1.msra.mxu0 %v5156
    %5256 = vmatprep.subr.mxu0 0.0
    %5257 = vmatpush1.msra.mxu0 %v5155
    %5258 = vmatprep.subr.mxu0 0.0
    %5259 = vmatpush1.msra.mxu0 %v5154
    %5260 = vmatprep.subr.mxu0 0.0
    %5261 = vmatpush1.msra.mxu0 %v5153
    %5262 = vmatprep.subr.mxu0 0.0
    %5263 = vmatpush1.msra.mxu0 %v5152
    %5264 = vmatprep.subr.mxu0 0.0
    %5265 = vmatpush2.msra.mxu0 %v5183
    %5266 = vmatprep.subr.mxu0 0.0
    %5267 = vmatpush2.msra.mxu0 %v5182
    %5268 = vmatprep.subr.mxu0 0.0
    %5269 = vmatpush2.msra.mxu0 %v5181
    %5270 = vmatprep.subr.mxu0 0.0
    %5271 = vmatpush2.msra.mxu0 %v5180
    %5272 = vmatprep.subr.mxu0 0.0
    %5273 = vmatpush2.msra.mxu0 %v5179
    %5274 = vmatprep.subr.mxu0 0.0
    %5275 = vmatpush2.msra.mxu0 %v5178
    %5276 = vmatprep.subr.mxu0 0.0
    %5277 = vmatpush2.msra.mxu0 %v5177
    %5278 = vmatprep.subr.mxu0 0.0
    %5279 = vmatpush2.msra.mxu0 %v5176
    %5280 = vmatprep.subr.mxu0 0.0
    %5281 = vmatpush2.msra.mxu0 %v5175
    %5282 = vmatprep.subr.mxu0 0.0
    %5283 = vmatpush2.msra.mxu0 %v5174
    %5284 = vmatprep.subr.mxu0 0.0
    %5285 = vmatpush2.msra.mxu0 %v5173
    %5286 = vmatprep.subr.mxu0 0.0
    %5287 = vmatpush2.msra.mxu0 %v5172
    %5288 = vmatprep.subr.mxu0 0.0
    %5289 = vmatpush2.msra.mxu0 %v5171
    %5290 = vmatprep.subr.mxu0 0.0
    %5291 = vmatpush2.msra.mxu0 %v5170
    %5292 = vmatprep.subr.mxu0 0.0
    %5293 = vmatpush2.msra.mxu0 %v5169
    %5294 = vmatprep.subr.mxu0 0.0
    %5295 = vmatpush2.msra.mxu0 %v5168
    %5296 = vmatprep.mubr.f32.mxu0 %v5137
    %5297 = vmatmul.mubr.f32.gmra.mxu0 %v5136
    %v5298 = vpop.f32.mrf.mxu0
    %v5299 = vadd.f32 %v5195, %v5298
    %v5300 = vpop.f32.mrf.mxu0
    %5301 = vmatprep.mubr.f32.mxu0 %v5139
    %5302 = vmatmul.mubr.f32.gmra.mxu0 %v5138
    %v5303 = vpop.f32.mrf.mxu0
    %v5304 = vadd.f32 %v5200, %v5303
    %v5305 = vpop.f32.mrf.mxu0
    %5306 = vmatprep.mubr.f32.mxu0 %v5141
    %5307 = vmatmul.mubr.f32.gmra.mxu0 %v5140
    %v5308 = vpop.f32.mrf.mxu0
    %v5309 = vadd.f32 %v5205, %v5308
    %v5310 = vpop.f32.mrf.mxu0
    %5311 = vmatprep.mubr.f32.mxu0 %v5143
    %5312 = vmatmul.mubr.f32.gmra.mxu0 %v5142
    %v5313 = vpop.f32.mrf.mxu0
    %v5314 = vadd.f32 %v5210, %v5313
    %v5315 = vpop.f32.mrf.mxu0
    %5316 = vmatprep.mubr.f32.mxu0 %v5145
    %5317 = vmatmul.mubr.f32.gmra.mxu0 %v5144
    %v5318 = vpop.f32.mrf.mxu0
    %v5319 = vadd.f32 %v5215, %v5318
    %v5320 = vpop.f32.mrf.mxu0
    %5321 = vmatprep.mubr.f32.mxu0 %v5147
    %5322 = vmatmul.mubr.f32.gmra.mxu0 %v5146
    %v5323 = vpop.f32.mrf.mxu0
    %v5324 = vadd.f32 %v5220, %v5323
    %v5325 = vpop.f32.mrf.mxu0
    %5326 = vmatprep.mubr.f32.mxu0 %v5149
    %5327 = vmatmul.mubr.f32.gmra.mxu0 %v5148
    %v5328 = vpop.f32.mrf.mxu0
    %v5329 = vadd.f32 %v5225, %v5328
    %v5330 = vpop.f32.mrf.mxu0
    %5331 = vmatprep.mubr.f32.mxu0 %v5151
    %5332 = vmatmul.mubr.f32.gmra.mxu0 %v5150
    %v5333 = vpop.f32.mrf.mxu0
    %v5334 = vadd.f32 %v5230, %v5333
    %v5335 = vpop.f32.mrf.mxu0
    %5336 = vdwg.mxu0
    %v5337 = vtanh.pop %v5299
    %v5338 = vtanh.pop %v5304
    %v5339 = vtanh.pop %v5309
    %v5340 = vtanh.pop %v5314
    %v5341 = vtanh.pop %v5319
    %v5342 = vtanh.pop %v5324
    %v5343 = vtanh.pop %v5329
    %v5344 = vtanh.pop %v5334
    %v5345 = vld [vmem:[%s55] sm:$0x1]
    %v5346 = vld [vmem:[#allocation2] sm:$0x1]
    %5348 = vset.pattern.permute.xlu0 0
    %5349 = vperm.xlu0 %5348, %v5346
    %v5350 = vpop.permute.xlu0 %5349
    %v5352 = vlaneseq
    %v5353 = vshrl.u32 %v5352, 7
    %v5354 = vsub.s32 0, %v5353
    %v5355 = vrot.slane %v5350, %v5354
    %v5357 = vsel %vm4865, %v5345, 0
    %5359 = vmatprep.subr.mxu0 0.0
    %5360 = vmatpush1.msra.mxu0 0.0
    %5361 = vmatprep.subr.mxu0 0.0
    %5362 = vmatpush1.msra.mxu0 0.0
    %5363 = vmatprep.subr.mxu0 0.0
    %5364 = vmatpush1.msra.mxu0 0.0
    %5365 = vmatprep.subr.mxu0 0.0
    %5366 = vmatpush1.msra.mxu0 0.0
    %5367 = vmatprep.subr.mxu0 0.0
    %5368 = vmatpush1.msra.mxu0 0.0
    %5369 = vmatprep.subr.mxu0 0.0
    %5370 = vmatpush1.msra.mxu0 0.0
    %5371 = vmatprep.subr.mxu0 0.0
    %5372 = vmatpush1.msra.mxu0 0.0
    %5373 = vmatprep.subr.mxu0 0.0
    %5374 = vmatpush1.msra.mxu0 0.0
    %5375 = vmatprep.subr.mxu0 0.0
    %5376 = vmatpush1.msra.mxu0 %v5344
    %5377 = vmatprep.subr.mxu0 0.0
    %5378 = vmatpush1.msra.mxu0 %v5343
    %5379 = vmatprep.subr.mxu0 0.0
    %5380 = vmatpush1.msra.mxu0 %v5342
    %5381 = vmatprep.subr.mxu0 0.0
    %5382 = vmatpush1.msra.mxu0 %v5341
    %5383 = vmatprep.subr.mxu0 0.0
    %5384 = vmatpush1.msra.mxu0 %v5340
    %5385 = vmatprep.subr.mxu0 0.0
    %5386 = vmatpush1.msra.mxu0 %v5339
    %5387 = vmatprep.subr.mxu0 0.0
    %5388 = vmatpush1.msra.mxu0 %v5338
    %5389 = vmatprep.subr.mxu0 0.0
    %5390 = vmatpush1.msra.mxu0 %v5337
    %5391 = vmatprep.subr.mxu0 0.0
    %5392 = vmatpush2.msra.mxu0 0.0
    %5393 = vmatprep.subr.mxu0 0.0
    %5394 = vmatpush2.msra.mxu0 0.0
    %5395 = vmatprep.subr.mxu0 0.0
    %5396 = vmatpush2.msra.mxu0 0.0
    %5397 = vmatprep.subr.mxu0 0.0
    %5398 = vmatpush2.msra.mxu0 0.0
    %5399 = vmatprep.subr.mxu0 0.0
    %5400 = vmatpush2.msra.mxu0 0.0
    %5401 = vmatprep.subr.mxu0 0.0
    %5402 = vmatpush2.msra.mxu0 0.0
    %5403 = vmatprep.subr.mxu0 0.0
    %5404 = vmatpush2.msra.mxu0 0.0
    %5405 = vmatprep.subr.mxu0 0.0
    %5406 = vmatpush2.msra.mxu0 0.0
    %5407 = vmatprep.subr.mxu0 0.0
    %5408 = vmatpush2.msra.mxu0 0.0
    %5409 = vmatprep.subr.mxu0 0.0
    %5410 = vmatpush2.msra.mxu0 0.0
    %5411 = vmatprep.subr.mxu0 0.0
    %5412 = vmatpush2.msra.mxu0 0.0
    %5413 = vmatprep.subr.mxu0 0.0
    %5414 = vmatpush2.msra.mxu0 0.0
    %5415 = vmatprep.subr.mxu0 0.0
    %5416 = vmatpush2.msra.mxu0 0.0
    %5417 = vmatprep.subr.mxu0 0.0
    %5418 = vmatpush2.msra.mxu0 0.0
    %5419 = vmatprep.subr.mxu0 0.0
    %5420 = vmatpush2.msra.mxu0 0.0
    %5421 = vmatprep.subr.mxu0 0.0
    %5422 = vmatpush2.msra.mxu0 0.0
    %5423 = vmatprep.mubr.f32.mxu0 0.0
    %5424 = vmatmul.mubr.f32.gmra.mxu0 %v5357
    %v5425 = vpop.f32.mrf.mxu0
    %v5426 = vadd.f32 %v5355, %v5425
    %v5427 = vpop.f32.mrf.mxu0
    %5428 = vdwg.mxu0
    %vm5429 = vcmask 8192
    %5430 = vst.msk [vmem:[#allocation3] sm:$0x1] %vm5429, %v5426
    // Predicated region
    $region118: #{tpu_custom_call.1} parent=1 // pred_check
      _
    $region119: #{tpu_custom_call.1} parent=1 // pred_check_branch
      %5432 = sbr.rel (0) target = $region121
    $region120: #{tpu_custom_call.1} parent=1 // pred_region
      _
    $region121: #{tpu_custom_call.1} parent=1 // pred_fallthru
      _
    // Predicated region
    $region122: #{tpu_custom_call.1} parent=1 // pred_check
      _
    $region123: #{tpu_custom_call.1} parent=1 // pred_check_branch
      %5434 = sbr.rel (0) target = $region125
    $region124: #{tpu_custom_call.1} parent=1 // pred_region
      %s5436 = ssub.s32 16, 16
      %5437 = vsyncadd [#allocation4], %s5436
      %s5439 = sshll.u32 [#allocation3], 4
      %s5440 = int_to_ptr.vmem [resolvable:$true] %s5439
      %5442 = dma.vmem_to_hbm [thread:$0]  %s5440, 16, %s61, [#allocation4]
    $region125: #{tpu_custom_call.1} parent=1 // pred_fallthru
      _
    // Predicated region
    $region126: #{tpu_custom_call.1} parent=1 // pred_check
      _
    $region127: #{tpu_custom_call.1} parent=1 // pred_check_branch
      %5444 = sbr.rel (0) target = $region129
    $region128: #{tpu_custom_call.1} parent=1 // pred_region
      _
    $region129: #{tpu_custom_call.1} parent=1 // pred_fallthru
      _
    // Predicated region
    $region130: #{tpu_custom_call.1} parent=1 // pred_check
      _
    $region131: #{tpu_custom_call.1} parent=1 // pred_check_branch
      %5446 = sbr.rel (0) target = $region133
    $region132: #{tpu_custom_call.1} parent=1 // pred_region
      %5447 = dma.done [#allocation4], 16
    $region133: #{tpu_custom_call.1} parent=1 // pred_fallthru
      _
    %5448 = vsyncpa [#allocation4], 1

</llo_original>
